<compile_context>
chip_gen: v7x
topology: tpu7x:2x2x1
jax: 0.10.0
libtpu: 0.0.40
codegen_flags: <defaults>
</compile_context>

<pallas_src>
import numpy as np

import jax
import jax.numpy as jnp
from jax.experimental import pallas as pl
from jax.experimental.pallas import tpu as pltpu


HALF = 128   # lanes per pooling-parity half (padded, 128-aligned)


# ----------------------------- fused kernel --------------------------------

def _lenet_kernel(x_ref, rhs1_ref, b1_ref, rhs2_ref, b2_ref,
                  wfc1_ref, bfc1_ref, wfc2_ref, bfc2_ref, wfc3_ref, bfc3_ref,
                  o_ref, yscr_ref):
    """Whole LeNet_32 forward for one batch tile, entirely in VMEM/vregs."""
    f32 = jnp.float32
    bf16 = jnp.bfloat16
    tb = o_ref.shape[0]          # images in this batch tile
    r = 8 * tb                   # rows per phase slab (per-image stride 8)
    k = rhs1_ref.shape[0]        # conv kernel size (5)
    n1 = rhs1_ref.shape[2]       # 2*HALF conv1 output cols, layout [d, f, co]
    n2 = rhs2_ref.shape[2]       # 2*HALF conv2 output cols
    h1, h2 = n1 // 2, n2 // 2    # 128, 128 (lane-aligned pooling halves)

    # ---- conv1 (5x5 valid) + bias + ReLU + 2x2 max-pool --------------------
    # Input x_ref[0, p, b*8 + t, w*C + c] = x[b, 4t + p, w, c]  (4 row phases).
    # Result kept split by row parity p2 (that is what conv2 needs):
    #   p1[p2][b*8 + u, f*6 + co] = maxpool2x2(relu(conv1))[b, 2u + p2, f, co]
    # NOTE(perf): the s//4 in {0,1,2} starts below are sublane-shift relayouts;
    # if they ever become the binding slot, pre-shift once into scratch.
    p1 = []
    for p2 in range(2):
        zs = []
        for e in range(2):                        # conv1-row parity (pooled away)
            acc = jnp.zeros((r, n1), f32)
            for i in range(k):
                s = 2 * p2 + e + i                # absolute input-row shift
                lhs = x_ref[0, s % 4, s // 4: s // 4 + r, :]
                acc = acc + jnp.dot(lhs, rhs1_ref[i],
                                    preferred_element_type=f32)
            zs.append(jnp.maximum(acc + b1_ref[...], 0.0))
        z = jnp.maximum(zs[0], zs[1])             # pool over row parity e
        # pool over col parity d: halves are 128-lane aligned -> pure vmax
        p1.append(jnp.maximum(z[:, :h1], z[:, h1:]).astype(bf16))

    # ---- conv2 (5x5 valid) + bias + ReLU + 2x2 max-pool --------------------
    l2 = r - 2
    z2s = []
    for e in range(2):
        acc = jnp.zeros((l2, n2), f32)
        for i in range(k):
            s = e + i
            acc = acc + jnp.dot(p1[s % 2][s // 2: s // 2 + l2, :], rhs2_ref[i],
                                preferred_element_type=f32)
        z2s.append(jnp.maximum(acc + b2_ref[...], 0.0))
    z2 = jnp.maximum(z2s[0], z2s[1])
    pool2 = jnp.maximum(z2[:, :h2], z2[:, h2:]).astype(bf16)   # (l2, 128)
    # valid rows: b*8 + g, g < 5; valid lanes 0..79 = f*16 + c; rest exactly 0

    # ---- fc1 (400 -> 120, padded to 128) as 5 row-shifted matmuls + ReLU ----
    # Valid results land in rows b*8; the other rows are ignored garbage.
    l3 = r - 6
    nf = wfc1_ref.shape[1]                        # 128
    acc = jnp.zeros((l3, nf), f32)
    for g in range(5):
        acc = acc + jnp.dot(pool2[g: g + l3, :],
                            wfc1_ref[g * h2: (g + 1) * h2, :],
                            preferred_element_type=f32)
    y1 = jnp.maximum(acc + bfc1_ref[...], 0.0)    # (l3, 128) f32

    # ---- compact: one valid row per image (stride 8) -> (tb, 128) ----------
    yscr_ref[0:l3, :] = y1
    yc = yscr_ref[pl.ds(0, tb, stride=8), :].astype(bf16)

    # ---- fc2 + ReLU, fc3 ---------------------------------------------------
    y2 = jnp.maximum(jnp.dot(yc, wfc2_ref[...], preferred_element_type=f32)
                     + bfc2_ref[...], 0.0).astype(bf16)
    o_ref[...] = (jnp.dot(y2, wfc3_ref[...], preferred_element_type=f32)
                  + bfc3_ref[...])


# ------------------------ one-time weight preparation -----------------------

def _conv_rhs(w_oihw, w_in, half, rows=None):
    """Banded block-Toeplitz matrices turning a 5x5 valid conv into k
    row-shifted matmuls.  Output columns ordered [w-parity d, w//2 f, cout],
    with each parity half zero-padded to `half` (=128) lanes so the 2x2
    max-pool is a max over two 128-lane-aligned halves."""
    w = np.asarray(w_oihw, np.float32)            # (Cout, Cin, k, k)
    cout, cin, k, _ = w.shape
    wo = w_in - (k - 1)
    woh = wo // 2
    if rows is None:
        rows = w_in * cin
    rhs = np.zeros((k, rows, 2 * half), np.float32)
    for i in range(k):
        for j in range(k):
            for d in range(2):
                for f in range(woh):
                    wc = 2 * f + d + j            # input column index
                    col = d * half + f * cout
                    rhs[i, wc * cin:(wc + 1) * cin, col:col + cout] = w[:, :, i, j].T
    return rhs


def _conv_bias(b, half, w_half):
    """Bias tiled onto the padded [d, f, co] column layout (zeros in padding)."""
    b = np.asarray(b, np.float32)
    cout = b.shape[0]
    out = np.zeros((1, 2 * half), np.float32)
    for d in range(2):
        for f in range(w_half):
            out[0, d * half + f * cout: d * half + f * cout + cout] = b
    return out


def prepare_params(params):
    """One-time weight re-layout (outside jit): conv weights -> padded
    block-Toeplitz matmul form (bf16), biases -> padded lane rows (f32), fc
    weights pre-transposed / zero-padded to 128-lane tiles (bf16) with the
    NCHW flatten permutation folded into fc1's rows."""
    f32 = np.float32
    bf16 = jnp.bfloat16

    # conv layers
    rhs1 = _conv_rhs(params["conv1_w"], w_in=32, half=HALF)           # (5, 32*C, 256)
    rhs2 = _conv_rhs(params["conv2_w"], w_in=14, half=HALF, rows=HALF)  # (5, 128, 256)
    b1 = _conv_bias(params["conv1_b"], HALF, 14)
    b2 = _conv_bias(params["conv2_b"], HALF, 5)

    # fc1: rows ordered (g=h, lane=w*16+c) to match pool2's layout, g-chunks
    # padded to 128 rows, output padded 120 -> 128 lanes.
    fc1_w = np.asarray(params["fc1_w"], f32)                          # (120, 400)
    base = np.transpose(fc1_w.reshape(120, 16, 5, 5), (2, 3, 1, 0)).reshape(5, 80, 120)
    wfc1 = np.zeros((5 * HALF, 128), f32)
    for g in range(5):
        wfc1[g * HALF: g * HALF + 80, :120] = base[g]
    bfc1 = np.zeros((1, 128), f32)
    bfc1[0, :120] = np.asarray(params["fc1_b"], f32)

    # fc2: 120 -> 84, padded to 128x128
    wfc2 = np.zeros((128, 128), f32)
    wfc2[:120, :84] = np.asarray(params["fc2_w"], f32).T
    bfc2 = np.zeros((1, 128), f32)
    bfc2[0, :84] = np.asarray(params["fc2_b"], f32)

    # fc3: 84 -> n_classes (rows padded to 128; columns kept at n_classes so
    # the true class count stays recoverable from the array shape)
    fc3_w = np.asarray(params["fc3_w"], f32)                          # (n_cls, 84)
    n_cls = fc3_w.shape[0]
    wfc3 = np.zeros((128, n_cls), f32)
    wfc3[:84, :] = fc3_w.T
    bfc3 = np.asarray(params["fc3_b"], f32).reshape(1, -1)

    return {
        "rhs1": jnp.asarray(rhs1, bf16), "b1": jnp.asarray(b1),
        "rhs2": jnp.asarray(rhs2, bf16), "b2": jnp.asarray(b2),
        "wfc1": jnp.asarray(wfc1, bf16), "bfc1": jnp.asarray(bfc1),
        "wfc2": jnp.asarray(wfc2, bf16), "bfc2": jnp.asarray(bfc2),
        "wfc3": jnp.asarray(wfc3, bf16), "bfc3": jnp.asarray(bfc3),
    }


# ------------------------------ forward wrapper -----------------------------

def _round_up(x, m):
    return (x + m - 1) // m * m


def _tile_config(batch):
    """Batch tile <= 128 images (multiple of 8); batch is padded to nt*tb."""
    nt = max(1, (batch + 127) // 128)
    tb = _round_up((batch + nt - 1) // nt, 8)
    return nt, tb


def lenet32_forward(prep, x_nchw):
    """LeNet_32 forward; x is NCHW (PyTorch layout), 32x32 spatial."""
    B, C, H, W = x_nchw.shape
    assert H == 32 and W == 32, "LeNet_32 expects 32x32 inputs"
    n_cls = prep["wfc3"].shape[1]
    nt, tb = _tile_config(B)
    b_pad = nt * tb

    # NCHW -> bf16 row format: pad batch, split H into 4 row phases, flatten
    # (w, c) onto lanes:  xr[tile, p, b*8 + t, w*C + c] = x[b, 4t + p, w, c].
    # (Could be hoisted to data-prep time to save one HBM pass; it is a small
    #  fraction of total bytes, especially now that it is done in bf16.)
    x = jnp.transpose(x_nchw, (0, 2, 3, 1)).astype(jnp.bfloat16)       # (B,32,32,C)
    if b_pad != B:
        x = jnp.pad(x, ((0, b_pad - B), (0, 0), (0, 0), (0, 0)))
    xr = x.reshape(b_pad, 8, 4, 32 * C)
    xr = jnp.transpose(xr, (2, 0, 1, 3)).reshape(4, b_pad * 8, 32 * C)
    xr = xr.reshape(4, nt, tb * 8, 32 * C).transpose(1, 0, 2, 3)
    xr = jnp.pad(xr, ((0, 0), (0, 0), (0, 8), (0, 0)))   # slack rows for shifts

    def full(a):                        # whole-array block, constant over grid
        nd = a.ndim
        return pl.BlockSpec(a.shape, lambda t, nd=nd: (0,) * nd)

    w_names = ("rhs1", "b1", "rhs2", "b2", "wfc1", "bfc1",
               "wfc2", "bfc2", "wfc3", "bfc3")
    out = pl.pallas_call(
        _lenet_kernel,
        out_shape=jax.ShapeDtypeStruct((b_pad, n_cls), jnp.float32),
        grid=(nt,),
        in_specs=[pl.BlockSpec((1, 4, tb * 8 + 8, 32 * C),
                               lambda t: (t, 0, 0, 0))]
                 + [full(prep[n]) for n in w_names],
        out_specs=pl.BlockSpec((tb, n_cls), lambda t: (t, 0)),
        scratch_shapes=[pltpu.VMEM((8 * tb, 128), jnp.float32)],
        compiler_params=pltpu.CompilerParams(
            dimension_semantics=("parallel",),
            vmem_limit_bytes=32 * 1024 * 1024),
    )(xr, *[prep[n] for n in w_names])
    return out[:B]


# ------------------------------- init / reference ---------------------------

def init_params(key, n_channels=3, n_classes=10):
    """PyTorch-shaped parameters with nn.Conv2d/nn.Linear-style uniform init."""
    keys = jax.random.split(key, 10)

    def u(k, shape, fan_in):
        bound = 1.0 / float(fan_in) ** 0.5
        return jax.random.uniform(k, shape, jnp.float32, -bound, bound)

    return {
        "conv1_w": u(keys[0], (6, n_channels, 5, 5), n_channels * 25),
        "conv1_b": u(keys[1], (6,), n_channels * 25),
        "conv2_w": u(keys[2], (16, 6, 5, 5), 6 * 25),
        "conv2_b": u(keys[3], (16,), 6 * 25),
        "fc1_w": u(keys[4], (120, 16 * 5 * 5), 16 * 5 * 5),
        "fc1_b": u(keys[5], (120,), 16 * 5 * 5),
        "fc2_w": u(keys[6], (84, 120), 120),
        "fc2_b": u(keys[7], (84,), 120),
        "fc3_w": u(keys[8], (n_classes, 84), 84),
        "fc3_b": u(keys[9], (n_classes,), 84),
    }


def lenet32_reference(params, x_nchw):
    """Pure-JAX reference (matches the PyTorch module, full f32)."""
    x = x_nchw.astype(jnp.float32)

    def conv(z, w, b):
        y = jax.lax.conv_general_dilated(
            z, w, (1, 1), "VALID", dimension_numbers=("NCHW", "OIHW", "NCHW"))
        return jax.nn.relu(y + b[None, :, None, None])

    def pool(z):
        return jax.lax.reduce_window(z, -jnp.inf, jax.lax.max,
                                     (1, 1, 2, 2), (1, 1, 2, 2), "VALID")

    out = pool(conv(x, params["conv1_w"], params["conv1_b"]))
    out = pool(conv(out, params["conv2_w"], params["conv2_b"]))
    out = out.reshape(out.shape[0], -1)
    out = jax.nn.relu(out @ params["fc1_w"].T + params["fc1_b"])
    out = jax.nn.relu(out @ params["fc2_w"].T + params["fc2_b"])
    return out @ params["fc3_w"].T + params["fc3_b"]


if __name__ == "__main__":
    key = jax.random.PRNGKey(0)
    k_param, k_x = jax.random.split(key)

    params = init_params(k_param, n_channels=3, n_classes=10)
    # LeNet_32 requires 32x32 spatial input (fc1 expects 16*5*5 features).
    x = jax.random.normal(k_x, (2, 3, 32, 32), dtype=jnp.float32)

    prep = prepare_params(params)          # one-time weight re-layout
    fwd = jax.jit(lenet32_forward)
    logits = fwd(prep, x)
    jax.block_until_ready(logits)

    assert logits.shape == (2, 10), logits.shape
    assert bool(jnp.all(jnp.isfinite(logits)))

    ref = lenet32_reference(params, x)
    err = float(jnp.max(jnp.abs(logits - ref)))
    # bf16 matmul operands with f32 accumulation: a few e-3 absolute expected.
    assert err < 2e-2, f"mismatch vs reference: max|diff|={err}"

    print("KERNEL_OK")
</pallas_src>

<mosaic_0001>
module attributes {stable_mosaic.version = 11 : i64} {
  func.func @_lenet_kernel(%arg0: i32, %arg1: memref<1x4x72x96xbf16, #tpu.memory_space<vmem>>, %arg2: memref<5x96x256xbf16, #tpu.memory_space<vmem>>, %arg3: memref<1x256xf32, #tpu.memory_space<vmem>>, %arg4: memref<5x128x256xbf16, #tpu.memory_space<vmem>>, %arg5: memref<1x256xf32, #tpu.memory_space<vmem>>, %arg6: memref<640x128xbf16, #tpu.memory_space<vmem>>, %arg7: memref<1x128xf32, #tpu.memory_space<vmem>>, %arg8: memref<128x128xbf16, #tpu.memory_space<vmem>>, %arg9: memref<1x128xf32, #tpu.memory_space<vmem>>, %arg10: memref<128x10xbf16, #tpu.memory_space<vmem>>, %arg11: memref<1x10xf32, #tpu.memory_space<vmem>>, %arg12: memref<8x10xf32, #tpu.memory_space<vmem>>, %arg13: memref<64x128xf32, #tpu.memory_space<vmem>>) attributes {dimension_semantics = [#tpu.dimension_semantics<parallel>], iteration_bounds = array<i64: 1>, scalar_prefetch = 0 : i64, scratch_operands = 1 : i64, tpu.core_type = #tpu.core_type<tc>, window_params = [{transform_indices = @transform_0, window_bounds = array<i64: 1, 4, 72, 96>}, {pipeline_mode = #tpu.pipeline_mode<synchronous>, transform_indices = @transform_1, window_bounds = array<i64: 5, 96, 256>}, {pipeline_mode = #tpu.pipeline_mode<synchronous>, transform_indices = @transform_2, window_bounds = array<i64: 1, 256>}, {pipeline_mode = #tpu.pipeline_mode<synchronous>, transform_indices = @transform_3, window_bounds = array<i64: 5, 128, 256>}, {pipeline_mode = #tpu.pipeline_mode<synchronous>, transform_indices = @transform_4, window_bounds = array<i64: 1, 256>}, {pipeline_mode = #tpu.pipeline_mode<synchronous>, transform_indices = @transform_5, window_bounds = array<i64: 640, 128>}, {pipeline_mode = #tpu.pipeline_mode<synchronous>, transform_indices = @transform_6, window_bounds = array<i64: 1, 128>}, {pipeline_mode = #tpu.pipeline_mode<synchronous>, transform_indices = @transform_7, window_bounds = array<i64: 128, 128>}, {pipeline_mode = #tpu.pipeline_mode<synchronous>, transform_indices = @transform_8, window_bounds = array<i64: 1, 128>}, {pipeline_mode = #tpu.pipeline_mode<synchronous>, transform_indices = @transform_9, window_bounds = array<i64: 128, 10>}, {pipeline_mode = #tpu.pipeline_mode<synchronous>, transform_indices = @transform_10, window_bounds = array<i64: 1, 10>}, {transform_indices = @transform_11, window_bounds = array<i64: 8, 10>}]} {
    %cst = arith.constant 0.000000e+00 : f32
    %0 = vector.broadcast %cst : f32 to vector<64x256xf32>
    %c0 = arith.constant 0 : index
    %c0_0 = arith.constant 0 : index
    %c0_1 = arith.constant 0 : index
    %c0_2 = arith.constant 0 : index
    %1 = vector.load %arg1[%c0, %c0_0, %c0_1, %c0_2] : memref<1x4x72x96xbf16, #tpu.memory_space<vmem>>, vector<1x1x64x96xbf16>
    %2 = vector.shape_cast %1 : vector<1x1x64x96xbf16> to vector<64x96xbf16>
    %c0_3 = arith.constant 0 : index
    %c0_4 = arith.constant 0 : index
    %c0_5 = arith.constant 0 : index
    %3 = vector.load %arg2[%c0_3, %c0_4, %c0_5] : memref<5x96x256xbf16, #tpu.memory_space<vmem>>, vector<1x96x256xbf16>
    %4 = vector.shape_cast %3 : vector<1x96x256xbf16> to vector<96x256xbf16>
    %cst_6 = arith.constant dense<0.000000e+00> : vector<64x256xf32>
    %5 = tpu.matmul %2, %4, %cst_6 {dimension_numbers = #tpu.dot_dimension_numbers<[1], [0], [0], [1], [0, 0, 1, 1], [], []>} : vector<64x96xbf16>, vector<96x256xbf16>, vector<64x256xf32> -> vector<64x256xf32>
    %6 = arith.addf %0, %5 : vector<64x256xf32>
    %c0_7 = arith.constant 0 : index
    %c1 = arith.constant 1 : index
    %c0_8 = arith.constant 0 : index
    %c0_9 = arith.constant 0 : index
    %7 = vector.load %arg1[%c0_7, %c1, %c0_8, %c0_9] : memref<1x4x72x96xbf16, #tpu.memory_space<vmem>>, vector<1x1x64x96xbf16>
    %8 = vector.shape_cast %7 : vector<1x1x64x96xbf16> to vector<64x96xbf16>
    %c1_10 = arith.constant 1 : index
    %c0_11 = arith.constant 0 : index
    %c0_12 = arith.constant 0 : index
    %9 = vector.load %arg2[%c1_10, %c0_11, %c0_12] : memref<5x96x256xbf16, #tpu.memory_space<vmem>>, vector<1x96x256xbf16>
    %10 = vector.shape_cast %9 : vector<1x96x256xbf16> to vector<96x256xbf16>
    %cst_13 = arith.constant dense<0.000000e+00> : vector<64x256xf32>
    %11 = tpu.matmul %8, %10, %cst_13 {dimension_numbers = #tpu.dot_dimension_numbers<[1], [0], [0], [1], [0, 0, 1, 1], [], []>} : vector<64x96xbf16>, vector<96x256xbf16>, vector<64x256xf32> -> vector<64x256xf32>
    %12 = arith.addf %6, %11 : vector<64x256xf32>
    %c0_14 = arith.constant 0 : index
    %c2 = arith.constant 2 : index
    %c0_15 = arith.constant 0 : index
    %c0_16 = arith.constant 0 : index
    %13 = vector.load %arg1[%c0_14, %c2, %c0_15, %c0_16] : memref<1x4x72x96xbf16, #tpu.memory_space<vmem>>, vector<1x1x64x96xbf16>
    %14 = vector.shape_cast %13 : vector<1x1x64x96xbf16> to vector<64x96xbf16>
    %c2_17 = arith.constant 2 : index
    %c0_18 = arith.constant 0 : index
    %c0_19 = arith.constant 0 : index
    %15 = vector.load %arg2[%c2_17, %c0_18, %c0_19] : memref<5x96x256xbf16, #tpu.memory_space<vmem>>, vector<1x96x256xbf16>
    %16 = vector.shape_cast %15 : vector<1x96x256xbf16> to vector<96x256xbf16>
    %cst_20 = arith.constant dense<0.000000e+00> : vector<64x256xf32>
    %17 = tpu.matmul %14, %16, %cst_20 {dimension_numbers = #tpu.dot_dimension_numbers<[1], [0], [0], [1], [0, 0, 1, 1], [], []>} : vector<64x96xbf16>, vector<96x256xbf16>, vector<64x256xf32> -> vector<64x256xf32>
    %18 = arith.addf %12, %17 : vector<64x256xf32>
    %c0_21 = arith.constant 0 : index
    %c3 = arith.constant 3 : index
    %c0_22 = arith.constant 0 : index
    %c0_23 = arith.constant 0 : index
    %19 = vector.load %arg1[%c0_21, %c3, %c0_22, %c0_23] : memref<1x4x72x96xbf16, #tpu.memory_space<vmem>>, vector<1x1x64x96xbf16>
    %20 = vector.shape_cast %19 : vector<1x1x64x96xbf16> to vector<64x96xbf16>
    %c3_24 = arith.constant 3 : index
    %c0_25 = arith.constant 0 : index
    %c0_26 = arith.constant 0 : index
    %21 = vector.load %arg2[%c3_24, %c0_25, %c0_26] : memref<5x96x256xbf16, #tpu.memory_space<vmem>>, vector<1x96x256xbf16>
    %22 = vector.shape_cast %21 : vector<1x96x256xbf16> to vector<96x256xbf16>
    %cst_27 = arith.constant dense<0.000000e+00> : vector<64x256xf32>
    %23 = tpu.matmul %20, %22, %cst_27 {dimension_numbers = #tpu.dot_dimension_numbers<[1], [0], [0], [1], [0, 0, 1, 1], [], []>} : vector<64x96xbf16>, vector<96x256xbf16>, vector<64x256xf32> -> vector<64x256xf32>
    %24 = arith.addf %18, %23 : vector<64x256xf32>
    %c0_28 = arith.constant 0 : index
    %c0_29 = arith.constant 0 : index
    %c1_30 = arith.constant 1 : index
    %c0_31 = arith.constant 0 : index
    %25 = vector.load %arg1[%c0_28, %c0_29, %c1_30, %c0_31] : memref<1x4x72x96xbf16, #tpu.memory_space<vmem>>, vector<1x1x64x96xbf16>
    %26 = vector.shape_cast %25 : vector<1x1x64x96xbf16> to vector<64x96xbf16>
    %c4 = arith.constant 4 : index
    %c0_32 = arith.constant 0 : index
    %c0_33 = arith.constant 0 : index
    %27 = vector.load %arg2[%c4, %c0_32, %c0_33] : memref<5x96x256xbf16, #tpu.memory_space<vmem>>, vector<1x96x256xbf16>
    %28 = vector.shape_cast %27 : vector<1x96x256xbf16> to vector<96x256xbf16>
    %cst_34 = arith.constant dense<0.000000e+00> : vector<64x256xf32>
    %29 = tpu.matmul %26, %28, %cst_34 {dimension_numbers = #tpu.dot_dimension_numbers<[1], [0], [0], [1], [0, 0, 1, 1], [], []>} : vector<64x96xbf16>, vector<96x256xbf16>, vector<64x256xf32> -> vector<64x256xf32>
    %30 = arith.addf %24, %29 : vector<64x256xf32>
    %c0_35 = arith.constant 0 : index
    %c0_36 = arith.constant 0 : index
    %31 = vector.load %arg3[%c0_35, %c0_36] : memref<1x256xf32, #tpu.memory_space<vmem>>, vector<1x256xf32>
    %32 = vector.broadcast %31 : vector<1x256xf32> to vector<64x256xf32>
    %33 = arith.addf %30, %32 : vector<64x256xf32>
    %cst_37 = arith.constant 0.000000e+00 : f32
    %34 = vector.broadcast %cst_37 : f32 to vector<64x256xf32>
    %35 = arith.maximumf %33, %34 : vector<64x256xf32>
    %cst_38 = arith.constant 0.000000e+00 : f32
    %36 = vector.broadcast %cst_38 : f32 to vector<64x256xf32>
    %c0_39 = arith.constant 0 : index
    %c1_40 = arith.constant 1 : index
    %c0_41 = arith.constant 0 : index
    %c0_42 = arith.constant 0 : index
    %37 = vector.load %arg1[%c0_39, %c1_40, %c0_41, %c0_42] : memref<1x4x72x96xbf16, #tpu.memory_space<vmem>>, vector<1x1x64x96xbf16>
    %38 = vector.shape_cast %37 : vector<1x1x64x96xbf16> to vector<64x96xbf16>
    %c0_43 = arith.constant 0 : index
    %c0_44 = arith.constant 0 : index
    %c0_45 = arith.constant 0 : index
    %39 = vector.load %arg2[%c0_43, %c0_44, %c0_45] : memref<5x96x256xbf16, #tpu.memory_space<vmem>>, vector<1x96x256xbf16>
    %40 = vector.shape_cast %39 : vector<1x96x256xbf16> to vector<96x256xbf16>
    %cst_46 = arith.constant dense<0.000000e+00> : vector<64x256xf32>
    %41 = tpu.matmul %38, %40, %cst_46 {dimension_numbers = #tpu.dot_dimension_numbers<[1], [0], [0], [1], [0, 0, 1, 1], [], []>} : vector<64x96xbf16>, vector<96x256xbf16>, vector<64x256xf32> -> vector<64x256xf32>
    %42 = arith.addf %36, %41 : vector<64x256xf32>
    %c0_47 = arith.constant 0 : index
    %c2_48 = arith.constant 2 : index
    %c0_49 = arith.constant 0 : index
    %c0_50 = arith.constant 0 : index
    %43 = vector.load %arg1[%c0_47, %c2_48, %c0_49, %c0_50] : memref<1x4x72x96xbf16, #tpu.memory_space<vmem>>, vector<1x1x64x96xbf16>
    %44 = vector.shape_cast %43 : vector<1x1x64x96xbf16> to vector<64x96xbf16>
    %c1_51 = arith.constant 1 : index
    %c0_52 = arith.constant 0 : index
    %c0_53 = arith.constant 0 : index
    %45 = vector.load %arg2[%c1_51, %c0_52, %c0_53] : memref<5x96x256xbf16, #tpu.memory_space<vmem>>, vector<1x96x256xbf16>
    %46 = vector.shape_cast %45 : vector<1x96x256xbf16> to vector<96x256xbf16>
    %cst_54 = arith.constant dense<0.000000e+00> : vector<64x256xf32>
    %47 = tpu.matmul %44, %46, %cst_54 {dimension_numbers = #tpu.dot_dimension_numbers<[1], [0], [0], [1], [0, 0, 1, 1], [], []>} : vector<64x96xbf16>, vector<96x256xbf16>, vector<64x256xf32> -> vector<64x256xf32>
    %48 = arith.addf %42, %47 : vector<64x256xf32>
    %c0_55 = arith.constant 0 : index
    %c3_56 = arith.constant 3 : index
    %c0_57 = arith.constant 0 : index
    %c0_58 = arith.constant 0 : index
    %49 = vector.load %arg1[%c0_55, %c3_56, %c0_57, %c0_58] : memref<1x4x72x96xbf16, #tpu.memory_space<vmem>>, vector<1x1x64x96xbf16>
    %50 = vector.shape_cast %49 : vector<1x1x64x96xbf16> to vector<64x96xbf16>
    %c2_59 = arith.constant 2 : index
    %c0_60 = arith.constant 0 : index
    %c0_61 = arith.constant 0 : index
    %51 = vector.load %arg2[%c2_59, %c0_60, %c0_61] : memref<5x96x256xbf16, #tpu.memory_space<vmem>>, vector<1x96x256xbf16>
    %52 = vector.shape_cast %51 : vector<1x96x256xbf16> to vector<96x256xbf16>
    %cst_62 = arith.constant dense<0.000000e+00> : vector<64x256xf32>
    %53 = tpu.matmul %50, %52, %cst_62 {dimension_numbers = #tpu.dot_dimension_numbers<[1], [0], [0], [1], [0, 0, 1, 1], [], []>} : vector<64x96xbf16>, vector<96x256xbf16>, vector<64x256xf32> -> vector<64x256xf32>
    %54 = arith.addf %48, %53 : vector<64x256xf32>
    %c0_63 = arith.constant 0 : index
    %c0_64 = arith.constant 0 : index
    %c1_65 = arith.constant 1 : index
    %c0_66 = arith.constant 0 : index
    %55 = vector.load %arg1[%c0_63, %c0_64, %c1_65, %c0_66] : memref<1x4x72x96xbf16, #tpu.memory_space<vmem>>, vector<1x1x64x96xbf16>
    %56 = vector.shape_cast %55 : vector<1x1x64x96xbf16> to vector<64x96xbf16>
    %c3_67 = arith.constant 3 : index
    %c0_68 = arith.constant 0 : index
    %c0_69 = arith.constant 0 : index
    %57 = vector.load %arg2[%c3_67, %c0_68, %c0_69] : memref<5x96x256xbf16, #tpu.memory_space<vmem>>, vector<1x96x256xbf16>
    %58 = vector.shape_cast %57 : vector<1x96x256xbf16> to vector<96x256xbf16>
    %cst_70 = arith.constant dense<0.000000e+00> : vector<64x256xf32>
    %59 = tpu.matmul %56, %58, %cst_70 {dimension_numbers = #tpu.dot_dimension_numbers<[1], [0], [0], [1], [0, 0, 1, 1], [], []>} : vector<64x96xbf16>, vector<96x256xbf16>, vector<64x256xf32> -> vector<64x256xf32>
    %60 = arith.addf %54, %59 : vector<64x256xf32>
    %c0_71 = arith.constant 0 : index
    %c1_72 = arith.constant 1 : index
    %c1_73 = arith.constant 1 : index
    %c0_74 = arith.constant 0 : index
    %61 = vector.load %arg1[%c0_71, %c1_72, %c1_73, %c0_74] : memref<1x4x72x96xbf16, #tpu.memory_space<vmem>>, vector<1x1x64x96xbf16>
    %62 = vector.shape_cast %61 : vector<1x1x64x96xbf16> to vector<64x96xbf16>
    %c4_75 = arith.constant 4 : index
    %c0_76 = arith.constant 0 : index
    %c0_77 = arith.constant 0 : index
    %63 = vector.load %arg2[%c4_75, %c0_76, %c0_77] : memref<5x96x256xbf16, #tpu.memory_space<vmem>>, vector<1x96x256xbf16>
    %64 = vector.shape_cast %63 : vector<1x96x256xbf16> to vector<96x256xbf16>
    %cst_78 = arith.constant dense<0.000000e+00> : vector<64x256xf32>
    %65 = tpu.matmul %62, %64, %cst_78 {dimension_numbers = #tpu.dot_dimension_numbers<[1], [0], [0], [1], [0, 0, 1, 1], [], []>} : vector<64x96xbf16>, vector<96x256xbf16>, vector<64x256xf32> -> vector<64x256xf32>
    %66 = arith.addf %60, %65 : vector<64x256xf32>
    %c0_79 = arith.constant 0 : index
    %c0_80 = arith.constant 0 : index
    %67 = vector.load %arg3[%c0_79, %c0_80] : memref<1x256xf32, #tpu.memory_space<vmem>>, vector<1x256xf32>
    %68 = vector.broadcast %67 : vector<1x256xf32> to vector<64x256xf32>
    %69 = arith.addf %66, %68 : vector<64x256xf32>
    %cst_81 = arith.constant 0.000000e+00 : f32
    %70 = vector.broadcast %cst_81 : f32 to vector<64x256xf32>
    %71 = arith.maximumf %69, %70 : vector<64x256xf32>
    %72 = arith.maximumf %35, %71 : vector<64x256xf32>
    %73 = vector.extract_strided_slice %72 {offsets = [0, 0], sizes = [64, 128], strides = [1, 1]} : vector<64x256xf32> to vector<64x128xf32>
    %74 = vector.extract_strided_slice %72 {offsets = [0, 128], sizes = [64, 128], strides = [1, 1]} : vector<64x256xf32> to vector<64x128xf32>
    %75 = arith.maximumf %73, %74 : vector<64x128xf32>
    %76 = arith.truncf %75 : vector<64x128xf32> to vector<64x128xbf16>
    %cst_82 = arith.constant 0.000000e+00 : f32
    %77 = vector.broadcast %cst_82 : f32 to vector<64x256xf32>
    %c0_83 = arith.constant 0 : index
    %c2_84 = arith.constant 2 : index
    %c0_85 = arith.constant 0 : index
    %c0_86 = arith.constant 0 : index
    %78 = vector.load %arg1[%c0_83, %c2_84, %c0_85, %c0_86] : memref<1x4x72x96xbf16, #tpu.memory_space<vmem>>, vector<1x1x64x96xbf16>
    %79 = vector.shape_cast %78 : vector<1x1x64x96xbf16> to vector<64x96xbf16>
    %c0_87 = arith.constant 0 : index
    %c0_88 = arith.constant 0 : index
    %c0_89 = arith.constant 0 : index
    %80 = vector.load %arg2[%c0_87, %c0_88, %c0_89] : memref<5x96x256xbf16, #tpu.memory_space<vmem>>, vector<1x96x256xbf16>
    %81 = vector.shape_cast %80 : vector<1x96x256xbf16> to vector<96x256xbf16>
    %cst_90 = arith.constant dense<0.000000e+00> : vector<64x256xf32>
    %82 = tpu.matmul %79, %81, %cst_90 {dimension_numbers = #tpu.dot_dimension_numbers<[1], [0], [0], [1], [0, 0, 1, 1], [], []>} : vector<64x96xbf16>, vector<96x256xbf16>, vector<64x256xf32> -> vector<64x256xf32>
    %83 = arith.addf %77, %82 : vector<64x256xf32>
    %c0_91 = arith.constant 0 : index
    %c3_92 = arith.constant 3 : index
    %c0_93 = arith.constant 0 : index
    %c0_94 = arith.constant 0 : index
    %84 = vector.load %arg1[%c0_91, %c3_92, %c0_93, %c0_94] : memref<1x4x72x96xbf16, #tpu.memory_space<vmem>>, vector<1x1x64x96xbf16>
    %85 = vector.shape_cast %84 : vector<1x1x64x96xbf16> to vector<64x96xbf16>
    %c1_95 = arith.constant 1 : index
    %c0_96 = arith.constant 0 : index
    %c0_97 = arith.constant 0 : index
    %86 = vector.load %arg2[%c1_95, %c0_96, %c0_97] : memref<5x96x256xbf16, #tpu.memory_space<vmem>>, vector<1x96x256xbf16>
    %87 = vector.shape_cast %86 : vector<1x96x256xbf16> to vector<96x256xbf16>
    %cst_98 = arith.constant dense<0.000000e+00> : vector<64x256xf32>
    %88 = tpu.matmul %85, %87, %cst_98 {dimension_numbers = #tpu.dot_dimension_numbers<[1], [0], [0], [1], [0, 0, 1, 1], [], []>} : vector<64x96xbf16>, vector<96x256xbf16>, vector<64x256xf32> -> vector<64x256xf32>
    %89 = arith.addf %83, %88 : vector<64x256xf32>
    %c0_99 = arith.constant 0 : index
    %c0_100 = arith.constant 0 : index
    %c1_101 = arith.constant 1 : index
    %c0_102 = arith.constant 0 : index
    %90 = vector.load %arg1[%c0_99, %c0_100, %c1_101, %c0_102] : memref<1x4x72x96xbf16, #tpu.memory_space<vmem>>, vector<1x1x64x96xbf16>
    %91 = vector.shape_cast %90 : vector<1x1x64x96xbf16> to vector<64x96xbf16>
    %c2_103 = arith.constant 2 : index
    %c0_104 = arith.constant 0 : index
    %c0_105 = arith.constant 0 : index
    %92 = vector.load %arg2[%c2_103, %c0_104, %c0_105] : memref<5x96x256xbf16, #tpu.memory_space<vmem>>, vector<1x96x256xbf16>
    %93 = vector.shape_cast %92 : vector<1x96x256xbf16> to vector<96x256xbf16>
    %cst_106 = arith.constant dense<0.000000e+00> : vector<64x256xf32>
    %94 = tpu.matmul %91, %93, %cst_106 {dimension_numbers = #tpu.dot_dimension_numbers<[1], [0], [0], [1], [0, 0, 1, 1], [], []>} : vector<64x96xbf16>, vector<96x256xbf16>, vector<64x256xf32> -> vector<64x256xf32>
    %95 = arith.addf %89, %94 : vector<64x256xf32>
    %c0_107 = arith.constant 0 : index
    %c1_108 = arith.constant 1 : index
    %c1_109 = arith.constant 1 : index
    %c0_110 = arith.constant 0 : index
    %96 = vector.load %arg1[%c0_107, %c1_108, %c1_109, %c0_110] : memref<1x4x72x96xbf16, #tpu.memory_space<vmem>>, vector<1x1x64x96xbf16>
    %97 = vector.shape_cast %96 : vector<1x1x64x96xbf16> to vector<64x96xbf16>
    %c3_111 = arith.constant 3 : index
    %c0_112 = arith.constant 0 : index
    %c0_113 = arith.constant 0 : index
    %98 = vector.load %arg2[%c3_111, %c0_112, %c0_113] : memref<5x96x256xbf16, #tpu.memory_space<vmem>>, vector<1x96x256xbf16>
    %99 = vector.shape_cast %98 : vector<1x96x256xbf16> to vector<96x256xbf16>
    %cst_114 = arith.constant dense<0.000000e+00> : vector<64x256xf32>
    %100 = tpu.matmul %97, %99, %cst_114 {dimension_numbers = #tpu.dot_dimension_numbers<[1], [0], [0], [1], [0, 0, 1, 1], [], []>} : vector<64x96xbf16>, vector<96x256xbf16>, vector<64x256xf32> -> vector<64x256xf32>
    %101 = arith.addf %95, %100 : vector<64x256xf32>
    %c0_115 = arith.constant 0 : index
    %c2_116 = arith.constant 2 : index
    %c1_117 = arith.constant 1 : index
    %c0_118 = arith.constant 0 : index
    %102 = vector.load %arg1[%c0_115, %c2_116, %c1_117, %c0_118] : memref<1x4x72x96xbf16, #tpu.memory_space<vmem>>, vector<1x1x64x96xbf16>
    %103 = vector.shape_cast %102 : vector<1x1x64x96xbf16> to vector<64x96xbf16>
    %c4_119 = arith.constant 4 : index
    %c0_120 = arith.constant 0 : index
    %c0_121 = arith.constant 0 : index
    %104 = vector.load %arg2[%c4_119, %c0_120, %c0_121] : memref<5x96x256xbf16, #tpu.memory_space<vmem>>, vector<1x96x256xbf16>
    %105 = vector.shape_cast %104 : vector<1x96x256xbf16> to vector<96x256xbf16>
    %cst_122 = arith.constant dense<0.000000e+00> : vector<64x256xf32>
    %106 = tpu.matmul %103, %105, %cst_122 {dimension_numbers = #tpu.dot_dimension_numbers<[1], [0], [0], [1], [0, 0, 1, 1], [], []>} : vector<64x96xbf16>, vector<96x256xbf16>, vector<64x256xf32> -> vector<64x256xf32>
    %107 = arith.addf %101, %106 : vector<64x256xf32>
    %c0_123 = arith.constant 0 : index
    %c0_124 = arith.constant 0 : index
    %108 = vector.load %arg3[%c0_123, %c0_124] : memref<1x256xf32, #tpu.memory_space<vmem>>, vector<1x256xf32>
    %109 = vector.broadcast %108 : vector<1x256xf32> to vector<64x256xf32>
    %110 = arith.addf %107, %109 : vector<64x256xf32>
    %cst_125 = arith.constant 0.000000e+00 : f32
    %111 = vector.broadcast %cst_125 : f32 to vector<64x256xf32>
    %112 = arith.maximumf %110, %111 : vector<64x256xf32>
    %cst_126 = arith.constant 0.000000e+00 : f32
    %113 = vector.broadcast %cst_126 : f32 to vector<64x256xf32>
    %c0_127 = arith.constant 0 : index
    %c3_128 = arith.constant 3 : index
    %c0_129 = arith.constant 0 : index
    %c0_130 = arith.constant 0 : index
    %114 = vector.load %arg1[%c0_127, %c3_128, %c0_129, %c0_130] : memref<1x4x72x96xbf16, #tpu.memory_space<vmem>>, vector<1x1x64x96xbf16>
    %115 = vector.shape_cast %114 : vector<1x1x64x96xbf16> to vector<64x96xbf16>
    %c0_131 = arith.constant 0 : index
    %c0_132 = arith.constant 0 : index
    %c0_133 = arith.constant 0 : index
    %116 = vector.load %arg2[%c0_131, %c0_132, %c0_133] : memref<5x96x256xbf16, #tpu.memory_space<vmem>>, vector<1x96x256xbf16>
    %117 = vector.shape_cast %116 : vector<1x96x256xbf16> to vector<96x256xbf16>
    %cst_134 = arith.constant dense<0.000000e+00> : vector<64x256xf32>
    %118 = tpu.matmul %115, %117, %cst_134 {dimension_numbers = #tpu.dot_dimension_numbers<[1], [0], [0], [1], [0, 0, 1, 1], [], []>} : vector<64x96xbf16>, vector<96x256xbf16>, vector<64x256xf32> -> vector<64x256xf32>
    %119 = arith.addf %113, %118 : vector<64x256xf32>
    %c0_135 = arith.constant 0 : index
    %c0_136 = arith.constant 0 : index
    %c1_137 = arith.constant 1 : index
    %c0_138 = arith.constant 0 : index
    %120 = vector.load %arg1[%c0_135, %c0_136, %c1_137, %c0_138] : memref<1x4x72x96xbf16, #tpu.memory_space<vmem>>, vector<1x1x64x96xbf16>
    %121 = vector.shape_cast %120 : vector<1x1x64x96xbf16> to vector<64x96xbf16>
    %c1_139 = arith.constant 1 : index
    %c0_140 = arith.constant 0 : index
    %c0_141 = arith.constant 0 : index
    %122 = vector.load %arg2[%c1_139, %c0_140, %c0_141] : memref<5x96x256xbf16, #tpu.memory_space<vmem>>, vector<1x96x256xbf16>
    %123 = vector.shape_cast %122 : vector<1x96x256xbf16> to vector<96x256xbf16>
    %cst_142 = arith.constant dense<0.000000e+00> : vector<64x256xf32>
    %124 = tpu.matmul %121, %123, %cst_142 {dimension_numbers = #tpu.dot_dimension_numbers<[1], [0], [0], [1], [0, 0, 1, 1], [], []>} : vector<64x96xbf16>, vector<96x256xbf16>, vector<64x256xf32> -> vector<64x256xf32>
    %125 = arith.addf %119, %124 : vector<64x256xf32>
    %c0_143 = arith.constant 0 : index
    %c1_144 = arith.constant 1 : index
    %c1_145 = arith.constant 1 : index
    %c0_146 = arith.constant 0 : index
    %126 = vector.load %arg1[%c0_143, %c1_144, %c1_145, %c0_146] : memref<1x4x72x96xbf16, #tpu.memory_space<vmem>>, vector<1x1x64x96xbf16>
    %127 = vector.shape_cast %126 : vector<1x1x64x96xbf16> to vector<64x96xbf16>
    %c2_147 = arith.constant 2 : index
    %c0_148 = arith.constant 0 : index
    %c0_149 = arith.constant 0 : index
    %128 = vector.load %arg2[%c2_147, %c0_148, %c0_149] : memref<5x96x256xbf16, #tpu.memory_space<vmem>>, vector<1x96x256xbf16>
    %129 = vector.shape_cast %128 : vector<1x96x256xbf16> to vector<96x256xbf16>
    %cst_150 = arith.constant dense<0.000000e+00> : vector<64x256xf32>
    %130 = tpu.matmul %127, %129, %cst_150 {dimension_numbers = #tpu.dot_dimension_numbers<[1], [0], [0], [1], [0, 0, 1, 1], [], []>} : vector<64x96xbf16>, vector<96x256xbf16>, vector<64x256xf32> -> vector<64x256xf32>
    %131 = arith.addf %125, %130 : vector<64x256xf32>
    %c0_151 = arith.constant 0 : index
    %c2_152 = arith.constant 2 : index
    %c1_153 = arith.constant 1 : index
    %c0_154 = arith.constant 0 : index
    %132 = vector.load %arg1[%c0_151, %c2_152, %c1_153, %c0_154] : memref<1x4x72x96xbf16, #tpu.memory_space<vmem>>, vector<1x1x64x96xbf16>
    %133 = vector.shape_cast %132 : vector<1x1x64x96xbf16> to vector<64x96xbf16>
    %c3_155 = arith.constant 3 : index
    %c0_156 = arith.constant 0 : index
    %c0_157 = arith.constant 0 : index
    %134 = vector.load %arg2[%c3_155, %c0_156, %c0_157] : memref<5x96x256xbf16, #tpu.memory_space<vmem>>, vector<1x96x256xbf16>
    %135 = vector.shape_cast %134 : vector<1x96x256xbf16> to vector<96x256xbf16>
    %cst_158 = arith.constant dense<0.000000e+00> : vector<64x256xf32>
    %136 = tpu.matmul %133, %135, %cst_158 {dimension_numbers = #tpu.dot_dimension_numbers<[1], [0], [0], [1], [0, 0, 1, 1], [], []>} : vector<64x96xbf16>, vector<96x256xbf16>, vector<64x256xf32> -> vector<64x256xf32>
    %137 = arith.addf %131, %136 : vector<64x256xf32>
    %c0_159 = arith.constant 0 : index
    %c3_160 = arith.constant 3 : index
    %c1_161 = arith.constant 1 : index
    %c0_162 = arith.constant 0 : index
    %138 = vector.load %arg1[%c0_159, %c3_160, %c1_161, %c0_162] : memref<1x4x72x96xbf16, #tpu.memory_space<vmem>>, vector<1x1x64x96xbf16>
    %139 = vector.shape_cast %138 : vector<1x1x64x96xbf16> to vector<64x96xbf16>
    %c4_163 = arith.constant 4 : index
    %c0_164 = arith.constant 0 : index
    %c0_165 = arith.constant 0 : index
    %140 = vector.load %arg2[%c4_163, %c0_164, %c0_165] : memref<5x96x256xbf16, #tpu.memory_space<vmem>>, vector<1x96x256xbf16>
    %141 = vector.shape_cast %140 : vector<1x96x256xbf16> to vector<96x256xbf16>
    %cst_166 = arith.constant dense<0.000000e+00> : vector<64x256xf32>
    %142 = tpu.matmul %139, %141, %cst_166 {dimension_numbers = #tpu.dot_dimension_numbers<[1], [0], [0], [1], [0, 0, 1, 1], [], []>} : vector<64x96xbf16>, vector<96x256xbf16>, vector<64x256xf32> -> vector<64x256xf32>
    %143 = arith.addf %137, %142 : vector<64x256xf32>
    %c0_167 = arith.constant 0 : index
    %c0_168 = arith.constant 0 : index
    %144 = vector.load %arg3[%c0_167, %c0_168] : memref<1x256xf32, #tpu.memory_space<vmem>>, vector<1x256xf32>
    %145 = vector.broadcast %144 : vector<1x256xf32> to vector<64x256xf32>
    %146 = arith.addf %143, %145 : vector<64x256xf32>
    %cst_169 = arith.constant 0.000000e+00 : f32
    %147 = vector.broadcast %cst_169 : f32 to vector<64x256xf32>
    %148 = arith.maximumf %146, %147 : vector<64x256xf32>
    %149 = arith.maximumf %112, %148 : vector<64x256xf32>
    %150 = vector.extract_strided_slice %149 {offsets = [0, 0], sizes = [64, 128], strides = [1, 1]} : vector<64x256xf32> to vector<64x128xf32>
    %151 = vector.extract_strided_slice %149 {offsets = [0, 128], sizes = [64, 128], strides = [1, 1]} : vector<64x256xf32> to vector<64x128xf32>
    %152 = arith.maximumf %150, %151 : vector<64x128xf32>
    %153 = arith.truncf %152 : vector<64x128xf32> to vector<64x128xbf16>
    %cst_170 = arith.constant 0.000000e+00 : f32
    %154 = vector.broadcast %cst_170 : f32 to vector<62x256xf32>
    %155 = vector.extract_strided_slice %76 {offsets = [0, 0], sizes = [62, 128], strides = [1, 1]} : vector<64x128xbf16> to vector<62x128xbf16>
    %c0_171 = arith.constant 0 : index
    %c0_172 = arith.constant 0 : index
    %c0_173 = arith.constant 0 : index
    %156 = vector.load %arg4[%c0_171, %c0_172, %c0_173] : memref<5x128x256xbf16, #tpu.memory_space<vmem>>, vector<1x128x256xbf16>
    %157 = vector.shape_cast %156 : vector<1x128x256xbf16> to vector<128x256xbf16>
    %cst_174 = arith.constant dense<0.000000e+00> : vector<62x256xf32>
    %158 = tpu.matmul %155, %157, %cst_174 {dimension_numbers = #tpu.dot_dimension_numbers<[1], [0], [0], [1], [0, 0, 1, 1], [], []>} : vector<62x128xbf16>, vector<128x256xbf16>, vector<62x256xf32> -> vector<62x256xf32>
    %159 = arith.addf %154, %158 : vector<62x256xf32>
    %160 = vector.extract_strided_slice %153 {offsets = [0, 0], sizes = [62, 128], strides = [1, 1]} : vector<64x128xbf16> to vector<62x128xbf16>
    %c1_175 = arith.constant 1 : index
    %c0_176 = arith.constant 0 : index
    %c0_177 = arith.constant 0 : index
    %161 = vector.load %arg4[%c1_175, %c0_176, %c0_177] : memref<5x128x256xbf16, #tpu.memory_space<vmem>>, vector<1x128x256xbf16>
    %162 = vector.shape_cast %161 : vector<1x128x256xbf16> to vector<128x256xbf16>
    %cst_178 = arith.constant dense<0.000000e+00> : vector<62x256xf32>
    %163 = tpu.matmul %160, %162, %cst_178 {dimension_numbers = #tpu.dot_dimension_numbers<[1], [0], [0], [1], [0, 0, 1, 1], [], []>} : vector<62x128xbf16>, vector<128x256xbf16>, vector<62x256xf32> -> vector<62x256xf32>
    %164 = arith.addf %159, %163 : vector<62x256xf32>
    %165 = vector.extract_strided_slice %76 {offsets = [1, 0], sizes = [62, 128], strides = [1, 1]} : vector<64x128xbf16> to vector<62x128xbf16>
    %c2_179 = arith.constant 2 : index
    %c0_180 = arith.constant 0 : index
    %c0_181 = arith.constant 0 : index
    %166 = vector.load %arg4[%c2_179, %c0_180, %c0_181] : memref<5x128x256xbf16, #tpu.memory_space<vmem>>, vector<1x128x256xbf16>
    %167 = vector.shape_cast %166 : vector<1x128x256xbf16> to vector<128x256xbf16>
    %cst_182 = arith.constant dense<0.000000e+00> : vector<62x256xf32>
    %168 = tpu.matmul %165, %167, %cst_182 {dimension_numbers = #tpu.dot_dimension_numbers<[1], [0], [0], [1], [0, 0, 1, 1], [], []>} : vector<62x128xbf16>, vector<128x256xbf16>, vector<62x256xf32> -> vector<62x256xf32>
    %169 = arith.addf %164, %168 : vector<62x256xf32>
    %170 = vector.extract_strided_slice %153 {offsets = [1, 0], sizes = [62, 128], strides = [1, 1]} : vector<64x128xbf16> to vector<62x128xbf16>
    %c3_183 = arith.constant 3 : index
    %c0_184 = arith.constant 0 : index
    %c0_185 = arith.constant 0 : index
    %171 = vector.load %arg4[%c3_183, %c0_184, %c0_185] : memref<5x128x256xbf16, #tpu.memory_space<vmem>>, vector<1x128x256xbf16>
    %172 = vector.shape_cast %171 : vector<1x128x256xbf16> to vector<128x256xbf16>
    %cst_186 = arith.constant dense<0.000000e+00> : vector<62x256xf32>
    %173 = tpu.matmul %170, %172, %cst_186 {dimension_numbers = #tpu.dot_dimension_numbers<[1], [0], [0], [1], [0, 0, 1, 1], [], []>} : vector<62x128xbf16>, vector<128x256xbf16>, vector<62x256xf32> -> vector<62x256xf32>
    %174 = arith.addf %169, %173 : vector<62x256xf32>
    %175 = vector.extract_strided_slice %76 {offsets = [2, 0], sizes = [62, 128], strides = [1, 1]} : vector<64x128xbf16> to vector<62x128xbf16>
    %c4_187 = arith.constant 4 : index
    %c0_188 = arith.constant 0 : index
    %c0_189 = arith.constant 0 : index
    %176 = vector.load %arg4[%c4_187, %c0_188, %c0_189] : memref<5x128x256xbf16, #tpu.memory_space<vmem>>, vector<1x128x256xbf16>
    %177 = vector.shape_cast %176 : vector<1x128x256xbf16> to vector<128x256xbf16>
    %cst_190 = arith.constant dense<0.000000e+00> : vector<62x256xf32>
    %178 = tpu.matmul %175, %177, %cst_190 {dimension_numbers = #tpu.dot_dimension_numbers<[1], [0], [0], [1], [0, 0, 1, 1], [], []>} : vector<62x128xbf16>, vector<128x256xbf16>, vector<62x256xf32> -> vector<62x256xf32>
    %179 = arith.addf %174, %178 : vector<62x256xf32>
    %c0_191 = arith.constant 0 : index
    %c0_192 = arith.constant 0 : index
    %180 = vector.load %arg5[%c0_191, %c0_192] : memref<1x256xf32, #tpu.memory_space<vmem>>, vector<1x256xf32>
    %181 = vector.broadcast %180 : vector<1x256xf32> to vector<62x256xf32>
    %182 = arith.addf %179, %181 : vector<62x256xf32>
    %cst_193 = arith.constant 0.000000e+00 : f32
    %183 = vector.broadcast %cst_193 : f32 to vector<62x256xf32>
    %184 = arith.maximumf %182, %183 : vector<62x256xf32>
    %cst_194 = arith.constant 0.000000e+00 : f32
    %185 = vector.broadcast %cst_194 : f32 to vector<62x256xf32>
    %186 = vector.extract_strided_slice %153 {offsets = [0, 0], sizes = [62, 128], strides = [1, 1]} : vector<64x128xbf16> to vector<62x128xbf16>
    %c0_195 = arith.constant 0 : index
    %c0_196 = arith.constant 0 : index
    %c0_197 = arith.constant 0 : index
    %187 = vector.load %arg4[%c0_195, %c0_196, %c0_197] : memref<5x128x256xbf16, #tpu.memory_space<vmem>>, vector<1x128x256xbf16>
    %188 = vector.shape_cast %187 : vector<1x128x256xbf16> to vector<128x256xbf16>
    %cst_198 = arith.constant dense<0.000000e+00> : vector<62x256xf32>
    %189 = tpu.matmul %186, %188, %cst_198 {dimension_numbers = #tpu.dot_dimension_numbers<[1], [0], [0], [1], [0, 0, 1, 1], [], []>} : vector<62x128xbf16>, vector<128x256xbf16>, vector<62x256xf32> -> vector<62x256xf32>
    %190 = arith.addf %185, %189 : vector<62x256xf32>
    %191 = vector.extract_strided_slice %76 {offsets = [1, 0], sizes = [62, 128], strides = [1, 1]} : vector<64x128xbf16> to vector<62x128xbf16>
    %c1_199 = arith.constant 1 : index
    %c0_200 = arith.constant 0 : index
    %c0_201 = arith.constant 0 : index
    %192 = vector.load %arg4[%c1_199, %c0_200, %c0_201] : memref<5x128x256xbf16, #tpu.memory_space<vmem>>, vector<1x128x256xbf16>
    %193 = vector.shape_cast %192 : vector<1x128x256xbf16> to vector<128x256xbf16>
    %cst_202 = arith.constant dense<0.000000e+00> : vector<62x256xf32>
    %194 = tpu.matmul %191, %193, %cst_202 {dimension_numbers = #tpu.dot_dimension_numbers<[1], [0], [0], [1], [0, 0, 1, 1], [], []>} : vector<62x128xbf16>, vector<128x256xbf16>, vector<62x256xf32> -> vector<62x256xf32>
    %195 = arith.addf %190, %194 : vector<62x256xf32>
    %196 = vector.extract_strided_slice %153 {offsets = [1, 0], sizes = [62, 128], strides = [1, 1]} : vector<64x128xbf16> to vector<62x128xbf16>
    %c2_203 = arith.constant 2 : index
    %c0_204 = arith.constant 0 : index
    %c0_205 = arith.constant 0 : index
    %197 = vector.load %arg4[%c2_203, %c0_204, %c0_205] : memref<5x128x256xbf16, #tpu.memory_space<vmem>>, vector<1x128x256xbf16>
    %198 = vector.shape_cast %197 : vector<1x128x256xbf16> to vector<128x256xbf16>
    %cst_206 = arith.constant dense<0.000000e+00> : vector<62x256xf32>
    %199 = tpu.matmul %196, %198, %cst_206 {dimension_numbers = #tpu.dot_dimension_numbers<[1], [0], [0], [1], [0, 0, 1, 1], [], []>} : vector<62x128xbf16>, vector<128x256xbf16>, vector<62x256xf32> -> vector<62x256xf32>
    %200 = arith.addf %195, %199 : vector<62x256xf32>
    %201 = vector.extract_strided_slice %76 {offsets = [2, 0], sizes = [62, 128], strides = [1, 1]} : vector<64x128xbf16> to vector<62x128xbf16>
    %c3_207 = arith.constant 3 : index
    %c0_208 = arith.constant 0 : index
    %c0_209 = arith.constant 0 : index
    %202 = vector.load %arg4[%c3_207, %c0_208, %c0_209] : memref<5x128x256xbf16, #tpu.memory_space<vmem>>, vector<1x128x256xbf16>
    %203 = vector.shape_cast %202 : vector<1x128x256xbf16> to vector<128x256xbf16>
    %cst_210 = arith.constant dense<0.000000e+00> : vector<62x256xf32>
    %204 = tpu.matmul %201, %203, %cst_210 {dimension_numbers = #tpu.dot_dimension_numbers<[1], [0], [0], [1], [0, 0, 1, 1], [], []>} : vector<62x128xbf16>, vector<128x256xbf16>, vector<62x256xf32> -> vector<62x256xf32>
    %205 = arith.addf %200, %204 : vector<62x256xf32>
    %206 = vector.extract_strided_slice %153 {offsets = [2, 0], sizes = [62, 128], strides = [1, 1]} : vector<64x128xbf16> to vector<62x128xbf16>
    %c4_211 = arith.constant 4 : index
    %c0_212 = arith.constant 0 : index
    %c0_213 = arith.constant 0 : index
    %207 = vector.load %arg4[%c4_211, %c0_212, %c0_213] : memref<5x128x256xbf16, #tpu.memory_space<vmem>>, vector<1x128x256xbf16>
    %208 = vector.shape_cast %207 : vector<1x128x256xbf16> to vector<128x256xbf16>
    %cst_214 = arith.constant dense<0.000000e+00> : vector<62x256xf32>
    %209 = tpu.matmul %206, %208, %cst_214 {dimension_numbers = #tpu.dot_dimension_numbers<[1], [0], [0], [1], [0, 0, 1, 1], [], []>} : vector<62x128xbf16>, vector<128x256xbf16>, vector<62x256xf32> -> vector<62x256xf32>
    %210 = arith.addf %205, %209 : vector<62x256xf32>
    %c0_215 = arith.constant 0 : index
    %c0_216 = arith.constant 0 : index
    %211 = vector.load %arg5[%c0_215, %c0_216] : memref<1x256xf32, #tpu.memory_space<vmem>>, vector<1x256xf32>
    %212 = vector.broadcast %211 : vector<1x256xf32> to vector<62x256xf32>
    %213 = arith.addf %210, %212 : vector<62x256xf32>
    %cst_217 = arith.constant 0.000000e+00 : f32
    %214 = vector.broadcast %cst_217 : f32 to vector<62x256xf32>
    %215 = arith.maximumf %213, %214 : vector<62x256xf32>
    %216 = arith.maximumf %184, %215 : vector<62x256xf32>
    %217 = vector.extract_strided_slice %216 {offsets = [0, 0], sizes = [62, 128], strides = [1, 1]} : vector<62x256xf32> to vector<62x128xf32>
    %218 = vector.extract_strided_slice %216 {offsets = [0, 128], sizes = [62, 128], strides = [1, 1]} : vector<62x256xf32> to vector<62x128xf32>
    %219 = arith.maximumf %217, %218 : vector<62x128xf32>
    %220 = arith.truncf %219 : vector<62x128xf32> to vector<62x128xbf16>
    %cst_218 = arith.constant 0.000000e+00 : f32
    %221 = vector.broadcast %cst_218 : f32 to vector<58x128xf32>
    %222 = vector.extract_strided_slice %220 {offsets = [0, 0], sizes = [58, 128], strides = [1, 1]} : vector<62x128xbf16> to vector<58x128xbf16>
    %c0_219 = arith.constant 0 : index
    %c0_220 = arith.constant 0 : index
    %223 = vector.load %arg6[%c0_219, %c0_220] : memref<640x128xbf16, #tpu.memory_space<vmem>>, vector<128x128xbf16>
    %cst_221 = arith.constant dense<0.000000e+00> : vector<58x128xf32>
    %224 = tpu.matmul %222, %223, %cst_221 {dimension_numbers = #tpu.dot_dimension_numbers<[1], [0], [0], [1], [0, 0, 1, 1], [], []>} : vector<58x128xbf16>, vector<128x128xbf16>, vector<58x128xf32> -> vector<58x128xf32>
    %225 = arith.addf %221, %224 : vector<58x128xf32>
    %226 = vector.extract_strided_slice %220 {offsets = [1, 0], sizes = [58, 128], strides = [1, 1]} : vector<62x128xbf16> to vector<58x128xbf16>
    %c128 = arith.constant 128 : index
    %c0_222 = arith.constant 0 : index
    %227 = vector.load %arg6[%c128, %c0_222] : memref<640x128xbf16, #tpu.memory_space<vmem>>, vector<128x128xbf16>
    %cst_223 = arith.constant dense<0.000000e+00> : vector<58x128xf32>
    %228 = tpu.matmul %226, %227, %cst_223 {dimension_numbers = #tpu.dot_dimension_numbers<[1], [0], [0], [1], [0, 0, 1, 1], [], []>} : vector<58x128xbf16>, vector<128x128xbf16>, vector<58x128xf32> -> vector<58x128xf32>
    %229 = arith.addf %225, %228 : vector<58x128xf32>
    %230 = vector.extract_strided_slice %220 {offsets = [2, 0], sizes = [58, 128], strides = [1, 1]} : vector<62x128xbf16> to vector<58x128xbf16>
    %c256 = arith.constant 256 : index
    %c0_224 = arith.constant 0 : index
    %231 = vector.load %arg6[%c256, %c0_224] : memref<640x128xbf16, #tpu.memory_space<vmem>>, vector<128x128xbf16>
    %cst_225 = arith.constant dense<0.000000e+00> : vector<58x128xf32>
    %232 = tpu.matmul %230, %231, %cst_225 {dimension_numbers = #tpu.dot_dimension_numbers<[1], [0], [0], [1], [0, 0, 1, 1], [], []>} : vector<58x128xbf16>, vector<128x128xbf16>, vector<58x128xf32> -> vector<58x128xf32>
    %233 = arith.addf %229, %232 : vector<58x128xf32>
    %234 = vector.extract_strided_slice %220 {offsets = [3, 0], sizes = [58, 128], strides = [1, 1]} : vector<62x128xbf16> to vector<58x128xbf16>
    %c384 = arith.constant 384 : index
    %c0_226 = arith.constant 0 : index
    %235 = vector.load %arg6[%c384, %c0_226] : memref<640x128xbf16, #tpu.memory_space<vmem>>, vector<128x128xbf16>
    %cst_227 = arith.constant dense<0.000000e+00> : vector<58x128xf32>
    %236 = tpu.matmul %234, %235, %cst_227 {dimension_numbers = #tpu.dot_dimension_numbers<[1], [0], [0], [1], [0, 0, 1, 1], [], []>} : vector<58x128xbf16>, vector<128x128xbf16>, vector<58x128xf32> -> vector<58x128xf32>
    %237 = arith.addf %233, %236 : vector<58x128xf32>
    %238 = vector.extract_strided_slice %220 {offsets = [4, 0], sizes = [58, 128], strides = [1, 1]} : vector<62x128xbf16> to vector<58x128xbf16>
    %c512 = arith.constant 512 : index
    %c0_228 = arith.constant 0 : index
    %239 = vector.load %arg6[%c512, %c0_228] : memref<640x128xbf16, #tpu.memory_space<vmem>>, vector<128x128xbf16>
    %cst_229 = arith.constant dense<0.000000e+00> : vector<58x128xf32>
    %240 = tpu.matmul %238, %239, %cst_229 {dimension_numbers = #tpu.dot_dimension_numbers<[1], [0], [0], [1], [0, 0, 1, 1], [], []>} : vector<58x128xbf16>, vector<128x128xbf16>, vector<58x128xf32> -> vector<58x128xf32>
    %241 = arith.addf %237, %240 : vector<58x128xf32>
    %c0_230 = arith.constant 0 : index
    %c0_231 = arith.constant 0 : index
    %242 = vector.load %arg7[%c0_230, %c0_231] : memref<1x128xf32, #tpu.memory_space<vmem>>, vector<1x128xf32>
    %243 = vector.broadcast %242 : vector<1x128xf32> to vector<58x128xf32>
    %244 = arith.addf %241, %243 : vector<58x128xf32>
    %cst_232 = arith.constant 0.000000e+00 : f32
    %245 = vector.broadcast %cst_232 : f32 to vector<58x128xf32>
    %246 = arith.maximumf %244, %245 : vector<58x128xf32>
    %c0_233 = arith.constant 0 : index
    %c0_234 = arith.constant 0 : index
    %247 = vector.load %arg13[%c0_233, %c0_234] : memref<64x128xf32, #tpu.memory_space<vmem>>, vector<58x128xf32>
    tpu.vector_store %arg13[%c0_233, %c0_234], %246 {strides = array<i32>} : memref<64x128xf32, #tpu.memory_space<vmem>>, vector<58x128xf32>,
    %c0_235 = arith.constant 0 : index
    %c0_236 = arith.constant 0 : index
    %248 = tpu.strided_load %arg13[%c0_235, %c0_236] {strides = array<i32: 8, 1>} : memref<64x128xf32, #tpu.memory_space<vmem>>, vector<8x128xf32>
    %249 = arith.truncf %248 : vector<8x128xf32> to vector<8x128xbf16>
    %c0_237 = arith.constant 0 : index
    %c0_238 = arith.constant 0 : index
    %250 = vector.load %arg8[%c0_237, %c0_238] : memref<128x128xbf16, #tpu.memory_space<vmem>>, vector<128x128xbf16>
    %cst_239 = arith.constant dense<0.000000e+00> : vector<8x128xf32>
    %251 = tpu.matmul %249, %250, %cst_239 {dimension_numbers = #tpu.dot_dimension_numbers<[1], [0], [0], [1], [0, 0, 1, 1], [], []>} : vector<8x128xbf16>, vector<128x128xbf16>, vector<8x128xf32> -> vector<8x128xf32>
    %c0_240 = arith.constant 0 : index
    %c0_241 = arith.constant 0 : index
    %252 = vector.load %arg9[%c0_240, %c0_241] : memref<1x128xf32, #tpu.memory_space<vmem>>, vector<1x128xf32>
    %253 = vector.broadcast %252 : vector<1x128xf32> to vector<8x128xf32>
    %254 = arith.addf %251, %253 : vector<8x128xf32>
    %cst_242 = arith.constant 0.000000e+00 : f32
    %255 = vector.broadcast %cst_242 : f32 to vector<8x128xf32>
    %256 = arith.maximumf %254, %255 : vector<8x128xf32>
    %257 = arith.truncf %256 : vector<8x128xf32> to vector<8x128xbf16>
    %c0_243 = arith.constant 0 : index
    %c0_244 = arith.constant 0 : index
    %258 = vector.load %arg10[%c0_243, %c0_244] : memref<128x10xbf16, #tpu.memory_space<vmem>>, vector<128x10xbf16>
    %cst_245 = arith.constant dense<0.000000e+00> : vector<8x10xf32>
    %259 = tpu.matmul %257, %258, %cst_245 {dimension_numbers = #tpu.dot_dimension_numbers<[1], [0], [0], [1], [0, 0, 1, 1], [], []>} : vector<8x128xbf16>, vector<128x10xbf16>, vector<8x10xf32> -> vector<8x10xf32>
    %c0_246 = arith.constant 0 : index
    %c0_247 = arith.constant 0 : index
    %260 = vector.load %arg11[%c0_246, %c0_247] : memref<1x10xf32, #tpu.memory_space<vmem>>, vector<1x10xf32>
    %261 = vector.broadcast %260 : vector<1x10xf32> to vector<8x10xf32>
    %262 = arith.addf %259, %261 : vector<8x10xf32>
    %c0_248 = arith.constant 0 : index
    %c0_249 = arith.constant 0 : index
    %263 = vector.load %arg12[%c0_248, %c0_249] : memref<8x10xf32, #tpu.memory_space<vmem>>, vector<8x10xf32>
    tpu.vector_store %arg12[%c0_248, %c0_249], %262 {strides = array<i32>} : memref<8x10xf32, #tpu.memory_space<vmem>>, vector<8x10xf32>,
    return
  }
  func.func @transform_0(%arg0: i32) -> (i32, i32, i32, i32) {
    %c0_i32 = arith.constant 0 : i32
    %c0_i32_0 = arith.constant 0 : i32
    %c0_i32_1 = arith.constant 0 : i32
    %c0_i32_2 = arith.constant 0 : i32
    return %arg0, %c0_i32, %c0_i32_0, %c0_i32_1 : i32, i32, i32, i32
  }
  func.func @transform_1(%arg0: i32) -> (i32, i32, i32) {
    %c0_i32 = arith.constant 0 : i32
    %c0_i32_0 = arith.constant 0 : i32
    %c0_i32_1 = arith.constant 0 : i32
    %c0_i32_2 = arith.constant 0 : i32
    return %c0_i32, %c0_i32_0, %c0_i32_1 : i32, i32, i32
  }
  func.func @transform_2(%arg0: i32) -> (i32, i32) {
    %c0_i32 = arith.constant 0 : i32
    %c0_i32_0 = arith.constant 0 : i32
    %c0_i32_1 = arith.constant 0 : i32
    return %c0_i32, %c0_i32_0 : i32, i32
  }
  func.func @transform_3(%arg0: i32) -> (i32, i32, i32) {
    %c0_i32 = arith.constant 0 : i32
    %c0_i32_0 = arith.constant 0 : i32
    %c0_i32_1 = arith.constant 0 : i32
    %c0_i32_2 = arith.constant 0 : i32
    return %c0_i32, %c0_i32_0, %c0_i32_1 : i32, i32, i32
  }
  func.func @transform_4(%arg0: i32) -> (i32, i32) {
    %c0_i32 = arith.constant 0 : i32
    %c0_i32_0 = arith.constant 0 : i32
    %c0_i32_1 = arith.constant 0 : i32
    return %c0_i32, %c0_i32_0 : i32, i32
  }
  func.func @transform_5(%arg0: i32) -> (i32, i32) {
    %c0_i32 = arith.constant 0 : i32
    %c0_i32_0 = arith.constant 0 : i32
    %c0_i32_1 = arith.constant 0 : i32
    return %c0_i32, %c0_i32_0 : i32, i32
  }
  func.func @transform_6(%arg0: i32) -> (i32, i32) {
    %c0_i32 = arith.constant 0 : i32
    %c0_i32_0 = arith.constant 0 : i32
    %c0_i32_1 = arith.constant 0 : i32
    return %c0_i32, %c0_i32_0 : i32, i32
  }
  func.func @transform_7(%arg0: i32) -> (i32, i32) {
    %c0_i32 = arith.constant 0 : i32
    %c0_i32_0 = arith.constant 0 : i32
    %c0_i32_1 = arith.constant 0 : i32
    return %c0_i32, %c0_i32_0 : i32, i32
  }
  func.func @transform_8(%arg0: i32) -> (i32, i32) {
    %c0_i32 = arith.constant 0 : i32
    %c0_i32_0 = arith.constant 0 : i32
    %c0_i32_1 = arith.constant 0 : i32
    return %c0_i32, %c0_i32_0 : i32, i32
  }
  func.func @transform_9(%arg0: i32) -> (i32, i32) {
    %c0_i32 = arith.constant 0 : i32
    %c0_i32_0 = arith.constant 0 : i32
    %c0_i32_1 = arith.constant 0 : i32
    return %c0_i32, %c0_i32_0 : i32, i32
  }
  func.func @transform_10(%arg0: i32) -> (i32, i32) {
    %c0_i32 = arith.constant 0 : i32
    %c0_i32_0 = arith.constant 0 : i32
    %c0_i32_1 = arith.constant 0 : i32
    return %c0_i32, %c0_i32_0 : i32, i32
  }
  func.func @transform_11(%arg0: i32) -> (i32, i32) {
    %c0_i32 = arith.constant 0 : i32
    %c0_i32_0 = arith.constant 0 : i32
    return %arg0, %c0_i32 : i32, i32
  }
}

</mosaic_0001>

<llo_original>
// kernel: lenet32_forward.1
$region0: #{lenet32_forward.1}
  #allocation0 [shape = 'u32[]', space=smem, size = 0x4, offset = 0x4, fixed_abs, tag = 'smem constant byte address 0x4 - core index']
  #allocation1 [shape = 'u32[144,128]{1,0:T(1,128)}', space=vmem, size = 0x12000, scoped, tag = 'internal scratch']
  #allocation2 [shape = 'f32[64,128]{1,0:T(8,128)}', space=vmem, size = 0x8000, scoped, tag = 'scratch operand']
  %s0 = inlined_call_operand.vmem [shape: bf16[1,4,72,96], index: 0, kind: input, shape index: {}]
  %s1 = inlined_call_operand.vmem [shape: bf16[5,96,256], index: 1, kind: input, shape index: {}]
  %s2 = inlined_call_operand.vmem [shape: f32[1,256], index: 2, kind: input, shape index: {}]
  %s3 = inlined_call_operand.vmem [shape: bf16[5,128,256], index: 3, kind: input, shape index: {}]
  %s4 = inlined_call_operand.vmem [shape: f32[1,256], index: 4, kind: input, shape index: {}]
  %s5 = inlined_call_operand.vmem [shape: bf16[640,128], index: 5, kind: input, shape index: {}]
  %s6 = inlined_call_operand.vmem [shape: f32[1,128], index: 6, kind: input, shape index: {}]
  %s7 = inlined_call_operand.vmem [shape: bf16[128,128], index: 7, kind: input, shape index: {}]
  %s8 = inlined_call_operand.vmem [shape: f32[1,128], index: 8, kind: input, shape index: {}]
  %s9 = inlined_call_operand.vmem [shape: bf16[128,10], index: 9, kind: input, shape index: {}]
  %s10 = inlined_call_operand.vmem [shape: f32[1,10], index: 10, kind: input, shape index: {}]
  %s11 = inlined_call_operand.vmem [shape: f32[8,10], index: 11, kind: output, shape index: {}]
  %s12 = sld [smem:[#allocation0]]
  $region54: #{lenet32_forward.1} parent=0
    _
  %s14 = ssub.s32 1, %s12
  %s15 = scalar_select 0, %s14, %s12
  // Predicated region
  $region2: #{lenet32_forward.1} parent=0 // pred_check
    _
  $region3: #{lenet32_forward.1} parent=0 // pred_check_branch
    %17 = sbr.rel (0) target = $region5
  $region4: #{lenet32_forward.1} parent=0 // pred_region
    _
  $region5: #{lenet32_forward.1} parent=0 // pred_fallthru
    _
  // Predicated region
  $region6: #{lenet32_forward.1} parent=0 // pred_check
    _
  $region7: #{lenet32_forward.1} parent=0 // pred_check_branch
    %19 = sbr.rel (0) target = $region9
  $region8: #{lenet32_forward.1} parent=0 // pred_region
    _
  $region9: #{lenet32_forward.1} parent=0 // pred_fallthru
    _
  // Predicated region
  $region10: #{lenet32_forward.1} parent=0 // pred_check
    _
  $region11: #{lenet32_forward.1} parent=0 // pred_check_branch
    %21 = sbr.rel (0) target = $region13
  $region12: #{lenet32_forward.1} parent=0 // pred_region
    _
  $region13: #{lenet32_forward.1} parent=0 // pred_fallthru
    _
  // Predicated region
  $region14: #{lenet32_forward.1} parent=0 // pred_check
    _
  $region15: #{lenet32_forward.1} parent=0 // pred_check_branch
    %23 = sbr.rel (0) target = $region17
  $region16: #{lenet32_forward.1} parent=0 // pred_region
    _
  $region17: #{lenet32_forward.1} parent=0 // pred_fallthru
    _
  // Predicated region
  $region18: #{lenet32_forward.1} parent=0 // pred_check
    _
  $region19: #{lenet32_forward.1} parent=0 // pred_check_branch
    %25 = sbr.rel (0) target = $region21
  $region20: #{lenet32_forward.1} parent=0 // pred_region
    _
  $region21: #{lenet32_forward.1} parent=0 // pred_fallthru
    _
  // Predicated region
  $region22: #{lenet32_forward.1} parent=0 // pred_check
    _
  $region23: #{lenet32_forward.1} parent=0 // pred_check_branch
    %27 = sbr.rel (0) target = $region25
  $region24: #{lenet32_forward.1} parent=0 // pred_region
    _
  $region25: #{lenet32_forward.1} parent=0 // pred_fallthru
    _
  // Predicated region
  $region26: #{lenet32_forward.1} parent=0 // pred_check
    _
  $region27: #{lenet32_forward.1} parent=0 // pred_check_branch
    %29 = sbr.rel (0) target = $region29
  $region28: #{lenet32_forward.1} parent=0 // pred_region
    _
  $region29: #{lenet32_forward.1} parent=0 // pred_fallthru
    _
  // Predicated region
  $region30: #{lenet32_forward.1} parent=0 // pred_check
    _
  $region31: #{lenet32_forward.1} parent=0 // pred_check_branch
    %31 = sbr.rel (0) target = $region33
  $region32: #{lenet32_forward.1} parent=0 // pred_region
    _
  $region33: #{lenet32_forward.1} parent=0 // pred_fallthru
    _
  // Predicated region
  $region34: #{lenet32_forward.1} parent=0 // pred_check
    _
  $region35: #{lenet32_forward.1} parent=0 // pred_check_branch
    %33 = sbr.rel (0) target = $region37
  $region36: #{lenet32_forward.1} parent=0 // pred_region
    _
  $region37: #{lenet32_forward.1} parent=0 // pred_fallthru
    _
  // Predicated region
  $region38: #{lenet32_forward.1} parent=0 // pred_check
    _
  $region39: #{lenet32_forward.1} parent=0 // pred_check_branch
    %35 = sbr.rel (0) target = $region41
  $region40: #{lenet32_forward.1} parent=0 // pred_region
    _
  $region41: #{lenet32_forward.1} parent=0 // pred_fallthru
    _
  // Predicated region
  $region42: #{lenet32_forward.1} parent=0 // pred_check
    _
  $region43: #{lenet32_forward.1} parent=0 // pred_check_branch
    %37 = sbr.rel (0) target = $region45
  $region44: #{lenet32_forward.1} parent=0 // pred_region
    _
  $region45: #{lenet32_forward.1} parent=0 // pred_fallthru
    _
  %v39 = vld [vmem:[%s0] sm:$0xf]
  %v40 = vld [vmem:[%s0 + $0x4] sm:$0xf]
  %v41 = vld [vmem:[%s0 + $0x8] sm:$0xf]
  %v42 = vld [vmem:[%s0 + $0xc] sm:$0xf]
  %v43 = vld [vmem:[%s0 + $0x10] sm:$0xf]
  %v44 = vld [vmem:[%s0 + $0x14] sm:$0xf]
  %v45 = vld [vmem:[%s0 + $0x18] sm:$0xf]
  %v46 = vld [vmem:[%s0 + $0x1c] sm:$0xf]
  %v47 = vld [vmem:[%s1] sm:$0xff]
  %v48 = vld [vmem:[%s1 + $0x8] sm:$0xff]
  %v49 = vld [vmem:[%s1 + $0x10] sm:$0xff]
  %v50 = vld [vmem:[%s1 + $0x18] sm:$0xff]
  %v51 = vld [vmem:[%s1 + $0x20] sm:$0xff]
  %v52 = vld [vmem:[%s1 + $0x28] sm:$0xff]
  %v53 = vld [vmem:[%s1 + $0x30] sm:$0xff]
  %v54 = vld [vmem:[%s1 + $0x38] sm:$0xff]
  %v55 = vld [vmem:[%s1 + $0x40] sm:$0xff]
  %v56 = vld [vmem:[%s1 + $0x48] sm:$0xff]
  %v57 = vld [vmem:[%s1 + $0x50] sm:$0xff]
  %v58 = vld [vmem:[%s1 + $0x58] sm:$0xff]
  %s59 = scalar_lea.vmem %s0, 36
  %v60 = vld [vmem:[%s59] sm:$0xf]
  %v61 = vld [vmem:[%s59 + $0x4] sm:$0xf]
  %v62 = vld [vmem:[%s59 + $0x8] sm:$0xf]
  %v63 = vld [vmem:[%s59 + $0xc] sm:$0xf]
  %v64 = vld [vmem:[%s59 + $0x10] sm:$0xf]
  %v65 = vld [vmem:[%s59 + $0x14] sm:$0xf]
  %v66 = vld [vmem:[%s59 + $0x18] sm:$0xf]
  %v67 = vld [vmem:[%s59 + $0x1c] sm:$0xf]
  %s68 = scalar_lea.vmem %s1, 96
  %v69 = vld [vmem:[%s68] sm:$0xff]
  %v70 = vld [vmem:[%s68 + $0x8] sm:$0xff]
  %v71 = vld [vmem:[%s68 + $0x10] sm:$0xff]
  %v72 = vld [vmem:[%s68 + $0x18] sm:$0xff]
  %v73 = vld [vmem:[%s68 + $0x20] sm:$0xff]
  %v74 = vld [vmem:[%s68 + $0x28] sm:$0xff]
  %v75 = vld [vmem:[%s68 + $0x30] sm:$0xff]
  %v76 = vld [vmem:[%s68 + $0x38] sm:$0xff]
  %v77 = vld [vmem:[%s68 + $0x40] sm:$0xff]
  %v78 = vld [vmem:[%s68 + $0x48] sm:$0xff]
  %v79 = vld [vmem:[%s68 + $0x50] sm:$0xff]
  %v80 = vld [vmem:[%s68 + $0x58] sm:$0xff]
  %v89 = vunpack.c.l.b16 %v60
  %v90 = vunpack.c.l.b16 %v61
  %v91 = vunpack.c.l.b16 %v62
  %v92 = vunpack.c.l.b16 %v63
  %v93 = vunpack.c.l.b16 %v64
  %v94 = vunpack.c.l.b16 %v65
  %v95 = vunpack.c.l.b16 %v66
  %v96 = vunpack.c.l.b16 %v67
  %v97 = vpack.c.b16 %v90, %v89
  %v98 = vpack.c.b16 %v92, %v91
  %v99 = vpack.c.b16 %v94, %v93
  %v100 = vpack.c.b16 %v96, %v95
  %v113 = vunpack.c.l.b16 %v69
  %v114 = vunpack.c.h.b16 %v69
  %v115 = vunpack.c.l.b16 %v70
  %v116 = vunpack.c.h.b16 %v70
  %v117 = vunpack.c.l.b16 %v71
  %v118 = vunpack.c.h.b16 %v71
  %v119 = vunpack.c.l.b16 %v72
  %v120 = vunpack.c.h.b16 %v72
  %v121 = vunpack.c.l.b16 %v73
  %v122 = vunpack.c.h.b16 %v73
  %v123 = vunpack.c.l.b16 %v74
  %v124 = vunpack.c.h.b16 %v74
  %v125 = vunpack.c.l.b16 %v75
  %v126 = vunpack.c.h.b16 %v75
  %v127 = vunpack.c.l.b16 %v76
  %v128 = vunpack.c.h.b16 %v76
  %v129 = vunpack.c.l.b16 %v77
  %v130 = vunpack.c.h.b16 %v77
  %v131 = vunpack.c.l.b16 %v78
  %v132 = vunpack.c.h.b16 %v78
  %v133 = vunpack.c.l.b16 %v79
  %v134 = vunpack.c.h.b16 %v79
  %v135 = vunpack.c.l.b16 %v80
  %v136 = vunpack.c.h.b16 %v80
  %v137 = vpack.c.b16 %v115, %v113
  %v138 = vpack.c.b16 %v116, %v114
  %v139 = vpack.c.b16 %v119, %v117
  %v140 = vpack.c.b16 %v120, %v118
  %v141 = vpack.c.b16 %v123, %v121
  %v142 = vpack.c.b16 %v124, %v122
  %v143 = vpack.c.b16 %v127, %v125
  %v144 = vpack.c.b16 %v128, %v126
  %v145 = vpack.c.b16 %v131, %v129
  %v146 = vpack.c.b16 %v132, %v130
  %v147 = vpack.c.b16 %v135, %v133
  %v148 = vpack.c.b16 %v136, %v134
  %vm161 = vcmask 785408
  %v163 = vsel %vm161, %v97, 0
  %v166 = vsel %vm161, %v98, 0
  %v169 = vsel %vm161, %v99, 0
  %v172 = vsel %vm161, %v100, 0
  %174 = vmatprep.subr.bf16.mxu0 %v138
  %175 = vmatpush1.bf16.msra.mxu0 %v137
  %176 = vmatprep.subr.bf16.mxu0 %v140
  %177 = vmatpush1.bf16.msra.mxu0 %v139
  %178 = vmatprep.subr.bf16.mxu0 %v142
  %179 = vmatpush1.bf16.msra.mxu0 %v141
  %180 = vmatprep.subr.bf16.mxu0 %v144
  %181 = vmatpush1.bf16.msra.mxu0 %v143
  %182 = vmatprep.subr.bf16.mxu0 %v146
  %183 = vmatpush1.bf16.msra.mxu0 %v145
  %184 = vmatprep.subr.bf16.mxu0 %v148
  %185 = vmatpush1.bf16.msra.mxu0 %v147
  %186 = vmatprep.subr.bf16.mxu0 0
  %187 = vmatpush1.bf16.msra.mxu0 0
  %188 = vmatprep.subr.bf16.mxu0 0
  %189 = vmatpush1.bf16.msra.mxu0 0
  %190 = vmatprep.subr.bf16.mxu0 0
  %191 = vmatpush1.bf16.msra.mxu0 0
  %192 = vmatprep.subr.bf16.mxu0 0
  %193 = vmatpush1.bf16.msra.mxu0 0
  %194 = vmatprep.subr.bf16.mxu0 0
  %195 = vmatpush1.bf16.msra.mxu0 0
  %196 = vmatprep.subr.bf16.mxu0 0
  %197 = vmatpush1.bf16.msra.mxu0 0
  %198 = vmatprep.subr.bf16.mxu0 0
  %199 = vmatpush1.bf16.msra.mxu0 0
  %200 = vmatprep.subr.bf16.mxu0 0
  %201 = vmatpush1.bf16.msra.mxu0 0
  %202 = vmatprep.subr.bf16.mxu0 0
  %203 = vmatpush1.bf16.msra.mxu0 0
  %204 = vmatprep.subr.bf16.mxu0 0
  %205 = vmatpush1.bf16.msra.mxu0 0
  %206 = vmatprep.mubr.bf16.mxu0 0
  %207 = vmatmul.mubr.bf16.gmra.mrb[0].mxu0 %v163
  %v208 = vpop.f32.mrb[0].mxu0
  %v209 = vadd.f32 0.0, %v208
  %v210 = vpop.f32.mrb[0].mxu0
  %v211 = vadd.f32 0.0, %v210
  %v212 = vpop.f32.mrb[0].mxu0
  %v213 = vadd.f32 0.0, %v212
  %v214 = vpop.f32.mrb[0].mxu0
  %v215 = vadd.f32 0.0, %v214
  %216 = vmatprep.mubr.bf16.mxu0 0
  %217 = vmatmul.mubr.bf16.gmra.mrb[0].mxu0 %v166
  %v218 = vpop.f32.mrb[0].mxu0
  %v219 = vadd.f32 0.0, %v218
  %v220 = vpop.f32.mrb[0].mxu0
  %v221 = vadd.f32 0.0, %v220
  %v222 = vpop.f32.mrb[0].mxu0
  %v223 = vadd.f32 0.0, %v222
  %v224 = vpop.f32.mrb[0].mxu0
  %v225 = vadd.f32 0.0, %v224
  %226 = vmatprep.mubr.bf16.mxu0 0
  %227 = vmatmul.mubr.bf16.gmra.mrb[0].mxu0 %v169
  %v228 = vpop.f32.mrb[0].mxu0
  %v229 = vadd.f32 0.0, %v228
  %v230 = vpop.f32.mrb[0].mxu0
  %v231 = vadd.f32 0.0, %v230
  %v232 = vpop.f32.mrb[0].mxu0
  %v233 = vadd.f32 0.0, %v232
  %v234 = vpop.f32.mrb[0].mxu0
  %v235 = vadd.f32 0.0, %v234
  %236 = vmatprep.mubr.bf16.mxu0 0
  %237 = vmatmul.mubr.bf16.gmra.mrb[0].mxu0 %v172
  %v238 = vpop.f32.mrb[0].mxu0
  %v239 = vadd.f32 0.0, %v238
  %v240 = vpop.f32.mrb[0].mxu0
  %v241 = vadd.f32 0.0, %v240
  %v242 = vpop.f32.mrb[0].mxu0
  %v243 = vadd.f32 0.0, %v242
  %v244 = vpop.f32.mrb[0].mxu0
  %v245 = vadd.f32 0.0, %v244
  %246 = vdwg.mxu0
  %v255 = vunpack.c.l.b16 %v39
  %v256 = vunpack.c.l.b16 %v40
  %v257 = vunpack.c.l.b16 %v41
  %v258 = vunpack.c.l.b16 %v42
  %v259 = vunpack.c.l.b16 %v43
  %v260 = vunpack.c.l.b16 %v44
  %v261 = vunpack.c.l.b16 %v45
  %v262 = vunpack.c.l.b16 %v46
  %v263 = vpack.c.b16 %v256, %v255
  %v264 = vpack.c.b16 %v258, %v257
  %v265 = vpack.c.b16 %v260, %v259
  %v266 = vpack.c.b16 %v262, %v261
  %v279 = vunpack.c.l.b16 %v47
  %v280 = vunpack.c.h.b16 %v47
  %v281 = vunpack.c.l.b16 %v48
  %v282 = vunpack.c.h.b16 %v48
  %v283 = vunpack.c.l.b16 %v49
  %v284 = vunpack.c.h.b16 %v49
  %v285 = vunpack.c.l.b16 %v50
  %v286 = vunpack.c.h.b16 %v50
  %v287 = vunpack.c.l.b16 %v51
  %v288 = vunpack.c.h.b16 %v51
  %v289 = vunpack.c.l.b16 %v52
  %v290 = vunpack.c.h.b16 %v52
  %v291 = vunpack.c.l.b16 %v53
  %v292 = vunpack.c.h.b16 %v53
  %v293 = vunpack.c.l.b16 %v54
  %v294 = vunpack.c.h.b16 %v54
  %v295 = vunpack.c.l.b16 %v55
  %v296 = vunpack.c.h.b16 %v55
  %v297 = vunpack.c.l.b16 %v56
  %v298 = vunpack.c.h.b16 %v56
  %v299 = vunpack.c.l.b16 %v57
  %v300 = vunpack.c.h.b16 %v57
  %v301 = vunpack.c.l.b16 %v58
  %v302 = vunpack.c.h.b16 %v58
  %v303 = vpack.c.b16 %v281, %v279
  %v304 = vpack.c.b16 %v282, %v280
  %v305 = vpack.c.b16 %v285, %v283
  %v306 = vpack.c.b16 %v286, %v284
  %v307 = vpack.c.b16 %v289, %v287
  %v308 = vpack.c.b16 %v290, %v288
  %v309 = vpack.c.b16 %v293, %v291
  %v310 = vpack.c.b16 %v294, %v292
  %v311 = vpack.c.b16 %v297, %v295
  %v312 = vpack.c.b16 %v298, %v296
  %v313 = vpack.c.b16 %v301, %v299
  %v314 = vpack.c.b16 %v302, %v300
  %v328 = vsel %vm161, %v263, 0
  %v331 = vsel %vm161, %v264, 0
  %v334 = vsel %vm161, %v265, 0
  %v337 = vsel %vm161, %v266, 0
  %339 = vmatprep.subr.bf16.mxu0 %v304
  %340 = vmatpush1.bf16.msra.mxu0 %v303
  %341 = vmatprep.subr.bf16.mxu0 %v306
  %342 = vmatpush1.bf16.msra.mxu0 %v305
  %343 = vmatprep.subr.bf16.mxu0 %v308
  %344 = vmatpush1.bf16.msra.mxu0 %v307
  %345 = vmatprep.subr.bf16.mxu0 %v310
  %346 = vmatpush1.bf16.msra.mxu0 %v309
  %347 = vmatprep.subr.bf16.mxu0 %v312
  %348 = vmatpush1.bf16.msra.mxu0 %v311
  %349 = vmatprep.subr.bf16.mxu0 %v314
  %350 = vmatpush1.bf16.msra.mxu0 %v313
  %351 = vmatprep.subr.bf16.mxu0 0
  %352 = vmatpush1.bf16.msra.mxu0 0
  %353 = vmatprep.subr.bf16.mxu0 0
  %354 = vmatpush1.bf16.msra.mxu0 0
  %355 = vmatprep.subr.bf16.mxu0 0
  %356 = vmatpush1.bf16.msra.mxu0 0
  %357 = vmatprep.subr.bf16.mxu0 0
  %358 = vmatpush1.bf16.msra.mxu0 0
  %359 = vmatprep.subr.bf16.mxu0 0
  %360 = vmatpush1.bf16.msra.mxu0 0
  %361 = vmatprep.subr.bf16.mxu0 0
  %362 = vmatpush1.bf16.msra.mxu0 0
  %363 = vmatprep.subr.bf16.mxu0 0
  %364 = vmatpush1.bf16.msra.mxu0 0
  %365 = vmatprep.subr.bf16.mxu0 0
  %366 = vmatpush1.bf16.msra.mxu0 0
  %367 = vmatprep.subr.bf16.mxu0 0
  %368 = vmatpush1.bf16.msra.mxu0 0
  %369 = vmatprep.subr.bf16.mxu0 0
  %370 = vmatpush1.bf16.msra.mxu0 0
  %371 = vmatprep.mubr.bf16.mxu0 0
  %372 = vmatmul.mubr.bf16.gmra.mrb[0].mxu0 %v328
  %v373 = vpop.f32.mrb[0].mxu0
  %v374 = vadd.f32 %v209, %v373
  %v375 = vpop.f32.mrb[0].mxu0
  %v376 = vadd.f32 %v211, %v375
  %v377 = vpop.f32.mrb[0].mxu0
  %v378 = vadd.f32 %v213, %v377
  %v379 = vpop.f32.mrb[0].mxu0
  %v380 = vadd.f32 %v215, %v379
  %381 = vmatprep.mubr.bf16.mxu0 0
  %382 = vmatmul.mubr.bf16.gmra.mrb[0].mxu0 %v331
  %v383 = vpop.f32.mrb[0].mxu0
  %v384 = vadd.f32 %v219, %v383
  %v385 = vpop.f32.mrb[0].mxu0
  %v386 = vadd.f32 %v221, %v385
  %v387 = vpop.f32.mrb[0].mxu0
  %v388 = vadd.f32 %v223, %v387
  %v389 = vpop.f32.mrb[0].mxu0
  %v390 = vadd.f32 %v225, %v389
  %391 = vmatprep.mubr.bf16.mxu0 0
  %392 = vmatmul.mubr.bf16.gmra.mrb[0].mxu0 %v334
  %v393 = vpop.f32.mrb[0].mxu0
  %v394 = vadd.f32 %v229, %v393
  %v395 = vpop.f32.mrb[0].mxu0
  %v396 = vadd.f32 %v231, %v395
  %v397 = vpop.f32.mrb[0].mxu0
  %v398 = vadd.f32 %v233, %v397
  %v399 = vpop.f32.mrb[0].mxu0
  %v400 = vadd.f32 %v235, %v399
  %401 = vmatprep.mubr.bf16.mxu0 0
  %402 = vmatmul.mubr.bf16.gmra.mrb[0].mxu0 %v337
  %v403 = vpop.f32.mrb[0].mxu0
  %v404 = vadd.f32 %v239, %v403
  %v405 = vpop.f32.mrb[0].mxu0
  %v406 = vadd.f32 %v241, %v405
  %v407 = vpop.f32.mrb[0].mxu0
  %v408 = vadd.f32 %v243, %v407
  %v409 = vpop.f32.mrb[0].mxu0
  %v410 = vadd.f32 %v245, %v409
  %411 = vdwg.mxu0
  %s412 = scalar_lea.vmem %s0, 72
  %v413 = vld [vmem:[%s412] sm:$0xf]
  %v414 = vld [vmem:[%s412 + $0x4] sm:$0xf]
  %v415 = vld [vmem:[%s412 + $0x8] sm:$0xf]
  %v416 = vld [vmem:[%s412 + $0xc] sm:$0xf]
  %v417 = vld [vmem:[%s412 + $0x10] sm:$0xf]
  %v418 = vld [vmem:[%s412 + $0x14] sm:$0xf]
  %v419 = vld [vmem:[%s412 + $0x18] sm:$0xf]
  %v420 = vld [vmem:[%s412 + $0x1c] sm:$0xf]
  %s421 = scalar_lea.vmem %s1, 192
  %v422 = vld [vmem:[%s421] sm:$0xff]
  %v423 = vld [vmem:[%s421 + $0x8] sm:$0xff]
  %v424 = vld [vmem:[%s421 + $0x10] sm:$0xff]
  %v425 = vld [vmem:[%s421 + $0x18] sm:$0xff]
  %v426 = vld [vmem:[%s421 + $0x20] sm:$0xff]
  %v427 = vld [vmem:[%s421 + $0x28] sm:$0xff]
  %v428 = vld [vmem:[%s421 + $0x30] sm:$0xff]
  %v429 = vld [vmem:[%s421 + $0x38] sm:$0xff]
  %v430 = vld [vmem:[%s421 + $0x40] sm:$0xff]
  %v431 = vld [vmem:[%s421 + $0x48] sm:$0xff]
  %v432 = vld [vmem:[%s421 + $0x50] sm:$0xff]
  %v433 = vld [vmem:[%s421 + $0x58] sm:$0xff]
  %v442 = vunpack.c.l.b16 %v413
  %v443 = vunpack.c.l.b16 %v414
  %v444 = vunpack.c.l.b16 %v415
  %v445 = vunpack.c.l.b16 %v416
  %v446 = vunpack.c.l.b16 %v417
  %v447 = vunpack.c.l.b16 %v418
  %v448 = vunpack.c.l.b16 %v419
  %v449 = vunpack.c.l.b16 %v420
  %v450 = vpack.c.b16 %v443, %v442
  %v451 = vpack.c.b16 %v445, %v444
  %v452 = vpack.c.b16 %v447, %v446
  %v453 = vpack.c.b16 %v449, %v448
  %v466 = vunpack.c.l.b16 %v422
  %v467 = vunpack.c.h.b16 %v422
  %v468 = vunpack.c.l.b16 %v423
  %v469 = vunpack.c.h.b16 %v423
  %v470 = vunpack.c.l.b16 %v424
  %v471 = vunpack.c.h.b16 %v424
  %v472 = vunpack.c.l.b16 %v425
  %v473 = vunpack.c.h.b16 %v425
  %v474 = vunpack.c.l.b16 %v426
  %v475 = vunpack.c.h.b16 %v426
  %v476 = vunpack.c.l.b16 %v427
  %v477 = vunpack.c.h.b16 %v427
  %v478 = vunpack.c.l.b16 %v428
  %v479 = vunpack.c.h.b16 %v428
  %v480 = vunpack.c.l.b16 %v429
  %v481 = vunpack.c.h.b16 %v429
  %v482 = vunpack.c.l.b16 %v430
  %v483 = vunpack.c.h.b16 %v430
  %v484 = vunpack.c.l.b16 %v431
  %v485 = vunpack.c.h.b16 %v431
  %v486 = vunpack.c.l.b16 %v432
  %v487 = vunpack.c.h.b16 %v432
  %v488 = vunpack.c.l.b16 %v433
  %v489 = vunpack.c.h.b16 %v433
  %v490 = vpack.c.b16 %v468, %v466
  %v491 = vpack.c.b16 %v469, %v467
  %v492 = vpack.c.b16 %v472, %v470
  %v493 = vpack.c.b16 %v473, %v471
  %v494 = vpack.c.b16 %v476, %v474
  %v495 = vpack.c.b16 %v477, %v475
  %v496 = vpack.c.b16 %v480, %v478
  %v497 = vpack.c.b16 %v481, %v479
  %v498 = vpack.c.b16 %v484, %v482
  %v499 = vpack.c.b16 %v485, %v483
  %v500 = vpack.c.b16 %v488, %v486
  %v501 = vpack.c.b16 %v489, %v487
  %v515 = vsel %vm161, %v450, 0
  %v518 = vsel %vm161, %v451, 0
  %v521 = vsel %vm161, %v452, 0
  %v524 = vsel %vm161, %v453, 0
  %526 = vmatprep.subr.bf16.mxu0 %v491
  %527 = vmatpush1.bf16.msra.mxu0 %v490
  %528 = vmatprep.subr.bf16.mxu0 %v493
  %529 = vmatpush1.bf16.msra.mxu0 %v492
  %530 = vmatprep.subr.bf16.mxu0 %v495
  %531 = vmatpush1.bf16.msra.mxu0 %v494
  %532 = vmatprep.subr.bf16.mxu0 %v497
  %533 = vmatpush1.bf16.msra.mxu0 %v496
  %534 = vmatprep.subr.bf16.mxu0 %v499
  %535 = vmatpush1.bf16.msra.mxu0 %v498
  %536 = vmatprep.subr.bf16.mxu0 %v501
  %537 = vmatpush1.bf16.msra.mxu0 %v500
  %538 = vmatprep.subr.bf16.mxu0 0
  %539 = vmatpush1.bf16.msra.mxu0 0
  %540 = vmatprep.subr.bf16.mxu0 0
  %541 = vmatpush1.bf16.msra.mxu0 0
  %542 = vmatprep.subr.bf16.mxu0 0
  %543 = vmatpush1.bf16.msra.mxu0 0
  %544 = vmatprep.subr.bf16.mxu0 0
  %545 = vmatpush1.bf16.msra.mxu0 0
  %546 = vmatprep.subr.bf16.mxu0 0
  %547 = vmatpush1.bf16.msra.mxu0 0
  %548 = vmatprep.subr.bf16.mxu0 0
  %549 = vmatpush1.bf16.msra.mxu0 0
  %550 = vmatprep.subr.bf16.mxu0 0
  %551 = vmatpush1.bf16.msra.mxu0 0
  %552 = vmatprep.subr.bf16.mxu0 0
  %553 = vmatpush1.bf16.msra.mxu0 0
  %554 = vmatprep.subr.bf16.mxu0 0
  %555 = vmatpush1.bf16.msra.mxu0 0
  %556 = vmatprep.subr.bf16.mxu0 0
  %557 = vmatpush1.bf16.msra.mxu0 0
  %558 = vmatprep.mubr.bf16.mxu0 0
  %559 = vmatmul.mubr.bf16.gmra.mrb[0].mxu0 %v515
  %v560 = vpop.f32.mrb[0].mxu0
  %v561 = vadd.f32 0.0, %v560
  %v562 = vpop.f32.mrb[0].mxu0
  %v563 = vadd.f32 0.0, %v562
  %v564 = vpop.f32.mrb[0].mxu0
  %v565 = vadd.f32 0.0, %v564
  %v566 = vpop.f32.mrb[0].mxu0
  %v567 = vadd.f32 0.0, %v566
  %568 = vmatprep.mubr.bf16.mxu0 0
  %569 = vmatmul.mubr.bf16.gmra.mrb[0].mxu0 %v518
  %v570 = vpop.f32.mrb[0].mxu0
  %v571 = vadd.f32 0.0, %v570
  %v572 = vpop.f32.mrb[0].mxu0
  %v573 = vadd.f32 0.0, %v572
  %v574 = vpop.f32.mrb[0].mxu0
  %v575 = vadd.f32 0.0, %v574
  %v576 = vpop.f32.mrb[0].mxu0
  %v577 = vadd.f32 0.0, %v576
  %578 = vmatprep.mubr.bf16.mxu0 0
  %579 = vmatmul.mubr.bf16.gmra.mrb[0].mxu0 %v521
  %v580 = vpop.f32.mrb[0].mxu0
  %v581 = vadd.f32 0.0, %v580
  %v582 = vpop.f32.mrb[0].mxu0
  %v583 = vadd.f32 0.0, %v582
  %v584 = vpop.f32.mrb[0].mxu0
  %v585 = vadd.f32 0.0, %v584
  %v586 = vpop.f32.mrb[0].mxu0
  %v587 = vadd.f32 0.0, %v586
  %588 = vmatprep.mubr.bf16.mxu0 0
  %589 = vmatmul.mubr.bf16.gmra.mrb[0].mxu0 %v524
  %v590 = vpop.f32.mrb[0].mxu0
  %v591 = vadd.f32 0.0, %v590
  %v592 = vpop.f32.mrb[0].mxu0
  %v593 = vadd.f32 0.0, %v592
  %v594 = vpop.f32.mrb[0].mxu0
  %v595 = vadd.f32 0.0, %v594
  %v596 = vpop.f32.mrb[0].mxu0
  %v597 = vadd.f32 0.0, %v596
  %598 = vdwg.mxu0
  %v599 = vadd.f32 %v374, %v561
  %v600 = vadd.f32 %v376, %v563
  %v601 = vadd.f32 %v378, %v565
  %v602 = vadd.f32 %v380, %v567
  %v603 = vadd.f32 %v384, %v571
  %v604 = vadd.f32 %v386, %v573
  %v605 = vadd.f32 %v388, %v575
  %v606 = vadd.f32 %v390, %v577
  %v607 = vadd.f32 %v394, %v581
  %v608 = vadd.f32 %v396, %v583
  %v609 = vadd.f32 %v398, %v585
  %v610 = vadd.f32 %v400, %v587
  %v611 = vadd.f32 %v404, %v591
  %v612 = vadd.f32 %v406, %v593
  %v613 = vadd.f32 %v408, %v595
  %v614 = vadd.f32 %v410, %v597
  %s615 = scalar_lea.vmem %s0, 108
  %v616 = vld [vmem:[%s615] sm:$0xf]
  %v617 = vld [vmem:[%s615 + $0x4] sm:$0xf]
  %v618 = vld [vmem:[%s615 + $0x8] sm:$0xf]
  %v619 = vld [vmem:[%s615 + $0xc] sm:$0xf]
  %v620 = vld [vmem:[%s615 + $0x10] sm:$0xf]
  %v621 = vld [vmem:[%s615 + $0x14] sm:$0xf]
  %v622 = vld [vmem:[%s615 + $0x18] sm:$0xf]
  %v623 = vld [vmem:[%s615 + $0x1c] sm:$0xf]
  %s624 = scalar_lea.vmem %s1, 288
  %v625 = vld [vmem:[%s624] sm:$0xff]
  %v626 = vld [vmem:[%s624 + $0x8] sm:$0xff]
  %v627 = vld [vmem:[%s624 + $0x10] sm:$0xff]
  %v628 = vld [vmem:[%s624 + $0x18] sm:$0xff]
  %v629 = vld [vmem:[%s624 + $0x20] sm:$0xff]
  %v630 = vld [vmem:[%s624 + $0x28] sm:$0xff]
  %v631 = vld [vmem:[%s624 + $0x30] sm:$0xff]
  %v632 = vld [vmem:[%s624 + $0x38] sm:$0xff]
  %v633 = vld [vmem:[%s624 + $0x40] sm:$0xff]
  %v634 = vld [vmem:[%s624 + $0x48] sm:$0xff]
  %v635 = vld [vmem:[%s624 + $0x50] sm:$0xff]
  %v636 = vld [vmem:[%s624 + $0x58] sm:$0xff]
  %v645 = vunpack.c.l.b16 %v616
  %v646 = vunpack.c.l.b16 %v617
  %v647 = vunpack.c.l.b16 %v618
  %v648 = vunpack.c.l.b16 %v619
  %v649 = vunpack.c.l.b16 %v620
  %v650 = vunpack.c.l.b16 %v621
  %v651 = vunpack.c.l.b16 %v622
  %v652 = vunpack.c.l.b16 %v623
  %v653 = vpack.c.b16 %v646, %v645
  %v654 = vpack.c.b16 %v648, %v647
  %v655 = vpack.c.b16 %v650, %v649
  %v656 = vpack.c.b16 %v652, %v651
  %v669 = vunpack.c.l.b16 %v625
  %v670 = vunpack.c.h.b16 %v625
  %v671 = vunpack.c.l.b16 %v626
  %v672 = vunpack.c.h.b16 %v626
  %v673 = vunpack.c.l.b16 %v627
  %v674 = vunpack.c.h.b16 %v627
  %v675 = vunpack.c.l.b16 %v628
  %v676 = vunpack.c.h.b16 %v628
  %v677 = vunpack.c.l.b16 %v629
  %v678 = vunpack.c.h.b16 %v629
  %v679 = vunpack.c.l.b16 %v630
  %v680 = vunpack.c.h.b16 %v630
  %v681 = vunpack.c.l.b16 %v631
  %v682 = vunpack.c.h.b16 %v631
  %v683 = vunpack.c.l.b16 %v632
  %v684 = vunpack.c.h.b16 %v632
  %v685 = vunpack.c.l.b16 %v633
  %v686 = vunpack.c.h.b16 %v633
  %v687 = vunpack.c.l.b16 %v634
  %v688 = vunpack.c.h.b16 %v634
  %v689 = vunpack.c.l.b16 %v635
  %v690 = vunpack.c.h.b16 %v635
  %v691 = vunpack.c.l.b16 %v636
  %v692 = vunpack.c.h.b16 %v636
  %v693 = vpack.c.b16 %v671, %v669
  %v694 = vpack.c.b16 %v672, %v670
  %v695 = vpack.c.b16 %v675, %v673
  %v696 = vpack.c.b16 %v676, %v674
  %v697 = vpack.c.b16 %v679, %v677
  %v698 = vpack.c.b16 %v680, %v678
  %v699 = vpack.c.b16 %v683, %v681
  %v700 = vpack.c.b16 %v684, %v682
  %v701 = vpack.c.b16 %v687, %v685
  %v702 = vpack.c.b16 %v688, %v686
  %v703 = vpack.c.b16 %v691, %v689
  %v704 = vpack.c.b16 %v692, %v690
  %v718 = vsel %vm161, %v653, 0
  %v721 = vsel %vm161, %v654, 0
  %v724 = vsel %vm161, %v655, 0
  %v727 = vsel %vm161, %v656, 0
  %729 = vmatprep.subr.bf16.mxu0 %v694
  %730 = vmatpush1.bf16.msra.mxu0 %v693
  %731 = vmatprep.subr.bf16.mxu0 %v696
  %732 = vmatpush1.bf16.msra.mxu0 %v695
  %733 = vmatprep.subr.bf16.mxu0 %v698
  %734 = vmatpush1.bf16.msra.mxu0 %v697
  %735 = vmatprep.subr.bf16.mxu0 %v700
  %736 = vmatpush1.bf16.msra.mxu0 %v699
  %737 = vmatprep.subr.bf16.mxu0 %v702
  %738 = vmatpush1.bf16.msra.mxu0 %v701
  %739 = vmatprep.subr.bf16.mxu0 %v704
  %740 = vmatpush1.bf16.msra.mxu0 %v703
  %741 = vmatprep.subr.bf16.mxu0 0
  %742 = vmatpush1.bf16.msra.mxu0 0
  %743 = vmatprep.subr.bf16.mxu0 0
  %744 = vmatpush1.bf16.msra.mxu0 0
  %745 = vmatprep.subr.bf16.mxu0 0
  %746 = vmatpush1.bf16.msra.mxu0 0
  %747 = vmatprep.subr.bf16.mxu0 0
  %748 = vmatpush1.bf16.msra.mxu0 0
  %749 = vmatprep.subr.bf16.mxu0 0
  %750 = vmatpush1.bf16.msra.mxu0 0
  %751 = vmatprep.subr.bf16.mxu0 0
  %752 = vmatpush1.bf16.msra.mxu0 0
  %753 = vmatprep.subr.bf16.mxu0 0
  %754 = vmatpush1.bf16.msra.mxu0 0
  %755 = vmatprep.subr.bf16.mxu0 0
  %756 = vmatpush1.bf16.msra.mxu0 0
  %757 = vmatprep.subr.bf16.mxu0 0
  %758 = vmatpush1.bf16.msra.mxu0 0
  %759 = vmatprep.subr.bf16.mxu0 0
  %760 = vmatpush1.bf16.msra.mxu0 0
  %761 = vmatprep.mubr.bf16.mxu0 0
  %762 = vmatmul.mubr.bf16.gmra.mrb[0].mxu0 %v718
  %v763 = vpop.f32.mrb[0].mxu0
  %v764 = vadd.f32 0.0, %v763
  %v765 = vpop.f32.mrb[0].mxu0
  %v766 = vadd.f32 0.0, %v765
  %v767 = vpop.f32.mrb[0].mxu0
  %v768 = vadd.f32 0.0, %v767
  %v769 = vpop.f32.mrb[0].mxu0
  %v770 = vadd.f32 0.0, %v769
  %771 = vmatprep.mubr.bf16.mxu0 0
  %772 = vmatmul.mubr.bf16.gmra.mrb[0].mxu0 %v721
  %v773 = vpop.f32.mrb[0].mxu0
  %v774 = vadd.f32 0.0, %v773
  %v775 = vpop.f32.mrb[0].mxu0
  %v776 = vadd.f32 0.0, %v775
  %v777 = vpop.f32.mrb[0].mxu0
  %v778 = vadd.f32 0.0, %v777
  %v779 = vpop.f32.mrb[0].mxu0
  %v780 = vadd.f32 0.0, %v779
  %781 = vmatprep.mubr.bf16.mxu0 0
  %782 = vmatmul.mubr.bf16.gmra.mrb[0].mxu0 %v724
  %v783 = vpop.f32.mrb[0].mxu0
  %v784 = vadd.f32 0.0, %v783
  %v785 = vpop.f32.mrb[0].mxu0
  %v786 = vadd.f32 0.0, %v785
  %v787 = vpop.f32.mrb[0].mxu0
  %v788 = vadd.f32 0.0, %v787
  %v789 = vpop.f32.mrb[0].mxu0
  %v790 = vadd.f32 0.0, %v789
  %791 = vmatprep.mubr.bf16.mxu0 0
  %792 = vmatmul.mubr.bf16.gmra.mrb[0].mxu0 %v727
  %v793 = vpop.f32.mrb[0].mxu0
  %v794 = vadd.f32 0.0, %v793
  %v795 = vpop.f32.mrb[0].mxu0
  %v796 = vadd.f32 0.0, %v795
  %v797 = vpop.f32.mrb[0].mxu0
  %v798 = vadd.f32 0.0, %v797
  %v799 = vpop.f32.mrb[0].mxu0
  %v800 = vadd.f32 0.0, %v799
  %801 = vdwg.mxu0
  %v802 = vadd.f32 %v599, %v764
  %v803 = vadd.f32 %v600, %v766
  %v804 = vadd.f32 %v601, %v768
  %v805 = vadd.f32 %v602, %v770
  %v806 = vadd.f32 %v603, %v774
  %v807 = vadd.f32 %v604, %v776
  %v808 = vadd.f32 %v605, %v778
  %v809 = vadd.f32 %v606, %v780
  %v810 = vadd.f32 %v607, %v784
  %v811 = vadd.f32 %v608, %v786
  %v812 = vadd.f32 %v609, %v788
  %v813 = vadd.f32 %v610, %v790
  %v814 = vadd.f32 %v611, %v794
  %v815 = vadd.f32 %v612, %v796
  %v816 = vadd.f32 %v613, %v798
  %v817 = vadd.f32 %v614, %v800
  %v818 = vld [vmem:[%s0] sm:$0xf]
  %v819 = vld [vmem:[%s0 + $0x4] sm:$0xf]
  %v820 = vld [vmem:[%s0 + $0x8] sm:$0xf]
  %v821 = vld [vmem:[%s0 + $0xc] sm:$0xf]
  %v822 = vld [vmem:[%s0 + $0x10] sm:$0xf]
  %v823 = vld [vmem:[%s0 + $0x14] sm:$0xf]
  %v824 = vld [vmem:[%s0 + $0x18] sm:$0xf]
  %v825 = vld [vmem:[%s0 + $0x1c] sm:$0xf]
  %v826 = vld [vmem:[%s0 + $0x20] sm:$0x1]
  %s827 = scalar_lea.vmem %s1, 384
  %v828 = vld [vmem:[%s827] sm:$0xff]
  %v829 = vld [vmem:[%s827 + $0x8] sm:$0xff]
  %v830 = vld [vmem:[%s827 + $0x10] sm:$0xff]
  %v831 = vld [vmem:[%s827 + $0x18] sm:$0xff]
  %v832 = vld [vmem:[%s827 + $0x20] sm:$0xff]
  %v833 = vld [vmem:[%s827 + $0x28] sm:$0xff]
  %v834 = vld [vmem:[%s827 + $0x30] sm:$0xff]
  %v835 = vld [vmem:[%s827 + $0x38] sm:$0xff]
  %v836 = vld [vmem:[%s827 + $0x40] sm:$0xff]
  %v837 = vld [vmem:[%s827 + $0x48] sm:$0xff]
  %v838 = vld [vmem:[%s827 + $0x50] sm:$0xff]
  %v839 = vld [vmem:[%s827 + $0x58] sm:$0xff]
  %v849 = vunpack.c.l.b16 %v818
  %v850 = vunpack.c.l.b16 %v819
  %v851 = vunpack.c.l.b16 %v820
  %v852 = vunpack.c.l.b16 %v821
  %v853 = vunpack.c.l.b16 %v822
  %v854 = vunpack.c.l.b16 %v823
  %v855 = vunpack.c.l.b16 %v824
  %v856 = vunpack.c.l.b16 %v825
  %v857 = vunpack.c.l.b16 %v826
  %v858 = vpack.c.b16 %v850, %v849
  %v859 = vpack.c.b16 %v852, %v851
  %v860 = vpack.c.b16 %v854, %v853
  %v861 = vpack.c.b16 %v856, %v855
  %v862 = vpack.c.b16 %v857, %v857
  %vm863 = vsmask.f32 7424
  %v865 = vshrl.u32 %v858, 16
  %v867 = vshll.u32 %v858, 16
  %v869 = vrot.slane %v867, 1
  %v870 = vor.u32 %v865, %v869
  %v872 = vshll.u32 %v859, 16
  %v874 = vrot.slane %v872, 1
  %v875 = vsel %vm863, %v870, %v874
  %v876 = vshrl.u32 %v859, 16
  %v878 = vor.u32 %v876, %v874
  %v880 = vshll.u32 %v860, 16
  %v882 = vrot.slane %v880, 1
  %v883 = vsel %vm863, %v878, %v882
  %v884 = vshrl.u32 %v860, 16
  %v886 = vor.u32 %v884, %v882
  %v888 = vshll.u32 %v861, 16
  %v890 = vrot.slane %v888, 1
  %v891 = vsel %vm863, %v886, %v890
  %v892 = vshrl.u32 %v861, 16
  %v894 = vor.u32 %v892, %v890
  %v896 = vshll.u32 %v862, 16
  %v898 = vrot.slane %v896, 1
  %v899 = vsel %vm863, %v894, %v898
  %v912 = vunpack.c.l.b16 %v828
  %v913 = vunpack.c.h.b16 %v828
  %v914 = vunpack.c.l.b16 %v829
  %v915 = vunpack.c.h.b16 %v829
  %v916 = vunpack.c.l.b16 %v830
  %v917 = vunpack.c.h.b16 %v830
  %v918 = vunpack.c.l.b16 %v831
  %v919 = vunpack.c.h.b16 %v831
  %v920 = vunpack.c.l.b16 %v832
  %v921 = vunpack.c.h.b16 %v832
  %v922 = vunpack.c.l.b16 %v833
  %v923 = vunpack.c.h.b16 %v833
  %v924 = vunpack.c.l.b16 %v834
  %v925 = vunpack.c.h.b16 %v834
  %v926 = vunpack.c.l.b16 %v835
  %v927 = vunpack.c.h.b16 %v835
  %v928 = vunpack.c.l.b16 %v836
  %v929 = vunpack.c.h.b16 %v836
  %v930 = vunpack.c.l.b16 %v837
  %v931 = vunpack.c.h.b16 %v837
  %v932 = vunpack.c.l.b16 %v838
  %v933 = vunpack.c.h.b16 %v838
  %v934 = vunpack.c.l.b16 %v839
  %v935 = vunpack.c.h.b16 %v839
  %v936 = vpack.c.b16 %v914, %v912
  %v937 = vpack.c.b16 %v915, %v913
  %v938 = vpack.c.b16 %v918, %v916
  %v939 = vpack.c.b16 %v919, %v917
  %v940 = vpack.c.b16 %v922, %v920
  %v941 = vpack.c.b16 %v923, %v921
  %v942 = vpack.c.b16 %v926, %v924
  %v943 = vpack.c.b16 %v927, %v925
  %v944 = vpack.c.b16 %v930, %v928
  %v945 = vpack.c.b16 %v931, %v929
  %v946 = vpack.c.b16 %v934, %v932
  %v947 = vpack.c.b16 %v935, %v933
  %v961 = vsel %vm161, %v875, 0
  %v964 = vsel %vm161, %v883, 0
  %v967 = vsel %vm161, %v891, 0
  %v970 = vsel %vm161, %v899, 0
  %972 = vmatprep.subr.bf16.mxu0 %v937
  %973 = vmatpush1.bf16.msra.mxu0 %v936
  %974 = vmatprep.subr.bf16.mxu0 %v939
  %975 = vmatpush1.bf16.msra.mxu0 %v938
  %976 = vmatprep.subr.bf16.mxu0 %v941
  %977 = vmatpush1.bf16.msra.mxu0 %v940
  %978 = vmatprep.subr.bf16.mxu0 %v943
  %979 = vmatpush1.bf16.msra.mxu0 %v942
  %980 = vmatprep.subr.bf16.mxu0 %v945
  %981 = vmatpush1.bf16.msra.mxu0 %v944
  %982 = vmatprep.subr.bf16.mxu0 %v947
  %983 = vmatpush1.bf16.msra.mxu0 %v946
  %984 = vmatprep.subr.bf16.mxu0 0
  %985 = vmatpush1.bf16.msra.mxu0 0
  %986 = vmatprep.subr.bf16.mxu0 0
  %987 = vmatpush1.bf16.msra.mxu0 0
  %988 = vmatprep.subr.bf16.mxu0 0
  %989 = vmatpush1.bf16.msra.mxu0 0
  %990 = vmatprep.subr.bf16.mxu0 0
  %991 = vmatpush1.bf16.msra.mxu0 0
  %992 = vmatprep.subr.bf16.mxu0 0
  %993 = vmatpush1.bf16.msra.mxu0 0
  %994 = vmatprep.subr.bf16.mxu0 0
  %995 = vmatpush1.bf16.msra.mxu0 0
  %996 = vmatprep.subr.bf16.mxu0 0
  %997 = vmatpush1.bf16.msra.mxu0 0
  %998 = vmatprep.subr.bf16.mxu0 0
  %999 = vmatpush1.bf16.msra.mxu0 0
  %1000 = vmatprep.subr.bf16.mxu0 0
  %1001 = vmatpush1.bf16.msra.mxu0 0
  %1002 = vmatprep.subr.bf16.mxu0 0
  %1003 = vmatpush1.bf16.msra.mxu0 0
  %1004 = vmatprep.mubr.bf16.mxu0 0
  %1005 = vmatmul.mubr.bf16.gmra.mrb[0].mxu0 %v961
  %v1006 = vpop.f32.mrb[0].mxu0
  %v1007 = vadd.f32 0.0, %v1006
  %v1008 = vpop.f32.mrb[0].mxu0
  %v1009 = vadd.f32 0.0, %v1008
  %v1010 = vpop.f32.mrb[0].mxu0
  %v1011 = vadd.f32 0.0, %v1010
  %v1012 = vpop.f32.mrb[0].mxu0
  %v1013 = vadd.f32 0.0, %v1012
  %1014 = vmatprep.mubr.bf16.mxu0 0
  %1015 = vmatmul.mubr.bf16.gmra.mrb[0].mxu0 %v964
  %v1016 = vpop.f32.mrb[0].mxu0
  %v1017 = vadd.f32 0.0, %v1016
  %v1018 = vpop.f32.mrb[0].mxu0
  %v1019 = vadd.f32 0.0, %v1018
  %v1020 = vpop.f32.mrb[0].mxu0
  %v1021 = vadd.f32 0.0, %v1020
  %v1022 = vpop.f32.mrb[0].mxu0
  %v1023 = vadd.f32 0.0, %v1022
  %1024 = vmatprep.mubr.bf16.mxu0 0
  %1025 = vmatmul.mubr.bf16.gmra.mrb[0].mxu0 %v967
  %v1026 = vpop.f32.mrb[0].mxu0
  %v1027 = vadd.f32 0.0, %v1026
  %v1028 = vpop.f32.mrb[0].mxu0
  %v1029 = vadd.f32 0.0, %v1028
  %v1030 = vpop.f32.mrb[0].mxu0
  %v1031 = vadd.f32 0.0, %v1030
  %v1032 = vpop.f32.mrb[0].mxu0
  %v1033 = vadd.f32 0.0, %v1032
  %1034 = vmatprep.mubr.bf16.mxu0 0
  %1035 = vmatmul.mubr.bf16.gmra.mrb[0].mxu0 %v970
  %v1036 = vpop.f32.mrb[0].mxu0
  %v1037 = vadd.f32 0.0, %v1036
  %v1038 = vpop.f32.mrb[0].mxu0
  %v1039 = vadd.f32 0.0, %v1038
  %v1040 = vpop.f32.mrb[0].mxu0
  %v1041 = vadd.f32 0.0, %v1040
  %v1042 = vpop.f32.mrb[0].mxu0
  %v1043 = vadd.f32 0.0, %v1042
  %1044 = vdwg.mxu0
  %v1045 = vadd.f32 %v802, %v1007
  %v1046 = vadd.f32 %v803, %v1009
  %v1047 = vadd.f32 %v804, %v1011
  %v1048 = vadd.f32 %v805, %v1013
  %v1049 = vadd.f32 %v806, %v1017
  %v1050 = vadd.f32 %v807, %v1019
  %v1051 = vadd.f32 %v808, %v1021
  %v1052 = vadd.f32 %v809, %v1023
  %v1053 = vadd.f32 %v810, %v1027
  %v1054 = vadd.f32 %v811, %v1029
  %v1055 = vadd.f32 %v812, %v1031
  %v1056 = vadd.f32 %v813, %v1033
  %v1057 = vadd.f32 %v814, %v1037
  %v1058 = vadd.f32 %v815, %v1039
  %v1059 = vadd.f32 %v816, %v1041
  %v1060 = vadd.f32 %v817, %v1043
  %v1061 = vld [vmem:[%s2] sm:$0x3]
  %v1063 = vlaneseq
  %v1064 = vshrl.u32 %v1063, 7
  %v1065 = vsub.s32 0, %v1064
  %v1066 = vrot.slane %v1061, %v1065
  %v1067 = vlaneseq
  %v1068 = vshrl.u32 %v1067, 7
  %v1069 = vsub.s32 1, %v1068
  %v1070 = vrot.slane %v1061, %v1069
  %v1073 = vadd.f32 %v1045, %v1066
  %v1074 = vadd.f32 %v1046, %v1070
  %v1075 = vadd.f32 %v1047, %v1066
  %v1076 = vadd.f32 %v1048, %v1070
  %v1077 = vadd.f32 %v1049, %v1066
  %v1078 = vadd.f32 %v1050, %v1070
  %v1079 = vadd.f32 %v1051, %v1066
  %v1080 = vadd.f32 %v1052, %v1070
  %v1081 = vadd.f32 %v1053, %v1066
  %v1082 = vadd.f32 %v1054, %v1070
  %v1083 = vadd.f32 %v1055, %v1066
  %v1084 = vadd.f32 %v1056, %v1070
  %v1085 = vadd.f32 %v1057, %v1066
  %v1086 = vadd.f32 %v1058, %v1070
  %v1087 = vadd.f32 %v1059, %v1066
  %v1088 = vadd.f32 %v1060, %v1070
  %v1089 = vmax.f32 %v1073, 0.0
  %v1090 = vmax.f32 %v1074, 0.0
  %v1091 = vmax.f32 %v1075, 0.0
  %v1092 = vmax.f32 %v1076, 0.0
  %v1093 = vmax.f32 %v1077, 0.0
  %v1094 = vmax.f32 %v1078, 0.0
  %v1095 = vmax.f32 %v1079, 0.0
  %v1096 = vmax.f32 %v1080, 0.0
  %v1097 = vmax.f32 %v1081, 0.0
  %v1098 = vmax.f32 %v1082, 0.0
  %v1099 = vmax.f32 %v1083, 0.0
  %v1100 = vmax.f32 %v1084, 0.0
  %v1101 = vmax.f32 %v1085, 0.0
  %v1102 = vmax.f32 %v1086, 0.0
  %v1103 = vmax.f32 %v1087, 0.0
  %v1104 = vmax.f32 %v1088, 0.0
  %1105 = vmatprep.subr.bf16.mxu0 %v138
  %1106 = vmatpush1.bf16.msra.mxu0 %v137
  %1107 = vmatprep.subr.bf16.mxu0 %v140
  %1108 = vmatpush1.bf16.msra.mxu0 %v139
  %1109 = vmatprep.subr.bf16.mxu0 %v142
  %1110 = vmatpush1.bf16.msra.mxu0 %v141
  %1111 = vmatprep.subr.bf16.mxu0 %v144
  %1112 = vmatpush1.bf16.msra.mxu0 %v143
  %1113 = vmatprep.subr.bf16.mxu0 %v146
  %1114 = vmatpush1.bf16.msra.mxu0 %v145
  %1115 = vmatprep.subr.bf16.mxu0 %v148
  %1116 = vmatpush1.bf16.msra.mxu0 %v147
  %1117 = vmatprep.subr.bf16.mxu0 0
  %1118 = vmatpush1.bf16.msra.mxu0 0
  %1119 = vmatprep.subr.bf16.mxu0 0
  %1120 = vmatpush1.bf16.msra.mxu0 0
  %1121 = vmatprep.subr.bf16.mxu0 0
  %1122 = vmatpush1.bf16.msra.mxu0 0
  %1123 = vmatprep.subr.bf16.mxu0 0
  %1124 = vmatpush1.bf16.msra.mxu0 0
  %1125 = vmatprep.subr.bf16.mxu0 0
  %1126 = vmatpush1.bf16.msra.mxu0 0
  %1127 = vmatprep.subr.bf16.mxu0 0
  %1128 = vmatpush1.bf16.msra.mxu0 0
  %1129 = vmatprep.subr.bf16.mxu0 0
  %1130 = vmatpush1.bf16.msra.mxu0 0
  %1131 = vmatprep.subr.bf16.mxu0 0
  %1132 = vmatpush1.bf16.msra.mxu0 0
  %1133 = vmatprep.subr.bf16.mxu0 0
  %1134 = vmatpush1.bf16.msra.mxu0 0
  %1135 = vmatprep.subr.bf16.mxu0 0
  %1136 = vmatpush1.bf16.msra.mxu0 0
  %1137 = vmatprep.mubr.bf16.mxu0 0
  %1138 = vmatmul.mubr.bf16.gmra.mrb[0].mxu0 %v515
  %v1139 = vpop.f32.mrb[0].mxu0
  %v1140 = vadd.f32 0.0, %v1139
  %v1141 = vpop.f32.mrb[0].mxu0
  %v1142 = vadd.f32 0.0, %v1141
  %v1143 = vpop.f32.mrb[0].mxu0
  %v1144 = vadd.f32 0.0, %v1143
  %v1145 = vpop.f32.mrb[0].mxu0
  %v1146 = vadd.f32 0.0, %v1145
  %1147 = vmatprep.mubr.bf16.mxu0 0
  %1148 = vmatmul.mubr.bf16.gmra.mrb[0].mxu0 %v518
  %v1149 = vpop.f32.mrb[0].mxu0
  %v1150 = vadd.f32 0.0, %v1149
  %v1151 = vpop.f32.mrb[0].mxu0
  %v1152 = vadd.f32 0.0, %v1151
  %v1153 = vpop.f32.mrb[0].mxu0
  %v1154 = vadd.f32 0.0, %v1153
  %v1155 = vpop.f32.mrb[0].mxu0
  %v1156 = vadd.f32 0.0, %v1155
  %1157 = vmatprep.mubr.bf16.mxu0 0
  %1158 = vmatmul.mubr.bf16.gmra.mrb[0].mxu0 %v521
  %v1159 = vpop.f32.mrb[0].mxu0
  %v1160 = vadd.f32 0.0, %v1159
  %v1161 = vpop.f32.mrb[0].mxu0
  %v1162 = vadd.f32 0.0, %v1161
  %v1163 = vpop.f32.mrb[0].mxu0
  %v1164 = vadd.f32 0.0, %v1163
  %v1165 = vpop.f32.mrb[0].mxu0
  %v1166 = vadd.f32 0.0, %v1165
  %1167 = vmatprep.mubr.bf16.mxu0 0
  %1168 = vmatmul.mubr.bf16.gmra.mrb[0].mxu0 %v524
  %v1169 = vpop.f32.mrb[0].mxu0
  %v1170 = vadd.f32 0.0, %v1169
  %v1171 = vpop.f32.mrb[0].mxu0
  %v1172 = vadd.f32 0.0, %v1171
  %v1173 = vpop.f32.mrb[0].mxu0
  %v1174 = vadd.f32 0.0, %v1173
  %v1175 = vpop.f32.mrb[0].mxu0
  %v1176 = vadd.f32 0.0, %v1175
  %1177 = vdwg.mxu0
  %1178 = vmatprep.subr.bf16.mxu0 %v304
  %1179 = vmatpush1.bf16.msra.mxu0 %v303
  %1180 = vmatprep.subr.bf16.mxu0 %v306
  %1181 = vmatpush1.bf16.msra.mxu0 %v305
  %1182 = vmatprep.subr.bf16.mxu0 %v308
  %1183 = vmatpush1.bf16.msra.mxu0 %v307
  %1184 = vmatprep.subr.bf16.mxu0 %v310
  %1185 = vmatpush1.bf16.msra.mxu0 %v309
  %1186 = vmatprep.subr.bf16.mxu0 %v312
  %1187 = vmatpush1.bf16.msra.mxu0 %v311
  %1188 = vmatprep.subr.bf16.mxu0 %v314
  %1189 = vmatpush1.bf16.msra.mxu0 %v313
  %1190 = vmatprep.subr.bf16.mxu0 0
  %1191 = vmatpush1.bf16.msra.mxu0 0
  %1192 = vmatprep.subr.bf16.mxu0 0
  %1193 = vmatpush1.bf16.msra.mxu0 0
  %1194 = vmatprep.subr.bf16.mxu0 0
  %1195 = vmatpush1.bf16.msra.mxu0 0
  %1196 = vmatprep.subr.bf16.mxu0 0
  %1197 = vmatpush1.bf16.msra.mxu0 0
  %1198 = vmatprep.subr.bf16.mxu0 0
  %1199 = vmatpush1.bf16.msra.mxu0 0
  %1200 = vmatprep.subr.bf16.mxu0 0
  %1201 = vmatpush1.bf16.msra.mxu0 0
  %1202 = vmatprep.subr.bf16.mxu0 0
  %1203 = vmatpush1.bf16.msra.mxu0 0
  %1204 = vmatprep.subr.bf16.mxu0 0
  %1205 = vmatpush1.bf16.msra.mxu0 0
  %1206 = vmatprep.subr.bf16.mxu0 0
  %1207 = vmatpush1.bf16.msra.mxu0 0
  %1208 = vmatprep.subr.bf16.mxu0 0
  %1209 = vmatpush1.bf16.msra.mxu0 0
  %1210 = vmatprep.mubr.bf16.mxu0 0
  %1211 = vmatmul.mubr.bf16.gmra.mrb[0].mxu0 %v163
  %v1212 = vpop.f32.mrb[0].mxu0
  %v1213 = vadd.f32 %v1140, %v1212
  %v1214 = vpop.f32.mrb[0].mxu0
  %v1215 = vadd.f32 %v1142, %v1214
  %v1216 = vpop.f32.mrb[0].mxu0
  %v1217 = vadd.f32 %v1144, %v1216
  %v1218 = vpop.f32.mrb[0].mxu0
  %v1219 = vadd.f32 %v1146, %v1218
  %1220 = vmatprep.mubr.bf16.mxu0 0
  %1221 = vmatmul.mubr.bf16.gmra.mrb[0].mxu0 %v166
  %v1222 = vpop.f32.mrb[0].mxu0
  %v1223 = vadd.f32 %v1150, %v1222
  %v1224 = vpop.f32.mrb[0].mxu0
  %v1225 = vadd.f32 %v1152, %v1224
  %v1226 = vpop.f32.mrb[0].mxu0
  %v1227 = vadd.f32 %v1154, %v1226
  %v1228 = vpop.f32.mrb[0].mxu0
  %v1229 = vadd.f32 %v1156, %v1228
  %1230 = vmatprep.mubr.bf16.mxu0 0
  %1231 = vmatmul.mubr.bf16.gmra.mrb[0].mxu0 %v169
  %v1232 = vpop.f32.mrb[0].mxu0
  %v1233 = vadd.f32 %v1160, %v1232
  %v1234 = vpop.f32.mrb[0].mxu0
  %v1235 = vadd.f32 %v1162, %v1234
  %v1236 = vpop.f32.mrb[0].mxu0
  %v1237 = vadd.f32 %v1164, %v1236
  %v1238 = vpop.f32.mrb[0].mxu0
  %v1239 = vadd.f32 %v1166, %v1238
  %1240 = vmatprep.mubr.bf16.mxu0 0
  %1241 = vmatmul.mubr.bf16.gmra.mrb[0].mxu0 %v172
  %v1242 = vpop.f32.mrb[0].mxu0
  %v1243 = vadd.f32 %v1170, %v1242
  %v1244 = vpop.f32.mrb[0].mxu0
  %v1245 = vadd.f32 %v1172, %v1244
  %v1246 = vpop.f32.mrb[0].mxu0
  %v1247 = vadd.f32 %v1174, %v1246
  %v1248 = vpop.f32.mrb[0].mxu0
  %v1249 = vadd.f32 %v1176, %v1248
  %1250 = vdwg.mxu0
  %1251 = vmatprep.subr.bf16.mxu0 %v491
  %1252 = vmatpush1.bf16.msra.mxu0 %v490
  %1253 = vmatprep.subr.bf16.mxu0 %v493
  %1254 = vmatpush1.bf16.msra.mxu0 %v492
  %1255 = vmatprep.subr.bf16.mxu0 %v495
  %1256 = vmatpush1.bf16.msra.mxu0 %v494
  %1257 = vmatprep.subr.bf16.mxu0 %v497
  %1258 = vmatpush1.bf16.msra.mxu0 %v496
  %1259 = vmatprep.subr.bf16.mxu0 %v499
  %1260 = vmatpush1.bf16.msra.mxu0 %v498
  %1261 = vmatprep.subr.bf16.mxu0 %v501
  %1262 = vmatpush1.bf16.msra.mxu0 %v500
  %1263 = vmatprep.subr.bf16.mxu0 0
  %1264 = vmatpush1.bf16.msra.mxu0 0
  %1265 = vmatprep.subr.bf16.mxu0 0
  %1266 = vmatpush1.bf16.msra.mxu0 0
  %1267 = vmatprep.subr.bf16.mxu0 0
  %1268 = vmatpush1.bf16.msra.mxu0 0
  %1269 = vmatprep.subr.bf16.mxu0 0
  %1270 = vmatpush1.bf16.msra.mxu0 0
  %1271 = vmatprep.subr.bf16.mxu0 0
  %1272 = vmatpush1.bf16.msra.mxu0 0
  %1273 = vmatprep.subr.bf16.mxu0 0
  %1274 = vmatpush1.bf16.msra.mxu0 0
  %1275 = vmatprep.subr.bf16.mxu0 0
  %1276 = vmatpush1.bf16.msra.mxu0 0
  %1277 = vmatprep.subr.bf16.mxu0 0
  %1278 = vmatpush1.bf16.msra.mxu0 0
  %1279 = vmatprep.subr.bf16.mxu0 0
  %1280 = vmatpush1.bf16.msra.mxu0 0
  %1281 = vmatprep.subr.bf16.mxu0 0
  %1282 = vmatpush1.bf16.msra.mxu0 0
  %1283 = vmatprep.mubr.bf16.mxu0 0
  %1284 = vmatmul.mubr.bf16.gmra.mrb[0].mxu0 %v718
  %v1285 = vpop.f32.mrb[0].mxu0
  %v1286 = vadd.f32 0.0, %v1285
  %v1287 = vpop.f32.mrb[0].mxu0
  %v1288 = vadd.f32 0.0, %v1287
  %v1289 = vpop.f32.mrb[0].mxu0
  %v1290 = vadd.f32 0.0, %v1289
  %v1291 = vpop.f32.mrb[0].mxu0
  %v1292 = vadd.f32 0.0, %v1291
  %1293 = vmatprep.mubr.bf16.mxu0 0
  %1294 = vmatmul.mubr.bf16.gmra.mrb[0].mxu0 %v721
  %v1295 = vpop.f32.mrb[0].mxu0
  %v1296 = vadd.f32 0.0, %v1295
  %v1297 = vpop.f32.mrb[0].mxu0
  %v1298 = vadd.f32 0.0, %v1297
  %v1299 = vpop.f32.mrb[0].mxu0
  %v1300 = vadd.f32 0.0, %v1299
  %v1301 = vpop.f32.mrb[0].mxu0
  %v1302 = vadd.f32 0.0, %v1301
  %1303 = vmatprep.mubr.bf16.mxu0 0
  %1304 = vmatmul.mubr.bf16.gmra.mrb[0].mxu0 %v724
  %v1305 = vpop.f32.mrb[0].mxu0
  %v1306 = vadd.f32 0.0, %v1305
  %v1307 = vpop.f32.mrb[0].mxu0
  %v1308 = vadd.f32 0.0, %v1307
  %v1309 = vpop.f32.mrb[0].mxu0
  %v1310 = vadd.f32 0.0, %v1309
  %v1311 = vpop.f32.mrb[0].mxu0
  %v1312 = vadd.f32 0.0, %v1311
  %1313 = vmatprep.mubr.bf16.mxu0 0
  %1314 = vmatmul.mubr.bf16.gmra.mrb[0].mxu0 %v727
  %v1315 = vpop.f32.mrb[0].mxu0
  %v1316 = vadd.f32 0.0, %v1315
  %v1317 = vpop.f32.mrb[0].mxu0
  %v1318 = vadd.f32 0.0, %v1317
  %v1319 = vpop.f32.mrb[0].mxu0
  %v1320 = vadd.f32 0.0, %v1319
  %v1321 = vpop.f32.mrb[0].mxu0
  %v1322 = vadd.f32 0.0, %v1321
  %1323 = vdwg.mxu0
  %v1324 = vadd.f32 %v1213, %v1286
  %v1325 = vadd.f32 %v1215, %v1288
  %v1326 = vadd.f32 %v1217, %v1290
  %v1327 = vadd.f32 %v1219, %v1292
  %v1328 = vadd.f32 %v1223, %v1296
  %v1329 = vadd.f32 %v1225, %v1298
  %v1330 = vadd.f32 %v1227, %v1300
  %v1331 = vadd.f32 %v1229, %v1302
  %v1332 = vadd.f32 %v1233, %v1306
  %v1333 = vadd.f32 %v1235, %v1308
  %v1334 = vadd.f32 %v1237, %v1310
  %v1335 = vadd.f32 %v1239, %v1312
  %v1336 = vadd.f32 %v1243, %v1316
  %v1337 = vadd.f32 %v1245, %v1318
  %v1338 = vadd.f32 %v1247, %v1320
  %v1339 = vadd.f32 %v1249, %v1322
  %1340 = vmatprep.subr.bf16.mxu0 %v694
  %1341 = vmatpush1.bf16.msra.mxu0 %v693
  %1342 = vmatprep.subr.bf16.mxu0 %v696
  %1343 = vmatpush1.bf16.msra.mxu0 %v695
  %1344 = vmatprep.subr.bf16.mxu0 %v698
  %1345 = vmatpush1.bf16.msra.mxu0 %v697
  %1346 = vmatprep.subr.bf16.mxu0 %v700
  %1347 = vmatpush1.bf16.msra.mxu0 %v699
  %1348 = vmatprep.subr.bf16.mxu0 %v702
  %1349 = vmatpush1.bf16.msra.mxu0 %v701
  %1350 = vmatprep.subr.bf16.mxu0 %v704
  %1351 = vmatpush1.bf16.msra.mxu0 %v703
  %1352 = vmatprep.subr.bf16.mxu0 0
  %1353 = vmatpush1.bf16.msra.mxu0 0
  %1354 = vmatprep.subr.bf16.mxu0 0
  %1355 = vmatpush1.bf16.msra.mxu0 0
  %1356 = vmatprep.subr.bf16.mxu0 0
  %1357 = vmatpush1.bf16.msra.mxu0 0
  %1358 = vmatprep.subr.bf16.mxu0 0
  %1359 = vmatpush1.bf16.msra.mxu0 0
  %1360 = vmatprep.subr.bf16.mxu0 0
  %1361 = vmatpush1.bf16.msra.mxu0 0
  %1362 = vmatprep.subr.bf16.mxu0 0
  %1363 = vmatpush1.bf16.msra.mxu0 0
  %1364 = vmatprep.subr.bf16.mxu0 0
  %1365 = vmatpush1.bf16.msra.mxu0 0
  %1366 = vmatprep.subr.bf16.mxu0 0
  %1367 = vmatpush1.bf16.msra.mxu0 0
  %1368 = vmatprep.subr.bf16.mxu0 0
  %1369 = vmatpush1.bf16.msra.mxu0 0
  %1370 = vmatprep.subr.bf16.mxu0 0
  %1371 = vmatpush1.bf16.msra.mxu0 0
  %1372 = vmatprep.mubr.bf16.mxu0 0
  %1373 = vmatmul.mubr.bf16.gmra.mrb[0].mxu0 %v961
  %v1374 = vpop.f32.mrb[0].mxu0
  %v1375 = vadd.f32 0.0, %v1374
  %v1376 = vpop.f32.mrb[0].mxu0
  %v1377 = vadd.f32 0.0, %v1376
  %v1378 = vpop.f32.mrb[0].mxu0
  %v1379 = vadd.f32 0.0, %v1378
  %v1380 = vpop.f32.mrb[0].mxu0
  %v1381 = vadd.f32 0.0, %v1380
  %1382 = vmatprep.mubr.bf16.mxu0 0
  %1383 = vmatmul.mubr.bf16.gmra.mrb[0].mxu0 %v964
  %v1384 = vpop.f32.mrb[0].mxu0
  %v1385 = vadd.f32 0.0, %v1384
  %v1386 = vpop.f32.mrb[0].mxu0
  %v1387 = vadd.f32 0.0, %v1386
  %v1388 = vpop.f32.mrb[0].mxu0
  %v1389 = vadd.f32 0.0, %v1388
  %v1390 = vpop.f32.mrb[0].mxu0
  %v1391 = vadd.f32 0.0, %v1390
  %1392 = vmatprep.mubr.bf16.mxu0 0
  %1393 = vmatmul.mubr.bf16.gmra.mrb[0].mxu0 %v967
  %v1394 = vpop.f32.mrb[0].mxu0
  %v1395 = vadd.f32 0.0, %v1394
  %v1396 = vpop.f32.mrb[0].mxu0
  %v1397 = vadd.f32 0.0, %v1396
  %v1398 = vpop.f32.mrb[0].mxu0
  %v1399 = vadd.f32 0.0, %v1398
  %v1400 = vpop.f32.mrb[0].mxu0
  %v1401 = vadd.f32 0.0, %v1400
  %1402 = vmatprep.mubr.bf16.mxu0 0
  %1403 = vmatmul.mubr.bf16.gmra.mrb[0].mxu0 %v970
  %v1404 = vpop.f32.mrb[0].mxu0
  %v1405 = vadd.f32 0.0, %v1404
  %v1406 = vpop.f32.mrb[0].mxu0
  %v1407 = vadd.f32 0.0, %v1406
  %v1408 = vpop.f32.mrb[0].mxu0
  %v1409 = vadd.f32 0.0, %v1408
  %v1410 = vpop.f32.mrb[0].mxu0
  %v1411 = vadd.f32 0.0, %v1410
  %1412 = vdwg.mxu0
  %v1413 = vadd.f32 %v1324, %v1375
  %v1414 = vadd.f32 %v1325, %v1377
  %v1415 = vadd.f32 %v1326, %v1379
  %v1416 = vadd.f32 %v1327, %v1381
  %v1417 = vadd.f32 %v1328, %v1385
  %v1418 = vadd.f32 %v1329, %v1387
  %v1419 = vadd.f32 %v1330, %v1389
  %v1420 = vadd.f32 %v1331, %v1391
  %v1421 = vadd.f32 %v1332, %v1395
  %v1422 = vadd.f32 %v1333, %v1397
  %v1423 = vadd.f32 %v1334, %v1399
  %v1424 = vadd.f32 %v1335, %v1401
  %v1425 = vadd.f32 %v1336, %v1405
  %v1426 = vadd.f32 %v1337, %v1407
  %v1427 = vadd.f32 %v1338, %v1409
  %v1428 = vadd.f32 %v1339, %v1411
  %v1429 = vld [vmem:[%s59] sm:$0xf]
  %v1430 = vld [vmem:[%s59 + $0x4] sm:$0xf]
  %v1431 = vld [vmem:[%s59 + $0x8] sm:$0xf]
  %v1432 = vld [vmem:[%s59 + $0xc] sm:$0xf]
  %v1433 = vld [vmem:[%s59 + $0x10] sm:$0xf]
  %v1434 = vld [vmem:[%s59 + $0x14] sm:$0xf]
  %v1435 = vld [vmem:[%s59 + $0x18] sm:$0xf]
  %v1436 = vld [vmem:[%s59 + $0x1c] sm:$0xf]
  %v1437 = vld [vmem:[%s59 + $0x20] sm:$0x1]
  %v1447 = vunpack.c.l.b16 %v1429
  %v1448 = vunpack.c.l.b16 %v1430
  %v1449 = vunpack.c.l.b16 %v1431
  %v1450 = vunpack.c.l.b16 %v1432
  %v1451 = vunpack.c.l.b16 %v1433
  %v1452 = vunpack.c.l.b16 %v1434
  %v1453 = vunpack.c.l.b16 %v1435
  %v1454 = vunpack.c.l.b16 %v1436
  %v1455 = vunpack.c.l.b16 %v1437
  %v1456 = vpack.c.b16 %v1448, %v1447
  %v1457 = vpack.c.b16 %v1450, %v1449
  %v1458 = vpack.c.b16 %v1452, %v1451
  %v1459 = vpack.c.b16 %v1454, %v1453
  %v1460 = vpack.c.b16 %v1455, %v1455
  %v1462 = vshrl.u32 %v1456, 16
  %v1464 = vshll.u32 %v1456, 16
  %v1466 = vrot.slane %v1464, 1
  %v1467 = vor.u32 %v1462, %v1466
  %v1469 = vshll.u32 %v1457, 16
  %v1471 = vrot.slane %v1469, 1
  %v1472 = vsel %vm863, %v1467, %v1471
  %v1473 = vshrl.u32 %v1457, 16
  %v1475 = vor.u32 %v1473, %v1471
  %v1477 = vshll.u32 %v1458, 16
  %v1479 = vrot.slane %v1477, 1
  %v1480 = vsel %vm863, %v1475, %v1479
  %v1481 = vshrl.u32 %v1458, 16
  %v1483 = vor.u32 %v1481, %v1479
  %v1485 = vshll.u32 %v1459, 16
  %v1487 = vrot.slane %v1485, 1
  %v1488 = vsel %vm863, %v1483, %v1487
  %v1489 = vshrl.u32 %v1459, 16
  %v1491 = vor.u32 %v1489, %v1487
  %v1493 = vshll.u32 %v1460, 16
  %v1495 = vrot.slane %v1493, 1
  %v1496 = vsel %vm863, %v1491, %v1495
  %v1498 = vsel %vm161, %v1472, 0
  %v1501 = vsel %vm161, %v1480, 0
  %v1504 = vsel %vm161, %v1488, 0
  %v1507 = vsel %vm161, %v1496, 0
  %1509 = vmatprep.subr.bf16.mxu0 %v937
  %1510 = vmatpush1.bf16.msra.mxu0 %v936
  %1511 = vmatprep.subr.bf16.mxu0 %v939
  %1512 = vmatpush1.bf16.msra.mxu0 %v938
  %1513 = vmatprep.subr.bf16.mxu0 %v941
  %1514 = vmatpush1.bf16.msra.mxu0 %v940
  %1515 = vmatprep.subr.bf16.mxu0 %v943
  %1516 = vmatpush1.bf16.msra.mxu0 %v942
  %1517 = vmatprep.subr.bf16.mxu0 %v945
  %1518 = vmatpush1.bf16.msra.mxu0 %v944
  %1519 = vmatprep.subr.bf16.mxu0 %v947
  %1520 = vmatpush1.bf16.msra.mxu0 %v946
  %1521 = vmatprep.subr.bf16.mxu0 0
  %1522 = vmatpush1.bf16.msra.mxu0 0
  %1523 = vmatprep.subr.bf16.mxu0 0
  %1524 = vmatpush1.bf16.msra.mxu0 0
  %1525 = vmatprep.subr.bf16.mxu0 0
  %1526 = vmatpush1.bf16.msra.mxu0 0
  %1527 = vmatprep.subr.bf16.mxu0 0
  %1528 = vmatpush1.bf16.msra.mxu0 0
  %1529 = vmatprep.subr.bf16.mxu0 0
  %1530 = vmatpush1.bf16.msra.mxu0 0
  %1531 = vmatprep.subr.bf16.mxu0 0
  %1532 = vmatpush1.bf16.msra.mxu0 0
  %1533 = vmatprep.subr.bf16.mxu0 0
  %1534 = vmatpush1.bf16.msra.mxu0 0
  %1535 = vmatprep.subr.bf16.mxu0 0
  %1536 = vmatpush1.bf16.msra.mxu0 0
  %1537 = vmatprep.subr.bf16.mxu0 0
  %1538 = vmatpush1.bf16.msra.mxu0 0
  %1539 = vmatprep.subr.bf16.mxu0 0
  %1540 = vmatpush1.bf16.msra.mxu0 0
  %1541 = vmatprep.mubr.bf16.mxu0 0
  %1542 = vmatmul.mubr.bf16.gmra.mrb[0].mxu0 %v1498
  %v1543 = vpop.f32.mrb[0].mxu0
  %v1544 = vadd.f32 0.0, %v1543
  %v1545 = vpop.f32.mrb[0].mxu0
  %v1546 = vadd.f32 0.0, %v1545
  %v1547 = vpop.f32.mrb[0].mxu0
  %v1548 = vadd.f32 0.0, %v1547
  %v1549 = vpop.f32.mrb[0].mxu0
  %v1550 = vadd.f32 0.0, %v1549
  %1551 = vmatprep.mubr.bf16.mxu0 0
  %1552 = vmatmul.mubr.bf16.gmra.mrb[0].mxu0 %v1501
  %v1553 = vpop.f32.mrb[0].mxu0
  %v1554 = vadd.f32 0.0, %v1553
  %v1555 = vpop.f32.mrb[0].mxu0
  %v1556 = vadd.f32 0.0, %v1555
  %v1557 = vpop.f32.mrb[0].mxu0
  %v1558 = vadd.f32 0.0, %v1557
  %v1559 = vpop.f32.mrb[0].mxu0
  %v1560 = vadd.f32 0.0, %v1559
  %1561 = vmatprep.mubr.bf16.mxu0 0
  %1562 = vmatmul.mubr.bf16.gmra.mrb[0].mxu0 %v1504
  %v1563 = vpop.f32.mrb[0].mxu0
  %v1564 = vadd.f32 0.0, %v1563
  %v1565 = vpop.f32.mrb[0].mxu0
  %v1566 = vadd.f32 0.0, %v1565
  %v1567 = vpop.f32.mrb[0].mxu0
  %v1568 = vadd.f32 0.0, %v1567
  %v1569 = vpop.f32.mrb[0].mxu0
  %v1570 = vadd.f32 0.0, %v1569
  %1571 = vmatprep.mubr.bf16.mxu0 0
  %1572 = vmatmul.mubr.bf16.gmra.mrb[0].mxu0 %v1507
  %v1573 = vpop.f32.mrb[0].mxu0
  %v1574 = vadd.f32 0.0, %v1573
  %v1575 = vpop.f32.mrb[0].mxu0
  %v1576 = vadd.f32 0.0, %v1575
  %v1577 = vpop.f32.mrb[0].mxu0
  %v1578 = vadd.f32 0.0, %v1577
  %v1579 = vpop.f32.mrb[0].mxu0
  %v1580 = vadd.f32 0.0, %v1579
  %1581 = vdwg.mxu0
  %v1582 = vadd.f32 %v1413, %v1544
  %v1583 = vadd.f32 %v1414, %v1546
  %v1584 = vadd.f32 %v1415, %v1548
  %v1585 = vadd.f32 %v1416, %v1550
  %v1586 = vadd.f32 %v1417, %v1554
  %v1587 = vadd.f32 %v1418, %v1556
  %v1588 = vadd.f32 %v1419, %v1558
  %v1589 = vadd.f32 %v1420, %v1560
  %v1590 = vadd.f32 %v1421, %v1564
  %v1591 = vadd.f32 %v1422, %v1566
  %v1592 = vadd.f32 %v1423, %v1568
  %v1593 = vadd.f32 %v1424, %v1570
  %v1594 = vadd.f32 %v1425, %v1574
  %v1595 = vadd.f32 %v1426, %v1576
  %v1596 = vadd.f32 %v1427, %v1578
  %v1597 = vadd.f32 %v1428, %v1580
  %v1598 = vadd.f32 %v1582, %v1066
  %v1599 = vadd.f32 %v1583, %v1070
  %v1600 = vadd.f32 %v1584, %v1066
  %v1601 = vadd.f32 %v1585, %v1070
  %v1602 = vadd.f32 %v1586, %v1066
  %v1603 = vadd.f32 %v1587, %v1070
  %v1604 = vadd.f32 %v1588, %v1066
  %v1605 = vadd.f32 %v1589, %v1070
  %v1606 = vadd.f32 %v1590, %v1066
  %v1607 = vadd.f32 %v1591, %v1070
  %v1608 = vadd.f32 %v1592, %v1066
  %v1609 = vadd.f32 %v1593, %v1070
  %v1610 = vadd.f32 %v1594, %v1066
  %v1611 = vadd.f32 %v1595, %v1070
  %v1612 = vadd.f32 %v1596, %v1066
  %v1613 = vadd.f32 %v1597, %v1070
  %v1614 = vmax.f32 %v1598, 0.0
  %v1615 = vmax.f32 %v1599, 0.0
  %v1616 = vmax.f32 %v1600, 0.0
  %v1617 = vmax.f32 %v1601, 0.0
  %v1618 = vmax.f32 %v1602, 0.0
  %v1619 = vmax.f32 %v1603, 0.0
  %v1620 = vmax.f32 %v1604, 0.0
  %v1621 = vmax.f32 %v1605, 0.0
  %v1622 = vmax.f32 %v1606, 0.0
  %v1623 = vmax.f32 %v1607, 0.0
  %v1624 = vmax.f32 %v1608, 0.0
  %v1625 = vmax.f32 %v1609, 0.0
  %v1626 = vmax.f32 %v1610, 0.0
  %v1627 = vmax.f32 %v1611, 0.0
  %v1628 = vmax.f32 %v1612, 0.0
  %v1629 = vmax.f32 %v1613, 0.0
  %v1630 = vmax.f32 %v1089, %v1614
  %v1631 = vmax.f32 %v1090, %v1615
  %v1632 = vmax.f32 %v1091, %v1616
  %v1633 = vmax.f32 %v1092, %v1617
  %v1634 = vmax.f32 %v1093, %v1618
  %v1635 = vmax.f32 %v1094, %v1619
  %v1636 = vmax.f32 %v1095, %v1620
  %v1637 = vmax.f32 %v1096, %v1621
  %v1638 = vmax.f32 %v1097, %v1622
  %v1639 = vmax.f32 %v1098, %v1623
  %v1640 = vmax.f32 %v1099, %v1624
  %v1641 = vmax.f32 %v1100, %v1625
  %v1642 = vmax.f32 %v1101, %v1626
  %v1643 = vmax.f32 %v1102, %v1627
  %v1644 = vmax.f32 %v1103, %v1628
  %v1645 = vmax.f32 %v1104, %v1629
  %v1646 = vmax.f32 %v1630, %v1631
  %v1647 = vmax.f32 %v1632, %v1633
  %v1648 = vmax.f32 %v1634, %v1635
  %v1649 = vmax.f32 %v1636, %v1637
  %v1650 = vmax.f32 %v1638, %v1639
  %v1651 = vmax.f32 %v1640, %v1641
  %v1652 = vmax.f32 %v1642, %v1643
  %v1653 = vmax.f32 %v1644, %v1645
  %v1654 = vpack.c.bf16 %v1647, %v1646
  %v1655 = vpack.c.bf16 %v1649, %v1648
  %v1656 = vpack.c.bf16 %v1651, %v1650
  %v1657 = vpack.c.bf16 %v1653, %v1652
  %1658 = vmatprep.subr.bf16.mxu0 %v138
  %1659 = vmatpush1.bf16.msra.mxu0 %v137
  %1660 = vmatprep.subr.bf16.mxu0 %v140
  %1661 = vmatpush1.bf16.msra.mxu0 %v139
  %1662 = vmatprep.subr.bf16.mxu0 %v142
  %1663 = vmatpush1.bf16.msra.mxu0 %v141
  %1664 = vmatprep.subr.bf16.mxu0 %v144
  %1665 = vmatpush1.bf16.msra.mxu0 %v143
  %1666 = vmatprep.subr.bf16.mxu0 %v146
  %1667 = vmatpush1.bf16.msra.mxu0 %v145
  %1668 = vmatprep.subr.bf16.mxu0 %v148
  %1669 = vmatpush1.bf16.msra.mxu0 %v147
  %1670 = vmatprep.subr.bf16.mxu0 0
  %1671 = vmatpush1.bf16.msra.mxu0 0
  %1672 = vmatprep.subr.bf16.mxu0 0
  %1673 = vmatpush1.bf16.msra.mxu0 0
  %1674 = vmatprep.subr.bf16.mxu0 0
  %1675 = vmatpush1.bf16.msra.mxu0 0
  %1676 = vmatprep.subr.bf16.mxu0 0
  %1677 = vmatpush1.bf16.msra.mxu0 0
  %1678 = vmatprep.subr.bf16.mxu0 0
  %1679 = vmatpush1.bf16.msra.mxu0 0
  %1680 = vmatprep.subr.bf16.mxu0 0
  %1681 = vmatpush1.bf16.msra.mxu0 0
  %1682 = vmatprep.subr.bf16.mxu0 0
  %1683 = vmatpush1.bf16.msra.mxu0 0
  %1684 = vmatprep.subr.bf16.mxu0 0
  %1685 = vmatpush1.bf16.msra.mxu0 0
  %1686 = vmatprep.subr.bf16.mxu0 0
  %1687 = vmatpush1.bf16.msra.mxu0 0
  %1688 = vmatprep.subr.bf16.mxu0 0
  %1689 = vmatpush1.bf16.msra.mxu0 0
  %1690 = vmatprep.mubr.bf16.mxu0 0
  %1691 = vmatmul.mubr.bf16.gmra.mrb[0].mxu0 %v718
  %v1692 = vpop.f32.mrb[0].mxu0
  %v1693 = vadd.f32 0.0, %v1692
  %v1694 = vpop.f32.mrb[0].mxu0
  %v1695 = vadd.f32 0.0, %v1694
  %v1696 = vpop.f32.mrb[0].mxu0
  %v1697 = vadd.f32 0.0, %v1696
  %v1698 = vpop.f32.mrb[0].mxu0
  %v1699 = vadd.f32 0.0, %v1698
  %1700 = vmatprep.mubr.bf16.mxu0 0
  %1701 = vmatmul.mubr.bf16.gmra.mrb[0].mxu0 %v721
  %v1702 = vpop.f32.mrb[0].mxu0
  %v1703 = vadd.f32 0.0, %v1702
  %v1704 = vpop.f32.mrb[0].mxu0
  %v1705 = vadd.f32 0.0, %v1704
  %v1706 = vpop.f32.mrb[0].mxu0
  %v1707 = vadd.f32 0.0, %v1706
  %v1708 = vpop.f32.mrb[0].mxu0
  %v1709 = vadd.f32 0.0, %v1708
  %1710 = vmatprep.mubr.bf16.mxu0 0
  %1711 = vmatmul.mubr.bf16.gmra.mrb[0].mxu0 %v724
  %v1712 = vpop.f32.mrb[0].mxu0
  %v1713 = vadd.f32 0.0, %v1712
  %v1714 = vpop.f32.mrb[0].mxu0
  %v1715 = vadd.f32 0.0, %v1714
  %v1716 = vpop.f32.mrb[0].mxu0
  %v1717 = vadd.f32 0.0, %v1716
  %v1718 = vpop.f32.mrb[0].mxu0
  %v1719 = vadd.f32 0.0, %v1718
  %1720 = vmatprep.mubr.bf16.mxu0 0
  %1721 = vmatmul.mubr.bf16.gmra.mrb[0].mxu0 %v727
  %v1722 = vpop.f32.mrb[0].mxu0
  %v1723 = vadd.f32 0.0, %v1722
  %v1724 = vpop.f32.mrb[0].mxu0
  %v1725 = vadd.f32 0.0, %v1724
  %v1726 = vpop.f32.mrb[0].mxu0
  %v1727 = vadd.f32 0.0, %v1726
  %v1728 = vpop.f32.mrb[0].mxu0
  %v1729 = vadd.f32 0.0, %v1728
  %1730 = vdwg.mxu0
  %1731 = vmatprep.subr.bf16.mxu0 %v304
  %1732 = vmatpush1.bf16.msra.mxu0 %v303
  %1733 = vmatprep.subr.bf16.mxu0 %v306
  %1734 = vmatpush1.bf16.msra.mxu0 %v305
  %1735 = vmatprep.subr.bf16.mxu0 %v308
  %1736 = vmatpush1.bf16.msra.mxu0 %v307
  %1737 = vmatprep.subr.bf16.mxu0 %v310
  %1738 = vmatpush1.bf16.msra.mxu0 %v309
  %1739 = vmatprep.subr.bf16.mxu0 %v312
  %1740 = vmatpush1.bf16.msra.mxu0 %v311
  %1741 = vmatprep.subr.bf16.mxu0 %v314
  %1742 = vmatpush1.bf16.msra.mxu0 %v313
  %1743 = vmatprep.subr.bf16.mxu0 0
  %1744 = vmatpush1.bf16.msra.mxu0 0
  %1745 = vmatprep.subr.bf16.mxu0 0
  %1746 = vmatpush1.bf16.msra.mxu0 0
  %1747 = vmatprep.subr.bf16.mxu0 0
  %1748 = vmatpush1.bf16.msra.mxu0 0
  %1749 = vmatprep.subr.bf16.mxu0 0
  %1750 = vmatpush1.bf16.msra.mxu0 0
  %1751 = vmatprep.subr.bf16.mxu0 0
  %1752 = vmatpush1.bf16.msra.mxu0 0
  %1753 = vmatprep.subr.bf16.mxu0 0
  %1754 = vmatpush1.bf16.msra.mxu0 0
  %1755 = vmatprep.subr.bf16.mxu0 0
  %1756 = vmatpush1.bf16.msra.mxu0 0
  %1757 = vmatprep.subr.bf16.mxu0 0
  %1758 = vmatpush1.bf16.msra.mxu0 0
  %1759 = vmatprep.subr.bf16.mxu0 0
  %1760 = vmatpush1.bf16.msra.mxu0 0
  %1761 = vmatprep.subr.bf16.mxu0 0
  %1762 = vmatpush1.bf16.msra.mxu0 0
  %1763 = vmatprep.mubr.bf16.mxu0 0
  %1764 = vmatmul.mubr.bf16.gmra.mrb[0].mxu0 %v515
  %v1765 = vpop.f32.mrb[0].mxu0
  %v1766 = vadd.f32 %v1693, %v1765
  %v1767 = vpop.f32.mrb[0].mxu0
  %v1768 = vadd.f32 %v1695, %v1767
  %v1769 = vpop.f32.mrb[0].mxu0
  %v1770 = vadd.f32 %v1697, %v1769
  %v1771 = vpop.f32.mrb[0].mxu0
  %v1772 = vadd.f32 %v1699, %v1771
  %1773 = vmatprep.mubr.bf16.mxu0 0
  %1774 = vmatmul.mubr.bf16.gmra.mrb[0].mxu0 %v518
  %v1775 = vpop.f32.mrb[0].mxu0
  %v1776 = vadd.f32 %v1703, %v1775
  %v1777 = vpop.f32.mrb[0].mxu0
  %v1778 = vadd.f32 %v1705, %v1777
  %v1779 = vpop.f32.mrb[0].mxu0
  %v1780 = vadd.f32 %v1707, %v1779
  %v1781 = vpop.f32.mrb[0].mxu0
  %v1782 = vadd.f32 %v1709, %v1781
  %1783 = vmatprep.mubr.bf16.mxu0 0
  %1784 = vmatmul.mubr.bf16.gmra.mrb[0].mxu0 %v521
  %v1785 = vpop.f32.mrb[0].mxu0
  %v1786 = vadd.f32 %v1713, %v1785
  %v1787 = vpop.f32.mrb[0].mxu0
  %v1788 = vadd.f32 %v1715, %v1787
  %v1789 = vpop.f32.mrb[0].mxu0
  %v1790 = vadd.f32 %v1717, %v1789
  %v1791 = vpop.f32.mrb[0].mxu0
  %v1792 = vadd.f32 %v1719, %v1791
  %1793 = vmatprep.mubr.bf16.mxu0 0
  %1794 = vmatmul.mubr.bf16.gmra.mrb[0].mxu0 %v524
  %v1795 = vpop.f32.mrb[0].mxu0
  %v1796 = vadd.f32 %v1723, %v1795
  %v1797 = vpop.f32.mrb[0].mxu0
  %v1798 = vadd.f32 %v1725, %v1797
  %v1799 = vpop.f32.mrb[0].mxu0
  %v1800 = vadd.f32 %v1727, %v1799
  %v1801 = vpop.f32.mrb[0].mxu0
  %v1802 = vadd.f32 %v1729, %v1801
  %1803 = vdwg.mxu0
  %1804 = vmatprep.subr.bf16.mxu0 %v491
  %1805 = vmatpush1.bf16.msra.mxu0 %v490
  %1806 = vmatprep.subr.bf16.mxu0 %v493
  %1807 = vmatpush1.bf16.msra.mxu0 %v492
  %1808 = vmatprep.subr.bf16.mxu0 %v495
  %1809 = vmatpush1.bf16.msra.mxu0 %v494
  %1810 = vmatprep.subr.bf16.mxu0 %v497
  %1811 = vmatpush1.bf16.msra.mxu0 %v496
  %1812 = vmatprep.subr.bf16.mxu0 %v499
  %1813 = vmatpush1.bf16.msra.mxu0 %v498
  %1814 = vmatprep.subr.bf16.mxu0 %v501
  %1815 = vmatpush1.bf16.msra.mxu0 %v500
  %1816 = vmatprep.subr.bf16.mxu0 0
  %1817 = vmatpush1.bf16.msra.mxu0 0
  %1818 = vmatprep.subr.bf16.mxu0 0
  %1819 = vmatpush1.bf16.msra.mxu0 0
  %1820 = vmatprep.subr.bf16.mxu0 0
  %1821 = vmatpush1.bf16.msra.mxu0 0
  %1822 = vmatprep.subr.bf16.mxu0 0
  %1823 = vmatpush1.bf16.msra.mxu0 0
  %1824 = vmatprep.subr.bf16.mxu0 0
  %1825 = vmatpush1.bf16.msra.mxu0 0
  %1826 = vmatprep.subr.bf16.mxu0 0
  %1827 = vmatpush1.bf16.msra.mxu0 0
  %1828 = vmatprep.subr.bf16.mxu0 0
  %1829 = vmatpush1.bf16.msra.mxu0 0
  %1830 = vmatprep.subr.bf16.mxu0 0
  %1831 = vmatpush1.bf16.msra.mxu0 0
  %1832 = vmatprep.subr.bf16.mxu0 0
  %1833 = vmatpush1.bf16.msra.mxu0 0
  %1834 = vmatprep.subr.bf16.mxu0 0
  %1835 = vmatpush1.bf16.msra.mxu0 0
  %1836 = vmatprep.mubr.bf16.mxu0 0
  %1837 = vmatmul.mubr.bf16.gmra.mrb[0].mxu0 %v961
  %v1838 = vpop.f32.mrb[0].mxu0
  %v1839 = vadd.f32 0.0, %v1838
  %v1840 = vpop.f32.mrb[0].mxu0
  %v1841 = vadd.f32 0.0, %v1840
  %v1842 = vpop.f32.mrb[0].mxu0
  %v1843 = vadd.f32 0.0, %v1842
  %v1844 = vpop.f32.mrb[0].mxu0
  %v1845 = vadd.f32 0.0, %v1844
  %1846 = vmatprep.mubr.bf16.mxu0 0
  %1847 = vmatmul.mubr.bf16.gmra.mrb[0].mxu0 %v964
  %v1848 = vpop.f32.mrb[0].mxu0
  %v1849 = vadd.f32 0.0, %v1848
  %v1850 = vpop.f32.mrb[0].mxu0
  %v1851 = vadd.f32 0.0, %v1850
  %v1852 = vpop.f32.mrb[0].mxu0
  %v1853 = vadd.f32 0.0, %v1852
  %v1854 = vpop.f32.mrb[0].mxu0
  %v1855 = vadd.f32 0.0, %v1854
  %1856 = vmatprep.mubr.bf16.mxu0 0
  %1857 = vmatmul.mubr.bf16.gmra.mrb[0].mxu0 %v967
  %v1858 = vpop.f32.mrb[0].mxu0
  %v1859 = vadd.f32 0.0, %v1858
  %v1860 = vpop.f32.mrb[0].mxu0
  %v1861 = vadd.f32 0.0, %v1860
  %v1862 = vpop.f32.mrb[0].mxu0
  %v1863 = vadd.f32 0.0, %v1862
  %v1864 = vpop.f32.mrb[0].mxu0
  %v1865 = vadd.f32 0.0, %v1864
  %1866 = vmatprep.mubr.bf16.mxu0 0
  %1867 = vmatmul.mubr.bf16.gmra.mrb[0].mxu0 %v970
  %v1868 = vpop.f32.mrb[0].mxu0
  %v1869 = vadd.f32 0.0, %v1868
  %v1870 = vpop.f32.mrb[0].mxu0
  %v1871 = vadd.f32 0.0, %v1870
  %v1872 = vpop.f32.mrb[0].mxu0
  %v1873 = vadd.f32 0.0, %v1872
  %v1874 = vpop.f32.mrb[0].mxu0
  %v1875 = vadd.f32 0.0, %v1874
  %1876 = vdwg.mxu0
  %v1877 = vadd.f32 %v1766, %v1839
  %v1878 = vadd.f32 %v1768, %v1841
  %v1879 = vadd.f32 %v1770, %v1843
  %v1880 = vadd.f32 %v1772, %v1845
  %v1881 = vadd.f32 %v1776, %v1849
  %v1882 = vadd.f32 %v1778, %v1851
  %v1883 = vadd.f32 %v1780, %v1853
  %v1884 = vadd.f32 %v1782, %v1855
  %v1885 = vadd.f32 %v1786, %v1859
  %v1886 = vadd.f32 %v1788, %v1861
  %v1887 = vadd.f32 %v1790, %v1863
  %v1888 = vadd.f32 %v1792, %v1865
  %v1889 = vadd.f32 %v1796, %v1869
  %v1890 = vadd.f32 %v1798, %v1871
  %v1891 = vadd.f32 %v1800, %v1873
  %v1892 = vadd.f32 %v1802, %v1875
  %1893 = vmatprep.subr.bf16.mxu0 %v694
  %1894 = vmatpush1.bf16.msra.mxu0 %v693
  %1895 = vmatprep.subr.bf16.mxu0 %v696
  %1896 = vmatpush1.bf16.msra.mxu0 %v695
  %1897 = vmatprep.subr.bf16.mxu0 %v698
  %1898 = vmatpush1.bf16.msra.mxu0 %v697
  %1899 = vmatprep.subr.bf16.mxu0 %v700
  %1900 = vmatpush1.bf16.msra.mxu0 %v699
  %1901 = vmatprep.subr.bf16.mxu0 %v702
  %1902 = vmatpush1.bf16.msra.mxu0 %v701
  %1903 = vmatprep.subr.bf16.mxu0 %v704
  %1904 = vmatpush1.bf16.msra.mxu0 %v703
  %1905 = vmatprep.subr.bf16.mxu0 0
  %1906 = vmatpush1.bf16.msra.mxu0 0
  %1907 = vmatprep.subr.bf16.mxu0 0
  %1908 = vmatpush1.bf16.msra.mxu0 0
  %1909 = vmatprep.subr.bf16.mxu0 0
  %1910 = vmatpush1.bf16.msra.mxu0 0
  %1911 = vmatprep.subr.bf16.mxu0 0
  %1912 = vmatpush1.bf16.msra.mxu0 0
  %1913 = vmatprep.subr.bf16.mxu0 0
  %1914 = vmatpush1.bf16.msra.mxu0 0
  %1915 = vmatprep.subr.bf16.mxu0 0
  %1916 = vmatpush1.bf16.msra.mxu0 0
  %1917 = vmatprep.subr.bf16.mxu0 0
  %1918 = vmatpush1.bf16.msra.mxu0 0
  %1919 = vmatprep.subr.bf16.mxu0 0
  %1920 = vmatpush1.bf16.msra.mxu0 0
  %1921 = vmatprep.subr.bf16.mxu0 0
  %1922 = vmatpush1.bf16.msra.mxu0 0
  %1923 = vmatprep.subr.bf16.mxu0 0
  %1924 = vmatpush1.bf16.msra.mxu0 0
  %1925 = vmatprep.mubr.bf16.mxu0 0
  %1926 = vmatmul.mubr.bf16.gmra.mrb[0].mxu0 %v1498
  %v1927 = vpop.f32.mrb[0].mxu0
  %v1928 = vadd.f32 0.0, %v1927
  %v1929 = vpop.f32.mrb[0].mxu0
  %v1930 = vadd.f32 0.0, %v1929
  %v1931 = vpop.f32.mrb[0].mxu0
  %v1932 = vadd.f32 0.0, %v1931
  %v1933 = vpop.f32.mrb[0].mxu0
  %v1934 = vadd.f32 0.0, %v1933
  %1935 = vmatprep.mubr.bf16.mxu0 0
  %1936 = vmatmul.mubr.bf16.gmra.mrb[0].mxu0 %v1501
  %v1937 = vpop.f32.mrb[0].mxu0
  %v1938 = vadd.f32 0.0, %v1937
  %v1939 = vpop.f32.mrb[0].mxu0
  %v1940 = vadd.f32 0.0, %v1939
  %v1941 = vpop.f32.mrb[0].mxu0
  %v1942 = vadd.f32 0.0, %v1941
  %v1943 = vpop.f32.mrb[0].mxu0
  %v1944 = vadd.f32 0.0, %v1943
  %1945 = vmatprep.mubr.bf16.mxu0 0
  %1946 = vmatmul.mubr.bf16.gmra.mrb[0].mxu0 %v1504
  %v1947 = vpop.f32.mrb[0].mxu0
  %v1948 = vadd.f32 0.0, %v1947
  %v1949 = vpop.f32.mrb[0].mxu0
  %v1950 = vadd.f32 0.0, %v1949
  %v1951 = vpop.f32.mrb[0].mxu0
  %v1952 = vadd.f32 0.0, %v1951
  %v1953 = vpop.f32.mrb[0].mxu0
  %v1954 = vadd.f32 0.0, %v1953
  %1955 = vmatprep.mubr.bf16.mxu0 0
  %1956 = vmatmul.mubr.bf16.gmra.mrb[0].mxu0 %v1507
  %v1957 = vpop.f32.mrb[0].mxu0
  %v1958 = vadd.f32 0.0, %v1957
  %v1959 = vpop.f32.mrb[0].mxu0
  %v1960 = vadd.f32 0.0, %v1959
  %v1961 = vpop.f32.mrb[0].mxu0
  %v1962 = vadd.f32 0.0, %v1961
  %v1963 = vpop.f32.mrb[0].mxu0
  %v1964 = vadd.f32 0.0, %v1963
  %1965 = vdwg.mxu0
  %v1966 = vadd.f32 %v1877, %v1928
  %v1967 = vadd.f32 %v1878, %v1930
  %v1968 = vadd.f32 %v1879, %v1932
  %v1969 = vadd.f32 %v1880, %v1934
  %v1970 = vadd.f32 %v1881, %v1938
  %v1971 = vadd.f32 %v1882, %v1940
  %v1972 = vadd.f32 %v1883, %v1942
  %v1973 = vadd.f32 %v1884, %v1944
  %v1974 = vadd.f32 %v1885, %v1948
  %v1975 = vadd.f32 %v1886, %v1950
  %v1976 = vadd.f32 %v1887, %v1952
  %v1977 = vadd.f32 %v1888, %v1954
  %v1978 = vadd.f32 %v1889, %v1958
  %v1979 = vadd.f32 %v1890, %v1960
  %v1980 = vadd.f32 %v1891, %v1962
  %v1981 = vadd.f32 %v1892, %v1964
  %v1982 = vld [vmem:[%s412] sm:$0xf]
  %v1983 = vld [vmem:[%s412 + $0x4] sm:$0xf]
  %v1984 = vld [vmem:[%s412 + $0x8] sm:$0xf]
  %v1985 = vld [vmem:[%s412 + $0xc] sm:$0xf]
  %v1986 = vld [vmem:[%s412 + $0x10] sm:$0xf]
  %v1987 = vld [vmem:[%s412 + $0x14] sm:$0xf]
  %v1988 = vld [vmem:[%s412 + $0x18] sm:$0xf]
  %v1989 = vld [vmem:[%s412 + $0x1c] sm:$0xf]
  %v1990 = vld [vmem:[%s412 + $0x20] sm:$0x1]
  %v2000 = vunpack.c.l.b16 %v1982
  %v2001 = vunpack.c.l.b16 %v1983
  %v2002 = vunpack.c.l.b16 %v1984
  %v2003 = vunpack.c.l.b16 %v1985
  %v2004 = vunpack.c.l.b16 %v1986
  %v2005 = vunpack.c.l.b16 %v1987
  %v2006 = vunpack.c.l.b16 %v1988
  %v2007 = vunpack.c.l.b16 %v1989
  %v2008 = vunpack.c.l.b16 %v1990
  %v2009 = vpack.c.b16 %v2001, %v2000
  %v2010 = vpack.c.b16 %v2003, %v2002
  %v2011 = vpack.c.b16 %v2005, %v2004
  %v2012 = vpack.c.b16 %v2007, %v2006
  %v2013 = vpack.c.b16 %v2008, %v2008
  %v2015 = vshrl.u32 %v2009, 16
  %v2017 = vshll.u32 %v2009, 16
  %v2019 = vrot.slane %v2017, 1
  %v2020 = vor.u32 %v2015, %v2019
  %v2022 = vshll.u32 %v2010, 16
  %v2024 = vrot.slane %v2022, 1
  %v2025 = vsel %vm863, %v2020, %v2024
  %v2026 = vshrl.u32 %v2010, 16
  %v2028 = vor.u32 %v2026, %v2024
  %v2030 = vshll.u32 %v2011, 16
  %v2032 = vrot.slane %v2030, 1
  %v2033 = vsel %vm863, %v2028, %v2032
  %v2034 = vshrl.u32 %v2011, 16
  %v2036 = vor.u32 %v2034, %v2032
  %v2038 = vshll.u32 %v2012, 16
  %v2040 = vrot.slane %v2038, 1
  %v2041 = vsel %vm863, %v2036, %v2040
  %v2042 = vshrl.u32 %v2012, 16
  %v2044 = vor.u32 %v2042, %v2040
  %v2046 = vshll.u32 %v2013, 16
  %v2048 = vrot.slane %v2046, 1
  %v2049 = vsel %vm863, %v2044, %v2048
  %v2051 = vsel %vm161, %v2025, 0
  %v2054 = vsel %vm161, %v2033, 0
  %v2057 = vsel %vm161, %v2041, 0
  %v2060 = vsel %vm161, %v2049, 0
  %2062 = vmatprep.subr.bf16.mxu0 %v937
  %2063 = vmatpush1.bf16.msra.mxu0 %v936
  %2064 = vmatprep.subr.bf16.mxu0 %v939
  %2065 = vmatpush1.bf16.msra.mxu0 %v938
  %2066 = vmatprep.subr.bf16.mxu0 %v941
  %2067 = vmatpush1.bf16.msra.mxu0 %v940
  %2068 = vmatprep.subr.bf16.mxu0 %v943
  %2069 = vmatpush1.bf16.msra.mxu0 %v942
  %2070 = vmatprep.subr.bf16.mxu0 %v945
  %2071 = vmatpush1.bf16.msra.mxu0 %v944
  %2072 = vmatprep.subr.bf16.mxu0 %v947
  %2073 = vmatpush1.bf16.msra.mxu0 %v946
  %2074 = vmatprep.subr.bf16.mxu0 0
  %2075 = vmatpush1.bf16.msra.mxu0 0
  %2076 = vmatprep.subr.bf16.mxu0 0
  %2077 = vmatpush1.bf16.msra.mxu0 0
  %2078 = vmatprep.subr.bf16.mxu0 0
  %2079 = vmatpush1.bf16.msra.mxu0 0
  %2080 = vmatprep.subr.bf16.mxu0 0
  %2081 = vmatpush1.bf16.msra.mxu0 0
  %2082 = vmatprep.subr.bf16.mxu0 0
  %2083 = vmatpush1.bf16.msra.mxu0 0
  %2084 = vmatprep.subr.bf16.mxu0 0
  %2085 = vmatpush1.bf16.msra.mxu0 0
  %2086 = vmatprep.subr.bf16.mxu0 0
  %2087 = vmatpush1.bf16.msra.mxu0 0
  %2088 = vmatprep.subr.bf16.mxu0 0
  %2089 = vmatpush1.bf16.msra.mxu0 0
  %2090 = vmatprep.subr.bf16.mxu0 0
  %2091 = vmatpush1.bf16.msra.mxu0 0
  %2092 = vmatprep.subr.bf16.mxu0 0
  %2093 = vmatpush1.bf16.msra.mxu0 0
  %2094 = vmatprep.mubr.bf16.mxu0 0
  %2095 = vmatmul.mubr.bf16.gmra.mrb[0].mxu0 %v2051
  %v2096 = vpop.f32.mrb[0].mxu0
  %v2097 = vadd.f32 0.0, %v2096
  %v2098 = vpop.f32.mrb[0].mxu0
  %v2099 = vadd.f32 0.0, %v2098
  %v2100 = vpop.f32.mrb[0].mxu0
  %v2101 = vadd.f32 0.0, %v2100
  %v2102 = vpop.f32.mrb[0].mxu0
  %v2103 = vadd.f32 0.0, %v2102
  %2104 = vmatprep.mubr.bf16.mxu0 0
  %2105 = vmatmul.mubr.bf16.gmra.mrb[0].mxu0 %v2054
  %v2106 = vpop.f32.mrb[0].mxu0
  %v2107 = vadd.f32 0.0, %v2106
  %v2108 = vpop.f32.mrb[0].mxu0
  %v2109 = vadd.f32 0.0, %v2108
  %v2110 = vpop.f32.mrb[0].mxu0
  %v2111 = vadd.f32 0.0, %v2110
  %v2112 = vpop.f32.mrb[0].mxu0
  %v2113 = vadd.f32 0.0, %v2112
  %2114 = vmatprep.mubr.bf16.mxu0 0
  %2115 = vmatmul.mubr.bf16.gmra.mrb[0].mxu0 %v2057
  %v2116 = vpop.f32.mrb[0].mxu0
  %v2117 = vadd.f32 0.0, %v2116
  %v2118 = vpop.f32.mrb[0].mxu0
  %v2119 = vadd.f32 0.0, %v2118
  %v2120 = vpop.f32.mrb[0].mxu0
  %v2121 = vadd.f32 0.0, %v2120
  %v2122 = vpop.f32.mrb[0].mxu0
  %v2123 = vadd.f32 0.0, %v2122
  %2124 = vmatprep.mubr.bf16.mxu0 0
  %2125 = vmatmul.mubr.bf16.gmra.mrb[0].mxu0 %v2060
  %v2126 = vpop.f32.mrb[0].mxu0
  %v2127 = vadd.f32 0.0, %v2126
  %v2128 = vpop.f32.mrb[0].mxu0
  %v2129 = vadd.f32 0.0, %v2128
  %v2130 = vpop.f32.mrb[0].mxu0
  %v2131 = vadd.f32 0.0, %v2130
  %v2132 = vpop.f32.mrb[0].mxu0
  %v2133 = vadd.f32 0.0, %v2132
  %2134 = vdwg.mxu0
  %v2135 = vadd.f32 %v1966, %v2097
  %v2136 = vadd.f32 %v1967, %v2099
  %v2137 = vadd.f32 %v1968, %v2101
  %v2138 = vadd.f32 %v1969, %v2103
  %v2139 = vadd.f32 %v1970, %v2107
  %v2140 = vadd.f32 %v1971, %v2109
  %v2141 = vadd.f32 %v1972, %v2111
  %v2142 = vadd.f32 %v1973, %v2113
  %v2143 = vadd.f32 %v1974, %v2117
  %v2144 = vadd.f32 %v1975, %v2119
  %v2145 = vadd.f32 %v1976, %v2121
  %v2146 = vadd.f32 %v1977, %v2123
  %v2147 = vadd.f32 %v1978, %v2127
  %v2148 = vadd.f32 %v1979, %v2129
  %v2149 = vadd.f32 %v1980, %v2131
  %v2150 = vadd.f32 %v1981, %v2133
  %v2151 = vadd.f32 %v2135, %v1066
  %v2152 = vadd.f32 %v2136, %v1070
  %v2153 = vadd.f32 %v2137, %v1066
  %v2154 = vadd.f32 %v2138, %v1070
  %v2155 = vadd.f32 %v2139, %v1066
  %v2156 = vadd.f32 %v2140, %v1070
  %v2157 = vadd.f32 %v2141, %v1066
  %v2158 = vadd.f32 %v2142, %v1070
  %v2159 = vadd.f32 %v2143, %v1066
  %v2160 = vadd.f32 %v2144, %v1070
  %v2161 = vadd.f32 %v2145, %v1066
  %v2162 = vadd.f32 %v2146, %v1070
  %v2163 = vadd.f32 %v2147, %v1066
  %v2164 = vadd.f32 %v2148, %v1070
  %v2165 = vadd.f32 %v2149, %v1066
  %v2166 = vadd.f32 %v2150, %v1070
  %v2167 = vmax.f32 %v2151, 0.0
  %v2168 = vmax.f32 %v2152, 0.0
  %v2169 = vmax.f32 %v2153, 0.0
  %v2170 = vmax.f32 %v2154, 0.0
  %v2171 = vmax.f32 %v2155, 0.0
  %v2172 = vmax.f32 %v2156, 0.0
  %v2173 = vmax.f32 %v2157, 0.0
  %v2174 = vmax.f32 %v2158, 0.0
  %v2175 = vmax.f32 %v2159, 0.0
  %v2176 = vmax.f32 %v2160, 0.0
  %v2177 = vmax.f32 %v2161, 0.0
  %v2178 = vmax.f32 %v2162, 0.0
  %v2179 = vmax.f32 %v2163, 0.0
  %v2180 = vmax.f32 %v2164, 0.0
  %v2181 = vmax.f32 %v2165, 0.0
  %v2182 = vmax.f32 %v2166, 0.0
  %2183 = vmatprep.subr.bf16.mxu0 %v138
  %2184 = vmatpush1.bf16.msra.mxu0 %v137
  %2185 = vmatprep.subr.bf16.mxu0 %v140
  %2186 = vmatpush1.bf16.msra.mxu0 %v139
  %2187 = vmatprep.subr.bf16.mxu0 %v142
  %2188 = vmatpush1.bf16.msra.mxu0 %v141
  %2189 = vmatprep.subr.bf16.mxu0 %v144
  %2190 = vmatpush1.bf16.msra.mxu0 %v143
  %2191 = vmatprep.subr.bf16.mxu0 %v146
  %2192 = vmatpush1.bf16.msra.mxu0 %v145
  %2193 = vmatprep.subr.bf16.mxu0 %v148
  %2194 = vmatpush1.bf16.msra.mxu0 %v147
  %2195 = vmatprep.subr.bf16.mxu0 0
  %2196 = vmatpush1.bf16.msra.mxu0 0
  %2197 = vmatprep.subr.bf16.mxu0 0
  %2198 = vmatpush1.bf16.msra.mxu0 0
  %2199 = vmatprep.subr.bf16.mxu0 0
  %2200 = vmatpush1.bf16.msra.mxu0 0
  %2201 = vmatprep.subr.bf16.mxu0 0
  %2202 = vmatpush1.bf16.msra.mxu0 0
  %2203 = vmatprep.subr.bf16.mxu0 0
  %2204 = vmatpush1.bf16.msra.mxu0 0
  %2205 = vmatprep.subr.bf16.mxu0 0
  %2206 = vmatpush1.bf16.msra.mxu0 0
  %2207 = vmatprep.subr.bf16.mxu0 0
  %2208 = vmatpush1.bf16.msra.mxu0 0
  %2209 = vmatprep.subr.bf16.mxu0 0
  %2210 = vmatpush1.bf16.msra.mxu0 0
  %2211 = vmatprep.subr.bf16.mxu0 0
  %2212 = vmatpush1.bf16.msra.mxu0 0
  %2213 = vmatprep.subr.bf16.mxu0 0
  %2214 = vmatpush1.bf16.msra.mxu0 0
  %2215 = vmatprep.mubr.bf16.mxu0 0
  %2216 = vmatmul.mubr.bf16.gmra.mrb[0].mxu0 %v961
  %v2217 = vpop.f32.mrb[0].mxu0
  %v2218 = vadd.f32 0.0, %v2217
  %v2219 = vpop.f32.mrb[0].mxu0
  %v2220 = vadd.f32 0.0, %v2219
  %v2221 = vpop.f32.mrb[0].mxu0
  %v2222 = vadd.f32 0.0, %v2221
  %v2223 = vpop.f32.mrb[0].mxu0
  %v2224 = vadd.f32 0.0, %v2223
  %2225 = vmatprep.mubr.bf16.mxu0 0
  %2226 = vmatmul.mubr.bf16.gmra.mrb[0].mxu0 %v964
  %v2227 = vpop.f32.mrb[0].mxu0
  %v2228 = vadd.f32 0.0, %v2227
  %v2229 = vpop.f32.mrb[0].mxu0
  %v2230 = vadd.f32 0.0, %v2229
  %v2231 = vpop.f32.mrb[0].mxu0
  %v2232 = vadd.f32 0.0, %v2231
  %v2233 = vpop.f32.mrb[0].mxu0
  %v2234 = vadd.f32 0.0, %v2233
  %2235 = vmatprep.mubr.bf16.mxu0 0
  %2236 = vmatmul.mubr.bf16.gmra.mrb[0].mxu0 %v967
  %v2237 = vpop.f32.mrb[0].mxu0
  %v2238 = vadd.f32 0.0, %v2237
  %v2239 = vpop.f32.mrb[0].mxu0
  %v2240 = vadd.f32 0.0, %v2239
  %v2241 = vpop.f32.mrb[0].mxu0
  %v2242 = vadd.f32 0.0, %v2241
  %v2243 = vpop.f32.mrb[0].mxu0
  %v2244 = vadd.f32 0.0, %v2243
  %2245 = vmatprep.mubr.bf16.mxu0 0
  %2246 = vmatmul.mubr.bf16.gmra.mrb[0].mxu0 %v970
  %v2247 = vpop.f32.mrb[0].mxu0
  %v2248 = vadd.f32 0.0, %v2247
  %v2249 = vpop.f32.mrb[0].mxu0
  %v2250 = vadd.f32 0.0, %v2249
  %v2251 = vpop.f32.mrb[0].mxu0
  %v2252 = vadd.f32 0.0, %v2251
  %v2253 = vpop.f32.mrb[0].mxu0
  %v2254 = vadd.f32 0.0, %v2253
  %2255 = vdwg.mxu0
  %2256 = vmatprep.subr.bf16.mxu0 %v304
  %2257 = vmatpush1.bf16.msra.mxu0 %v303
  %2258 = vmatprep.subr.bf16.mxu0 %v306
  %2259 = vmatpush1.bf16.msra.mxu0 %v305
  %2260 = vmatprep.subr.bf16.mxu0 %v308
  %2261 = vmatpush1.bf16.msra.mxu0 %v307
  %2262 = vmatprep.subr.bf16.mxu0 %v310
  %2263 = vmatpush1.bf16.msra.mxu0 %v309
  %2264 = vmatprep.subr.bf16.mxu0 %v312
  %2265 = vmatpush1.bf16.msra.mxu0 %v311
  %2266 = vmatprep.subr.bf16.mxu0 %v314
  %2267 = vmatpush1.bf16.msra.mxu0 %v313
  %2268 = vmatprep.subr.bf16.mxu0 0
  %2269 = vmatpush1.bf16.msra.mxu0 0
  %2270 = vmatprep.subr.bf16.mxu0 0
  %2271 = vmatpush1.bf16.msra.mxu0 0
  %2272 = vmatprep.subr.bf16.mxu0 0
  %2273 = vmatpush1.bf16.msra.mxu0 0
  %2274 = vmatprep.subr.bf16.mxu0 0
  %2275 = vmatpush1.bf16.msra.mxu0 0
  %2276 = vmatprep.subr.bf16.mxu0 0
  %2277 = vmatpush1.bf16.msra.mxu0 0
  %2278 = vmatprep.subr.bf16.mxu0 0
  %2279 = vmatpush1.bf16.msra.mxu0 0
  %2280 = vmatprep.subr.bf16.mxu0 0
  %2281 = vmatpush1.bf16.msra.mxu0 0
  %2282 = vmatprep.subr.bf16.mxu0 0
  %2283 = vmatpush1.bf16.msra.mxu0 0
  %2284 = vmatprep.subr.bf16.mxu0 0
  %2285 = vmatpush1.bf16.msra.mxu0 0
  %2286 = vmatprep.subr.bf16.mxu0 0
  %2287 = vmatpush1.bf16.msra.mxu0 0
  %2288 = vmatprep.mubr.bf16.mxu0 0
  %2289 = vmatmul.mubr.bf16.gmra.mrb[0].mxu0 %v718
  %v2290 = vpop.f32.mrb[0].mxu0
  %v2291 = vadd.f32 %v2218, %v2290
  %v2292 = vpop.f32.mrb[0].mxu0
  %v2293 = vadd.f32 %v2220, %v2292
  %v2294 = vpop.f32.mrb[0].mxu0
  %v2295 = vadd.f32 %v2222, %v2294
  %v2296 = vpop.f32.mrb[0].mxu0
  %v2297 = vadd.f32 %v2224, %v2296
  %2298 = vmatprep.mubr.bf16.mxu0 0
  %2299 = vmatmul.mubr.bf16.gmra.mrb[0].mxu0 %v721
  %v2300 = vpop.f32.mrb[0].mxu0
  %v2301 = vadd.f32 %v2228, %v2300
  %v2302 = vpop.f32.mrb[0].mxu0
  %v2303 = vadd.f32 %v2230, %v2302
  %v2304 = vpop.f32.mrb[0].mxu0
  %v2305 = vadd.f32 %v2232, %v2304
  %v2306 = vpop.f32.mrb[0].mxu0
  %v2307 = vadd.f32 %v2234, %v2306
  %2308 = vmatprep.mubr.bf16.mxu0 0
  %2309 = vmatmul.mubr.bf16.gmra.mrb[0].mxu0 %v724
  %v2310 = vpop.f32.mrb[0].mxu0
  %v2311 = vadd.f32 %v2238, %v2310
  %v2312 = vpop.f32.mrb[0].mxu0
  %v2313 = vadd.f32 %v2240, %v2312
  %v2314 = vpop.f32.mrb[0].mxu0
  %v2315 = vadd.f32 %v2242, %v2314
  %v2316 = vpop.f32.mrb[0].mxu0
  %v2317 = vadd.f32 %v2244, %v2316
  %2318 = vmatprep.mubr.bf16.mxu0 0
  %2319 = vmatmul.mubr.bf16.gmra.mrb[0].mxu0 %v727
  %v2320 = vpop.f32.mrb[0].mxu0
  %v2321 = vadd.f32 %v2248, %v2320
  %v2322 = vpop.f32.mrb[0].mxu0
  %v2323 = vadd.f32 %v2250, %v2322
  %v2324 = vpop.f32.mrb[0].mxu0
  %v2325 = vadd.f32 %v2252, %v2324
  %v2326 = vpop.f32.mrb[0].mxu0
  %v2327 = vadd.f32 %v2254, %v2326
  %2328 = vdwg.mxu0
  %2329 = vmatprep.subr.bf16.mxu0 %v491
  %2330 = vmatpush1.bf16.msra.mxu0 %v490
  %2331 = vmatprep.subr.bf16.mxu0 %v493
  %2332 = vmatpush1.bf16.msra.mxu0 %v492
  %2333 = vmatprep.subr.bf16.mxu0 %v495
  %2334 = vmatpush1.bf16.msra.mxu0 %v494
  %2335 = vmatprep.subr.bf16.mxu0 %v497
  %2336 = vmatpush1.bf16.msra.mxu0 %v496
  %2337 = vmatprep.subr.bf16.mxu0 %v499
  %2338 = vmatpush1.bf16.msra.mxu0 %v498
  %2339 = vmatprep.subr.bf16.mxu0 %v501
  %2340 = vmatpush1.bf16.msra.mxu0 %v500
  %2341 = vmatprep.subr.bf16.mxu0 0
  %2342 = vmatpush1.bf16.msra.mxu0 0
  %2343 = vmatprep.subr.bf16.mxu0 0
  %2344 = vmatpush1.bf16.msra.mxu0 0
  %2345 = vmatprep.subr.bf16.mxu0 0
  %2346 = vmatpush1.bf16.msra.mxu0 0
  %2347 = vmatprep.subr.bf16.mxu0 0
  %2348 = vmatpush1.bf16.msra.mxu0 0
  %2349 = vmatprep.subr.bf16.mxu0 0
  %2350 = vmatpush1.bf16.msra.mxu0 0
  %2351 = vmatprep.subr.bf16.mxu0 0
  %2352 = vmatpush1.bf16.msra.mxu0 0
  %2353 = vmatprep.subr.bf16.mxu0 0
  %2354 = vmatpush1.bf16.msra.mxu0 0
  %2355 = vmatprep.subr.bf16.mxu0 0
  %2356 = vmatpush1.bf16.msra.mxu0 0
  %2357 = vmatprep.subr.bf16.mxu0 0
  %2358 = vmatpush1.bf16.msra.mxu0 0
  %2359 = vmatprep.subr.bf16.mxu0 0
  %2360 = vmatpush1.bf16.msra.mxu0 0
  %2361 = vmatprep.mubr.bf16.mxu0 0
  %2362 = vmatmul.mubr.bf16.gmra.mrb[0].mxu0 %v1498
  %v2363 = vpop.f32.mrb[0].mxu0
  %v2364 = vadd.f32 0.0, %v2363
  %v2365 = vpop.f32.mrb[0].mxu0
  %v2366 = vadd.f32 0.0, %v2365
  %v2367 = vpop.f32.mrb[0].mxu0
  %v2368 = vadd.f32 0.0, %v2367
  %v2369 = vpop.f32.mrb[0].mxu0
  %v2370 = vadd.f32 0.0, %v2369
  %2371 = vmatprep.mubr.bf16.mxu0 0
  %2372 = vmatmul.mubr.bf16.gmra.mrb[0].mxu0 %v1501
  %v2373 = vpop.f32.mrb[0].mxu0
  %v2374 = vadd.f32 0.0, %v2373
  %v2375 = vpop.f32.mrb[0].mxu0
  %v2376 = vadd.f32 0.0, %v2375
  %v2377 = vpop.f32.mrb[0].mxu0
  %v2378 = vadd.f32 0.0, %v2377
  %v2379 = vpop.f32.mrb[0].mxu0
  %v2380 = vadd.f32 0.0, %v2379
  %2381 = vmatprep.mubr.bf16.mxu0 0
  %2382 = vmatmul.mubr.bf16.gmra.mrb[0].mxu0 %v1504
  %v2383 = vpop.f32.mrb[0].mxu0
  %v2384 = vadd.f32 0.0, %v2383
  %v2385 = vpop.f32.mrb[0].mxu0
  %v2386 = vadd.f32 0.0, %v2385
  %v2387 = vpop.f32.mrb[0].mxu0
  %v2388 = vadd.f32 0.0, %v2387
  %v2389 = vpop.f32.mrb[0].mxu0
  %v2390 = vadd.f32 0.0, %v2389
  %2391 = vmatprep.mubr.bf16.mxu0 0
  %2392 = vmatmul.mubr.bf16.gmra.mrb[0].mxu0 %v1507
  %v2393 = vpop.f32.mrb[0].mxu0
  %v2394 = vadd.f32 0.0, %v2393
  %v2395 = vpop.f32.mrb[0].mxu0
  %v2396 = vadd.f32 0.0, %v2395
  %v2397 = vpop.f32.mrb[0].mxu0
  %v2398 = vadd.f32 0.0, %v2397
  %v2399 = vpop.f32.mrb[0].mxu0
  %v2400 = vadd.f32 0.0, %v2399
  %2401 = vdwg.mxu0
  %v2402 = vadd.f32 %v2291, %v2364
  %v2403 = vadd.f32 %v2293, %v2366
  %v2404 = vadd.f32 %v2295, %v2368
  %v2405 = vadd.f32 %v2297, %v2370
  %v2406 = vadd.f32 %v2301, %v2374
  %v2407 = vadd.f32 %v2303, %v2376
  %v2408 = vadd.f32 %v2305, %v2378
  %v2409 = vadd.f32 %v2307, %v2380
  %v2410 = vadd.f32 %v2311, %v2384
  %v2411 = vadd.f32 %v2313, %v2386
  %v2412 = vadd.f32 %v2315, %v2388
  %v2413 = vadd.f32 %v2317, %v2390
  %v2414 = vadd.f32 %v2321, %v2394
  %v2415 = vadd.f32 %v2323, %v2396
  %v2416 = vadd.f32 %v2325, %v2398
  %v2417 = vadd.f32 %v2327, %v2400
  %2418 = vmatprep.subr.bf16.mxu0 %v694
  %2419 = vmatpush1.bf16.msra.mxu0 %v693
  %2420 = vmatprep.subr.bf16.mxu0 %v696
  %2421 = vmatpush1.bf16.msra.mxu0 %v695
  %2422 = vmatprep.subr.bf16.mxu0 %v698
  %2423 = vmatpush1.bf16.msra.mxu0 %v697
  %2424 = vmatprep.subr.bf16.mxu0 %v700
  %2425 = vmatpush1.bf16.msra.mxu0 %v699
  %2426 = vmatprep.subr.bf16.mxu0 %v702
  %2427 = vmatpush1.bf16.msra.mxu0 %v701
  %2428 = vmatprep.subr.bf16.mxu0 %v704
  %2429 = vmatpush1.bf16.msra.mxu0 %v703
  %2430 = vmatprep.subr.bf16.mxu0 0
  %2431 = vmatpush1.bf16.msra.mxu0 0
  %2432 = vmatprep.subr.bf16.mxu0 0
  %2433 = vmatpush1.bf16.msra.mxu0 0
  %2434 = vmatprep.subr.bf16.mxu0 0
  %2435 = vmatpush1.bf16.msra.mxu0 0
  %2436 = vmatprep.subr.bf16.mxu0 0
  %2437 = vmatpush1.bf16.msra.mxu0 0
  %2438 = vmatprep.subr.bf16.mxu0 0
  %2439 = vmatpush1.bf16.msra.mxu0 0
  %2440 = vmatprep.subr.bf16.mxu0 0
  %2441 = vmatpush1.bf16.msra.mxu0 0
  %2442 = vmatprep.subr.bf16.mxu0 0
  %2443 = vmatpush1.bf16.msra.mxu0 0
  %2444 = vmatprep.subr.bf16.mxu0 0
  %2445 = vmatpush1.bf16.msra.mxu0 0
  %2446 = vmatprep.subr.bf16.mxu0 0
  %2447 = vmatpush1.bf16.msra.mxu0 0
  %2448 = vmatprep.subr.bf16.mxu0 0
  %2449 = vmatpush1.bf16.msra.mxu0 0
  %2450 = vmatprep.mubr.bf16.mxu0 0
  %2451 = vmatmul.mubr.bf16.gmra.mrb[0].mxu0 %v2051
  %v2452 = vpop.f32.mrb[0].mxu0
  %v2453 = vadd.f32 0.0, %v2452
  %v2454 = vpop.f32.mrb[0].mxu0
  %v2455 = vadd.f32 0.0, %v2454
  %v2456 = vpop.f32.mrb[0].mxu0
  %v2457 = vadd.f32 0.0, %v2456
  %v2458 = vpop.f32.mrb[0].mxu0
  %v2459 = vadd.f32 0.0, %v2458
  %2460 = vmatprep.mubr.bf16.mxu0 0
  %2461 = vmatmul.mubr.bf16.gmra.mrb[0].mxu0 %v2054
  %v2462 = vpop.f32.mrb[0].mxu0
  %v2463 = vadd.f32 0.0, %v2462
  %v2464 = vpop.f32.mrb[0].mxu0
  %v2465 = vadd.f32 0.0, %v2464
  %v2466 = vpop.f32.mrb[0].mxu0
  %v2467 = vadd.f32 0.0, %v2466
  %v2468 = vpop.f32.mrb[0].mxu0
  %v2469 = vadd.f32 0.0, %v2468
  %2470 = vmatprep.mubr.bf16.mxu0 0
  %2471 = vmatmul.mubr.bf16.gmra.mrb[0].mxu0 %v2057
  %v2472 = vpop.f32.mrb[0].mxu0
  %v2473 = vadd.f32 0.0, %v2472
  %v2474 = vpop.f32.mrb[0].mxu0
  %v2475 = vadd.f32 0.0, %v2474
  %v2476 = vpop.f32.mrb[0].mxu0
  %v2477 = vadd.f32 0.0, %v2476
  %v2478 = vpop.f32.mrb[0].mxu0
  %v2479 = vadd.f32 0.0, %v2478
  %2480 = vmatprep.mubr.bf16.mxu0 0
  %2481 = vmatmul.mubr.bf16.gmra.mrb[0].mxu0 %v2060
  %v2482 = vpop.f32.mrb[0].mxu0
  %v2483 = vadd.f32 0.0, %v2482
  %v2484 = vpop.f32.mrb[0].mxu0
  %v2485 = vadd.f32 0.0, %v2484
  %v2486 = vpop.f32.mrb[0].mxu0
  %v2487 = vadd.f32 0.0, %v2486
  %v2488 = vpop.f32.mrb[0].mxu0
  %v2489 = vadd.f32 0.0, %v2488
  %2490 = vdwg.mxu0
  %v2491 = vadd.f32 %v2402, %v2453
  %v2492 = vadd.f32 %v2403, %v2455
  %v2493 = vadd.f32 %v2404, %v2457
  %v2494 = vadd.f32 %v2405, %v2459
  %v2495 = vadd.f32 %v2406, %v2463
  %v2496 = vadd.f32 %v2407, %v2465
  %v2497 = vadd.f32 %v2408, %v2467
  %v2498 = vadd.f32 %v2409, %v2469
  %v2499 = vadd.f32 %v2410, %v2473
  %v2500 = vadd.f32 %v2411, %v2475
  %v2501 = vadd.f32 %v2412, %v2477
  %v2502 = vadd.f32 %v2413, %v2479
  %v2503 = vadd.f32 %v2414, %v2483
  %v2504 = vadd.f32 %v2415, %v2485
  %v2505 = vadd.f32 %v2416, %v2487
  %v2506 = vadd.f32 %v2417, %v2489
  %v2507 = vld [vmem:[%s615] sm:$0xf]
  %v2508 = vld [vmem:[%s615 + $0x4] sm:$0xf]
  %v2509 = vld [vmem:[%s615 + $0x8] sm:$0xf]
  %v2510 = vld [vmem:[%s615 + $0xc] sm:$0xf]
  %v2511 = vld [vmem:[%s615 + $0x10] sm:$0xf]
  %v2512 = vld [vmem:[%s615 + $0x14] sm:$0xf]
  %v2513 = vld [vmem:[%s615 + $0x18] sm:$0xf]
  %v2514 = vld [vmem:[%s615 + $0x1c] sm:$0xf]
  %v2515 = vld [vmem:[%s615 + $0x20] sm:$0x1]
  %v2525 = vunpack.c.l.b16 %v2507
  %v2526 = vunpack.c.l.b16 %v2508
  %v2527 = vunpack.c.l.b16 %v2509
  %v2528 = vunpack.c.l.b16 %v2510
  %v2529 = vunpack.c.l.b16 %v2511
  %v2530 = vunpack.c.l.b16 %v2512
  %v2531 = vunpack.c.l.b16 %v2513
  %v2532 = vunpack.c.l.b16 %v2514
  %v2533 = vunpack.c.l.b16 %v2515
  %v2534 = vpack.c.b16 %v2526, %v2525
  %v2535 = vpack.c.b16 %v2528, %v2527
  %v2536 = vpack.c.b16 %v2530, %v2529
  %v2537 = vpack.c.b16 %v2532, %v2531
  %v2538 = vpack.c.b16 %v2533, %v2533
  %v2540 = vshrl.u32 %v2534, 16
  %v2542 = vshll.u32 %v2534, 16
  %v2544 = vrot.slane %v2542, 1
  %v2545 = vor.u32 %v2540, %v2544
  %v2547 = vshll.u32 %v2535, 16
  %v2549 = vrot.slane %v2547, 1
  %v2550 = vsel %vm863, %v2545, %v2549
  %v2551 = vshrl.u32 %v2535, 16
  %v2553 = vor.u32 %v2551, %v2549
  %v2555 = vshll.u32 %v2536, 16
  %v2557 = vrot.slane %v2555, 1
  %v2558 = vsel %vm863, %v2553, %v2557
  %v2559 = vshrl.u32 %v2536, 16
  %v2561 = vor.u32 %v2559, %v2557
  %v2563 = vshll.u32 %v2537, 16
  %v2565 = vrot.slane %v2563, 1
  %v2566 = vsel %vm863, %v2561, %v2565
  %v2567 = vshrl.u32 %v2537, 16
  %v2569 = vor.u32 %v2567, %v2565
  %v2571 = vshll.u32 %v2538, 16
  %v2573 = vrot.slane %v2571, 1
  %v2574 = vsel %vm863, %v2569, %v2573
  %v2576 = vsel %vm161, %v2550, 0
  %v2579 = vsel %vm161, %v2558, 0
  %v2582 = vsel %vm161, %v2566, 0
  %v2585 = vsel %vm161, %v2574, 0
  %2587 = vmatprep.subr.bf16.mxu0 %v937
  %2588 = vmatpush1.bf16.msra.mxu0 %v936
  %2589 = vmatprep.subr.bf16.mxu0 %v939
  %2590 = vmatpush1.bf16.msra.mxu0 %v938
  %2591 = vmatprep.subr.bf16.mxu0 %v941
  %2592 = vmatpush1.bf16.msra.mxu0 %v940
  %2593 = vmatprep.subr.bf16.mxu0 %v943
  %2594 = vmatpush1.bf16.msra.mxu0 %v942
  %2595 = vmatprep.subr.bf16.mxu0 %v945
  %2596 = vmatpush1.bf16.msra.mxu0 %v944
  %2597 = vmatprep.subr.bf16.mxu0 %v947
  %2598 = vmatpush1.bf16.msra.mxu0 %v946
  %2599 = vmatprep.subr.bf16.mxu0 0
  %2600 = vmatpush1.bf16.msra.mxu0 0
  %2601 = vmatprep.subr.bf16.mxu0 0
  %2602 = vmatpush1.bf16.msra.mxu0 0
  %2603 = vmatprep.subr.bf16.mxu0 0
  %2604 = vmatpush1.bf16.msra.mxu0 0
  %2605 = vmatprep.subr.bf16.mxu0 0
  %2606 = vmatpush1.bf16.msra.mxu0 0
  %2607 = vmatprep.subr.bf16.mxu0 0
  %2608 = vmatpush1.bf16.msra.mxu0 0
  %2609 = vmatprep.subr.bf16.mxu0 0
  %2610 = vmatpush1.bf16.msra.mxu0 0
  %2611 = vmatprep.subr.bf16.mxu0 0
  %2612 = vmatpush1.bf16.msra.mxu0 0
  %2613 = vmatprep.subr.bf16.mxu0 0
  %2614 = vmatpush1.bf16.msra.mxu0 0
  %2615 = vmatprep.subr.bf16.mxu0 0
  %2616 = vmatpush1.bf16.msra.mxu0 0
  %2617 = vmatprep.subr.bf16.mxu0 0
  %2618 = vmatpush1.bf16.msra.mxu0 0
  %2619 = vmatprep.mubr.bf16.mxu0 0
  %2620 = vmatmul.mubr.bf16.gmra.mrb[0].mxu0 %v2576
  %v2621 = vpop.f32.mrb[0].mxu0
  %v2622 = vadd.f32 0.0, %v2621
  %v2623 = vpop.f32.mrb[0].mxu0
  %v2624 = vadd.f32 0.0, %v2623
  %v2625 = vpop.f32.mrb[0].mxu0
  %v2626 = vadd.f32 0.0, %v2625
  %v2627 = vpop.f32.mrb[0].mxu0
  %v2628 = vadd.f32 0.0, %v2627
  %2629 = vmatprep.mubr.bf16.mxu0 0
  %2630 = vmatmul.mubr.bf16.gmra.mrb[0].mxu0 %v2579
  %v2631 = vpop.f32.mrb[0].mxu0
  %v2632 = vadd.f32 0.0, %v2631
  %v2633 = vpop.f32.mrb[0].mxu0
  %v2634 = vadd.f32 0.0, %v2633
  %v2635 = vpop.f32.mrb[0].mxu0
  %v2636 = vadd.f32 0.0, %v2635
  %v2637 = vpop.f32.mrb[0].mxu0
  %v2638 = vadd.f32 0.0, %v2637
  %2639 = vmatprep.mubr.bf16.mxu0 0
  %2640 = vmatmul.mubr.bf16.gmra.mrb[0].mxu0 %v2582
  %v2641 = vpop.f32.mrb[0].mxu0
  %v2642 = vadd.f32 0.0, %v2641
  %v2643 = vpop.f32.mrb[0].mxu0
  %v2644 = vadd.f32 0.0, %v2643
  %v2645 = vpop.f32.mrb[0].mxu0
  %v2646 = vadd.f32 0.0, %v2645
  %v2647 = vpop.f32.mrb[0].mxu0
  %v2648 = vadd.f32 0.0, %v2647
  %2649 = vmatprep.mubr.bf16.mxu0 0
  %2650 = vmatmul.mubr.bf16.gmra.mrb[0].mxu0 %v2585
  %v2651 = vpop.f32.mrb[0].mxu0
  %v2652 = vadd.f32 0.0, %v2651
  %v2653 = vpop.f32.mrb[0].mxu0
  %v2654 = vadd.f32 0.0, %v2653
  %v2655 = vpop.f32.mrb[0].mxu0
  %v2656 = vadd.f32 0.0, %v2655
  %v2657 = vpop.f32.mrb[0].mxu0
  %v2658 = vadd.f32 0.0, %v2657
  %2659 = vdwg.mxu0
  %v2660 = vadd.f32 %v2491, %v2622
  %v2661 = vadd.f32 %v2492, %v2624
  %v2662 = vadd.f32 %v2493, %v2626
  %v2663 = vadd.f32 %v2494, %v2628
  %v2664 = vadd.f32 %v2495, %v2632
  %v2665 = vadd.f32 %v2496, %v2634
  %v2666 = vadd.f32 %v2497, %v2636
  %v2667 = vadd.f32 %v2498, %v2638
  %v2668 = vadd.f32 %v2499, %v2642
  %v2669 = vadd.f32 %v2500, %v2644
  %v2670 = vadd.f32 %v2501, %v2646
  %v2671 = vadd.f32 %v2502, %v2648
  %v2672 = vadd.f32 %v2503, %v2652
  %v2673 = vadd.f32 %v2504, %v2654
  %v2674 = vadd.f32 %v2505, %v2656
  %v2675 = vadd.f32 %v2506, %v2658
  %v2676 = vadd.f32 %v2660, %v1066
  %v2677 = vadd.f32 %v2661, %v1070
  %v2678 = vadd.f32 %v2662, %v1066
  %v2679 = vadd.f32 %v2663, %v1070
  %v2680 = vadd.f32 %v2664, %v1066
  %v2681 = vadd.f32 %v2665, %v1070
  %v2682 = vadd.f32 %v2666, %v1066
  %v2683 = vadd.f32 %v2667, %v1070
  %v2684 = vadd.f32 %v2668, %v1066
  %v2685 = vadd.f32 %v2669, %v1070
  %v2686 = vadd.f32 %v2670, %v1066
  %v2687 = vadd.f32 %v2671, %v1070
  %v2688 = vadd.f32 %v2672, %v1066
  %v2689 = vadd.f32 %v2673, %v1070
  %v2690 = vadd.f32 %v2674, %v1066
  %v2691 = vadd.f32 %v2675, %v1070
  %v2692 = vmax.f32 %v2676, 0.0
  %v2693 = vmax.f32 %v2677, 0.0
  %v2694 = vmax.f32 %v2678, 0.0
  %v2695 = vmax.f32 %v2679, 0.0
  %v2696 = vmax.f32 %v2680, 0.0
  %v2697 = vmax.f32 %v2681, 0.0
  %v2698 = vmax.f32 %v2682, 0.0
  %v2699 = vmax.f32 %v2683, 0.0
  %v2700 = vmax.f32 %v2684, 0.0
  %v2701 = vmax.f32 %v2685, 0.0
  %v2702 = vmax.f32 %v2686, 0.0
  %v2703 = vmax.f32 %v2687, 0.0
  %v2704 = vmax.f32 %v2688, 0.0
  %v2705 = vmax.f32 %v2689, 0.0
  %v2706 = vmax.f32 %v2690, 0.0
  %v2707 = vmax.f32 %v2691, 0.0
  %v2708 = vmax.f32 %v2167, %v2692
  %v2709 = vmax.f32 %v2168, %v2693
  %v2710 = vmax.f32 %v2169, %v2694
  %v2711 = vmax.f32 %v2170, %v2695
  %v2712 = vmax.f32 %v2171, %v2696
  %v2713 = vmax.f32 %v2172, %v2697
  %v2714 = vmax.f32 %v2173, %v2698
  %v2715 = vmax.f32 %v2174, %v2699
  %v2716 = vmax.f32 %v2175, %v2700
  %v2717 = vmax.f32 %v2176, %v2701
  %v2718 = vmax.f32 %v2177, %v2702
  %v2719 = vmax.f32 %v2178, %v2703
  %v2720 = vmax.f32 %v2179, %v2704
  %v2721 = vmax.f32 %v2180, %v2705
  %v2722 = vmax.f32 %v2181, %v2706
  %v2723 = vmax.f32 %v2182, %v2707
  %v2724 = vmax.f32 %v2708, %v2709
  %v2725 = vmax.f32 %v2710, %v2711
  %v2726 = vmax.f32 %v2712, %v2713
  %v2727 = vmax.f32 %v2714, %v2715
  %v2728 = vmax.f32 %v2716, %v2717
  %v2729 = vmax.f32 %v2718, %v2719
  %v2730 = vmax.f32 %v2720, %v2721
  %v2731 = vmax.f32 %v2722, %v2723
  %v2732 = vpack.c.bf16 %v2725, %v2724
  %v2733 = vpack.c.bf16 %v2727, %v2726
  %v2734 = vpack.c.bf16 %v2729, %v2728
  %v2735 = vpack.c.bf16 %v2731, %v2730
  %v2736 = vld [vmem:[%s3] sm:$0xff]
  %v2737 = vld [vmem:[%s3 + $0x8] sm:$0xff]
  %v2738 = vld [vmem:[%s3 + $0x10] sm:$0xff]
  %v2739 = vld [vmem:[%s3 + $0x18] sm:$0xff]
  %v2740 = vld [vmem:[%s3 + $0x20] sm:$0xff]
  %v2741 = vld [vmem:[%s3 + $0x28] sm:$0xff]
  %v2742 = vld [vmem:[%s3 + $0x30] sm:$0xff]
  %v2743 = vld [vmem:[%s3 + $0x38] sm:$0xff]
  %v2744 = vld [vmem:[%s3 + $0x40] sm:$0xff]
  %v2745 = vld [vmem:[%s3 + $0x48] sm:$0xff]
  %v2746 = vld [vmem:[%s3 + $0x50] sm:$0xff]
  %v2747 = vld [vmem:[%s3 + $0x58] sm:$0xff]
  %v2748 = vld [vmem:[%s3 + $0x60] sm:$0xff]
  %v2749 = vld [vmem:[%s3 + $0x68] sm:$0xff]
  %v2750 = vld [vmem:[%s3 + $0x70] sm:$0xff]
  %v2751 = vld [vmem:[%s3 + $0x78] sm:$0xff]
  %s2752 = scalar_lea.vmem %s3, 128
  %v2753 = vld [vmem:[%s2752] sm:$0xff]
  %v2754 = vld [vmem:[%s2752 + $0x8] sm:$0xff]
  %v2755 = vld [vmem:[%s2752 + $0x10] sm:$0xff]
  %v2756 = vld [vmem:[%s2752 + $0x18] sm:$0xff]
  %v2757 = vld [vmem:[%s2752 + $0x20] sm:$0xff]
  %v2758 = vld [vmem:[%s2752 + $0x28] sm:$0xff]
  %v2759 = vld [vmem:[%s2752 + $0x30] sm:$0xff]
  %v2760 = vld [vmem:[%s2752 + $0x38] sm:$0xff]
  %v2761 = vld [vmem:[%s2752 + $0x40] sm:$0xff]
  %v2762 = vld [vmem:[%s2752 + $0x48] sm:$0xff]
  %v2763 = vld [vmem:[%s2752 + $0x50] sm:$0xff]
  %v2764 = vld [vmem:[%s2752 + $0x58] sm:$0xff]
  %v2765 = vld [vmem:[%s2752 + $0x60] sm:$0xff]
  %v2766 = vld [vmem:[%s2752 + $0x68] sm:$0xff]
  %v2767 = vld [vmem:[%s2752 + $0x70] sm:$0xff]
  %v2768 = vld [vmem:[%s2752 + $0x78] sm:$0xff]
  %v2785 = vunpack.c.l.b16 %v2753
  %v2786 = vunpack.c.h.b16 %v2753
  %v2787 = vunpack.c.l.b16 %v2754
  %v2788 = vunpack.c.h.b16 %v2754
  %v2789 = vunpack.c.l.b16 %v2755
  %v2790 = vunpack.c.h.b16 %v2755
  %v2791 = vunpack.c.l.b16 %v2756
  %v2792 = vunpack.c.h.b16 %v2756
  %v2793 = vunpack.c.l.b16 %v2757
  %v2794 = vunpack.c.h.b16 %v2757
  %v2795 = vunpack.c.l.b16 %v2758
  %v2796 = vunpack.c.h.b16 %v2758
  %v2797 = vunpack.c.l.b16 %v2759
  %v2798 = vunpack.c.h.b16 %v2759
  %v2799 = vunpack.c.l.b16 %v2760
  %v2800 = vunpack.c.h.b16 %v2760
  %v2801 = vunpack.c.l.b16 %v2761
  %v2802 = vunpack.c.h.b16 %v2761
  %v2803 = vunpack.c.l.b16 %v2762
  %v2804 = vunpack.c.h.b16 %v2762
  %v2805 = vunpack.c.l.b16 %v2763
  %v2806 = vunpack.c.h.b16 %v2763
  %v2807 = vunpack.c.l.b16 %v2764
  %v2808 = vunpack.c.h.b16 %v2764
  %v2809 = vunpack.c.l.b16 %v2765
  %v2810 = vunpack.c.h.b16 %v2765
  %v2811 = vunpack.c.l.b16 %v2766
  %v2812 = vunpack.c.h.b16 %v2766
  %v2813 = vunpack.c.l.b16 %v2767
  %v2814 = vunpack.c.h.b16 %v2767
  %v2815 = vunpack.c.l.b16 %v2768
  %v2816 = vunpack.c.h.b16 %v2768
  %v2817 = vpack.c.b16 %v2787, %v2785
  %v2818 = vpack.c.b16 %v2788, %v2786
  %v2819 = vpack.c.b16 %v2791, %v2789
  %v2820 = vpack.c.b16 %v2792, %v2790
  %v2821 = vpack.c.b16 %v2795, %v2793
  %v2822 = vpack.c.b16 %v2796, %v2794
  %v2823 = vpack.c.b16 %v2799, %v2797
  %v2824 = vpack.c.b16 %v2800, %v2798
  %v2825 = vpack.c.b16 %v2803, %v2801
  %v2826 = vpack.c.b16 %v2804, %v2802
  %v2827 = vpack.c.b16 %v2807, %v2805
  %v2828 = vpack.c.b16 %v2808, %v2806
  %v2829 = vpack.c.b16 %v2811, %v2809
  %v2830 = vpack.c.b16 %v2812, %v2810
  %v2831 = vpack.c.b16 %v2815, %v2813
  %v2832 = vpack.c.b16 %v2816, %v2814
  %2849 = vmatprep.subr.bf16.mxu0 %v2818
  %2850 = vmatpush1.bf16.msra.mxu0 %v2817
  %2851 = vmatprep.subr.bf16.mxu0 %v2820
  %2852 = vmatpush1.bf16.msra.mxu0 %v2819
  %2853 = vmatprep.subr.bf16.mxu0 %v2822
  %2854 = vmatpush1.bf16.msra.mxu0 %v2821
  %2855 = vmatprep.subr.bf16.mxu0 %v2824
  %2856 = vmatpush1.bf16.msra.mxu0 %v2823
  %2857 = vmatprep.subr.bf16.mxu0 %v2826
  %2858 = vmatpush1.bf16.msra.mxu0 %v2825
  %2859 = vmatprep.subr.bf16.mxu0 %v2828
  %2860 = vmatpush1.bf16.msra.mxu0 %v2827
  %2861 = vmatprep.subr.bf16.mxu0 %v2830
  %2862 = vmatpush1.bf16.msra.mxu0 %v2829
  %2863 = vmatprep.subr.bf16.mxu0 %v2832
  %2864 = vmatpush1.bf16.msra.mxu0 %v2831
  %2865 = vmatprep.subr.bf16.mxu0 0
  %2866 = vmatpush1.bf16.msra.mxu0 0
  %2867 = vmatprep.subr.bf16.mxu0 0
  %2868 = vmatpush1.bf16.msra.mxu0 0
  %2869 = vmatprep.subr.bf16.mxu0 0
  %2870 = vmatpush1.bf16.msra.mxu0 0
  %2871 = vmatprep.subr.bf16.mxu0 0
  %2872 = vmatpush1.bf16.msra.mxu0 0
  %2873 = vmatprep.subr.bf16.mxu0 0
  %2874 = vmatpush1.bf16.msra.mxu0 0
  %2875 = vmatprep.subr.bf16.mxu0 0
  %2876 = vmatpush1.bf16.msra.mxu0 0
  %2877 = vmatprep.subr.bf16.mxu0 0
  %2878 = vmatpush1.bf16.msra.mxu0 0
  %2879 = vmatprep.subr.bf16.mxu0 0
  %2880 = vmatpush1.bf16.msra.mxu0 0
  %2881 = vmatprep.mubr.bf16.mxu0 0
  %2882 = vmatmul.mubr.bf16.gmra.mrb[0].mxu0 %v2732
  %v2883 = vpop.f32.mrb[0].mxu0
  %v2884 = vadd.f32 0.0, %v2883
  %v2885 = vpop.f32.mrb[0].mxu0
  %v2886 = vadd.f32 0.0, %v2885
  %v2887 = vpop.f32.mrb[0].mxu0
  %v2888 = vadd.f32 0.0, %v2887
  %v2889 = vpop.f32.mrb[0].mxu0
  %v2890 = vadd.f32 0.0, %v2889
  %2891 = vmatprep.mubr.bf16.mxu0 0
  %2892 = vmatmul.mubr.bf16.gmra.mrb[0].mxu0 %v2733
  %v2893 = vpop.f32.mrb[0].mxu0
  %v2894 = vadd.f32 0.0, %v2893
  %v2895 = vpop.f32.mrb[0].mxu0
  %v2896 = vadd.f32 0.0, %v2895
  %v2897 = vpop.f32.mrb[0].mxu0
  %v2898 = vadd.f32 0.0, %v2897
  %v2899 = vpop.f32.mrb[0].mxu0
  %v2900 = vadd.f32 0.0, %v2899
  %2901 = vmatprep.mubr.bf16.mxu0 0
  %2902 = vmatmul.mubr.bf16.gmra.mrb[0].mxu0 %v2734
  %v2903 = vpop.f32.mrb[0].mxu0
  %v2904 = vadd.f32 0.0, %v2903
  %v2905 = vpop.f32.mrb[0].mxu0
  %v2906 = vadd.f32 0.0, %v2905
  %v2907 = vpop.f32.mrb[0].mxu0
  %v2908 = vadd.f32 0.0, %v2907
  %v2909 = vpop.f32.mrb[0].mxu0
  %v2910 = vadd.f32 0.0, %v2909
  %2911 = vmatprep.mubr.bf16.mxu0 0
  %2912 = vmatmul.mubr.bf16.gmra.mrb[0].mxu0 %v2735
  %v2913 = vpop.f32.mrb[0].mxu0
  %v2914 = vadd.f32 0.0, %v2913
  %v2915 = vpop.f32.mrb[0].mxu0
  %v2916 = vadd.f32 0.0, %v2915
  %v2917 = vpop.f32.mrb[0].mxu0
  %v2918 = vadd.f32 0.0, %v2917
  %v2919 = vpop.f32.mrb[0].mxu0
  %v2920 = vadd.f32 0.0, %v2919
  %2921 = vdwg.mxu0
  %v2938 = vunpack.c.l.b16 %v2736
  %v2939 = vunpack.c.h.b16 %v2736
  %v2940 = vunpack.c.l.b16 %v2737
  %v2941 = vunpack.c.h.b16 %v2737
  %v2942 = vunpack.c.l.b16 %v2738
  %v2943 = vunpack.c.h.b16 %v2738
  %v2944 = vunpack.c.l.b16 %v2739
  %v2945 = vunpack.c.h.b16 %v2739
  %v2946 = vunpack.c.l.b16 %v2740
  %v2947 = vunpack.c.h.b16 %v2740
  %v2948 = vunpack.c.l.b16 %v2741
  %v2949 = vunpack.c.h.b16 %v2741
  %v2950 = vunpack.c.l.b16 %v2742
  %v2951 = vunpack.c.h.b16 %v2742
  %v2952 = vunpack.c.l.b16 %v2743
  %v2953 = vunpack.c.h.b16 %v2743
  %v2954 = vunpack.c.l.b16 %v2744
  %v2955 = vunpack.c.h.b16 %v2744
  %v2956 = vunpack.c.l.b16 %v2745
  %v2957 = vunpack.c.h.b16 %v2745
  %v2958 = vunpack.c.l.b16 %v2746
  %v2959 = vunpack.c.h.b16 %v2746
  %v2960 = vunpack.c.l.b16 %v2747
  %v2961 = vunpack.c.h.b16 %v2747
  %v2962 = vunpack.c.l.b16 %v2748
  %v2963 = vunpack.c.h.b16 %v2748
  %v2964 = vunpack.c.l.b16 %v2749
  %v2965 = vunpack.c.h.b16 %v2749
  %v2966 = vunpack.c.l.b16 %v2750
  %v2967 = vunpack.c.h.b16 %v2750
  %v2968 = vunpack.c.l.b16 %v2751
  %v2969 = vunpack.c.h.b16 %v2751
  %v2970 = vpack.c.b16 %v2940, %v2938
  %v2971 = vpack.c.b16 %v2941, %v2939
  %v2972 = vpack.c.b16 %v2944, %v2942
  %v2973 = vpack.c.b16 %v2945, %v2943
  %v2974 = vpack.c.b16 %v2948, %v2946
  %v2975 = vpack.c.b16 %v2949, %v2947
  %v2976 = vpack.c.b16 %v2952, %v2950
  %v2977 = vpack.c.b16 %v2953, %v2951
  %v2978 = vpack.c.b16 %v2956, %v2954
  %v2979 = vpack.c.b16 %v2957, %v2955
  %v2980 = vpack.c.b16 %v2960, %v2958
  %v2981 = vpack.c.b16 %v2961, %v2959
  %v2982 = vpack.c.b16 %v2964, %v2962
  %v2983 = vpack.c.b16 %v2965, %v2963
  %v2984 = vpack.c.b16 %v2968, %v2966
  %v2985 = vpack.c.b16 %v2969, %v2967
  %3002 = vmatprep.subr.bf16.mxu0 %v2971
  %3003 = vmatpush1.bf16.msra.mxu0 %v2970
  %3004 = vmatprep.subr.bf16.mxu0 %v2973
  %3005 = vmatpush1.bf16.msra.mxu0 %v2972
  %3006 = vmatprep.subr.bf16.mxu0 %v2975
  %3007 = vmatpush1.bf16.msra.mxu0 %v2974
  %3008 = vmatprep.subr.bf16.mxu0 %v2977
  %3009 = vmatpush1.bf16.msra.mxu0 %v2976
  %3010 = vmatprep.subr.bf16.mxu0 %v2979
  %3011 = vmatpush1.bf16.msra.mxu0 %v2978
  %3012 = vmatprep.subr.bf16.mxu0 %v2981
  %3013 = vmatpush1.bf16.msra.mxu0 %v2980
  %3014 = vmatprep.subr.bf16.mxu0 %v2983
  %3015 = vmatpush1.bf16.msra.mxu0 %v2982
  %3016 = vmatprep.subr.bf16.mxu0 %v2985
  %3017 = vmatpush1.bf16.msra.mxu0 %v2984
  %3018 = vmatprep.subr.bf16.mxu0 0
  %3019 = vmatpush1.bf16.msra.mxu0 0
  %3020 = vmatprep.subr.bf16.mxu0 0
  %3021 = vmatpush1.bf16.msra.mxu0 0
  %3022 = vmatprep.subr.bf16.mxu0 0
  %3023 = vmatpush1.bf16.msra.mxu0 0
  %3024 = vmatprep.subr.bf16.mxu0 0
  %3025 = vmatpush1.bf16.msra.mxu0 0
  %3026 = vmatprep.subr.bf16.mxu0 0
  %3027 = vmatpush1.bf16.msra.mxu0 0
  %3028 = vmatprep.subr.bf16.mxu0 0
  %3029 = vmatpush1.bf16.msra.mxu0 0
  %3030 = vmatprep.subr.bf16.mxu0 0
  %3031 = vmatpush1.bf16.msra.mxu0 0
  %3032 = vmatprep.subr.bf16.mxu0 0
  %3033 = vmatpush1.bf16.msra.mxu0 0
  %3034 = vmatprep.mubr.bf16.mxu0 0
  %3035 = vmatmul.mubr.bf16.gmra.mrb[0].mxu0 %v1654
  %v3036 = vpop.f32.mrb[0].mxu0
  %v3037 = vadd.f32 %v2884, %v3036
  %v3038 = vpop.f32.mrb[0].mxu0
  %v3039 = vadd.f32 %v2886, %v3038
  %v3040 = vpop.f32.mrb[0].mxu0
  %v3041 = vadd.f32 %v2888, %v3040
  %v3042 = vpop.f32.mrb[0].mxu0
  %v3043 = vadd.f32 %v2890, %v3042
  %3044 = vmatprep.mubr.bf16.mxu0 0
  %3045 = vmatmul.mubr.bf16.gmra.mrb[0].mxu0 %v1655
  %v3046 = vpop.f32.mrb[0].mxu0
  %v3047 = vadd.f32 %v2894, %v3046
  %v3048 = vpop.f32.mrb[0].mxu0
  %v3049 = vadd.f32 %v2896, %v3048
  %v3050 = vpop.f32.mrb[0].mxu0
  %v3051 = vadd.f32 %v2898, %v3050
  %v3052 = vpop.f32.mrb[0].mxu0
  %v3053 = vadd.f32 %v2900, %v3052
  %3054 = vmatprep.mubr.bf16.mxu0 0
  %3055 = vmatmul.mubr.bf16.gmra.mrb[0].mxu0 %v1656
  %v3056 = vpop.f32.mrb[0].mxu0
  %v3057 = vadd.f32 %v2904, %v3056
  %v3058 = vpop.f32.mrb[0].mxu0
  %v3059 = vadd.f32 %v2906, %v3058
  %v3060 = vpop.f32.mrb[0].mxu0
  %v3061 = vadd.f32 %v2908, %v3060
  %v3062 = vpop.f32.mrb[0].mxu0
  %v3063 = vadd.f32 %v2910, %v3062
  %3064 = vmatprep.mubr.bf16.mxu0 0
  %3065 = vmatmul.mubr.bf16.gmra.mrb[0].mxu0 %v1657
  %v3066 = vpop.f32.mrb[0].mxu0
  %v3067 = vadd.f32 %v2914, %v3066
  %v3068 = vpop.f32.mrb[0].mxu0
  %v3069 = vadd.f32 %v2916, %v3068
  %v3070 = vpop.f32.mrb[0].mxu0
  %v3071 = vadd.f32 %v2918, %v3070
  %v3072 = vpop.f32.mrb[0].mxu0
  %v3073 = vadd.f32 %v2920, %v3072
  %3074 = vdwg.mxu0
  %s3075 = scalar_lea.vmem %s3, 256
  %v3076 = vld [vmem:[%s3075] sm:$0xff]
  %v3077 = vld [vmem:[%s3075 + $0x8] sm:$0xff]
  %v3078 = vld [vmem:[%s3075 + $0x10] sm:$0xff]
  %v3079 = vld [vmem:[%s3075 + $0x18] sm:$0xff]
  %v3080 = vld [vmem:[%s3075 + $0x20] sm:$0xff]
  %v3081 = vld [vmem:[%s3075 + $0x28] sm:$0xff]
  %v3082 = vld [vmem:[%s3075 + $0x30] sm:$0xff]
  %v3083 = vld [vmem:[%s3075 + $0x38] sm:$0xff]
  %v3084 = vld [vmem:[%s3075 + $0x40] sm:$0xff]
  %v3085 = vld [vmem:[%s3075 + $0x48] sm:$0xff]
  %v3086 = vld [vmem:[%s3075 + $0x50] sm:$0xff]
  %v3087 = vld [vmem:[%s3075 + $0x58] sm:$0xff]
  %v3088 = vld [vmem:[%s3075 + $0x60] sm:$0xff]
  %v3089 = vld [vmem:[%s3075 + $0x68] sm:$0xff]
  %v3090 = vld [vmem:[%s3075 + $0x70] sm:$0xff]
  %v3091 = vld [vmem:[%s3075 + $0x78] sm:$0xff]
  %v3093 = vshrl.u32 %v1654, 16
  %v3095 = vshll.u32 %v1654, 16
  %v3097 = vrot.slane %v3095, 1
  %v3098 = vor.u32 %v3093, %v3097
  %v3100 = vshll.u32 %v1655, 16
  %v3102 = vrot.slane %v3100, 1
  %v3103 = vsel %vm863, %v3098, %v3102
  %v3104 = vshrl.u32 %v1655, 16
  %v3106 = vor.u32 %v3104, %v3102
  %v3108 = vshll.u32 %v1656, 16
  %v3110 = vrot.slane %v3108, 1
  %v3111 = vsel %vm863, %v3106, %v3110
  %v3112 = vshrl.u32 %v1656, 16
  %v3114 = vor.u32 %v3112, %v3110
  %v3116 = vshll.u32 %v1657, 16
  %v3118 = vrot.slane %v3116, 1
  %v3119 = vsel %vm863, %v3114, %v3118
  %v3120 = vshrl.u32 %v1657, 16
  %v3122 = vor.u32 %v3120, %v3118
  %v3143 = vunpack.c.l.b16 %v3076
  %v3144 = vunpack.c.h.b16 %v3076
  %v3145 = vunpack.c.l.b16 %v3077
  %v3146 = vunpack.c.h.b16 %v3077
  %v3147 = vunpack.c.l.b16 %v3078
  %v3148 = vunpack.c.h.b16 %v3078
  %v3149 = vunpack.c.l.b16 %v3079
  %v3150 = vunpack.c.h.b16 %v3079
  %v3151 = vunpack.c.l.b16 %v3080
  %v3152 = vunpack.c.h.b16 %v3080
  %v3153 = vunpack.c.l.b16 %v3081
  %v3154 = vunpack.c.h.b16 %v3081
  %v3155 = vunpack.c.l.b16 %v3082
  %v3156 = vunpack.c.h.b16 %v3082
  %v3157 = vunpack.c.l.b16 %v3083
  %v3158 = vunpack.c.h.b16 %v3083
  %v3159 = vunpack.c.l.b16 %v3084
  %v3160 = vunpack.c.h.b16 %v3084
  %v3161 = vunpack.c.l.b16 %v3085
  %v3162 = vunpack.c.h.b16 %v3085
  %v3163 = vunpack.c.l.b16 %v3086
  %v3164 = vunpack.c.h.b16 %v3086
  %v3165 = vunpack.c.l.b16 %v3087
  %v3166 = vunpack.c.h.b16 %v3087
  %v3167 = vunpack.c.l.b16 %v3088
  %v3168 = vunpack.c.h.b16 %v3088
  %v3169 = vunpack.c.l.b16 %v3089
  %v3170 = vunpack.c.h.b16 %v3089
  %v3171 = vunpack.c.l.b16 %v3090
  %v3172 = vunpack.c.h.b16 %v3090
  %v3173 = vunpack.c.l.b16 %v3091
  %v3174 = vunpack.c.h.b16 %v3091
  %v3175 = vpack.c.b16 %v3145, %v3143
  %v3176 = vpack.c.b16 %v3146, %v3144
  %v3177 = vpack.c.b16 %v3149, %v3147
  %v3178 = vpack.c.b16 %v3150, %v3148
  %v3179 = vpack.c.b16 %v3153, %v3151
  %v3180 = vpack.c.b16 %v3154, %v3152
  %v3181 = vpack.c.b16 %v3157, %v3155
  %v3182 = vpack.c.b16 %v3158, %v3156
  %v3183 = vpack.c.b16 %v3161, %v3159
  %v3184 = vpack.c.b16 %v3162, %v3160
  %v3185 = vpack.c.b16 %v3165, %v3163
  %v3186 = vpack.c.b16 %v3166, %v3164
  %v3187 = vpack.c.b16 %v3169, %v3167
  %v3188 = vpack.c.b16 %v3170, %v3168
  %v3189 = vpack.c.b16 %v3173, %v3171
  %v3190 = vpack.c.b16 %v3174, %v3172
  %3207 = vmatprep.subr.bf16.mxu0 %v3176
  %3208 = vmatpush1.bf16.msra.mxu0 %v3175
  %3209 = vmatprep.subr.bf16.mxu0 %v3178
  %3210 = vmatpush1.bf16.msra.mxu0 %v3177
  %3211 = vmatprep.subr.bf16.mxu0 %v3180
  %3212 = vmatpush1.bf16.msra.mxu0 %v3179
  %3213 = vmatprep.subr.bf16.mxu0 %v3182
  %3214 = vmatpush1.bf16.msra.mxu0 %v3181
  %3215 = vmatprep.subr.bf16.mxu0 %v3184
  %3216 = vmatpush1.bf16.msra.mxu0 %v3183
  %3217 = vmatprep.subr.bf16.mxu0 %v3186
  %3218 = vmatpush1.bf16.msra.mxu0 %v3185
  %3219 = vmatprep.subr.bf16.mxu0 %v3188
  %3220 = vmatpush1.bf16.msra.mxu0 %v3187
  %3221 = vmatprep.subr.bf16.mxu0 %v3190
  %3222 = vmatpush1.bf16.msra.mxu0 %v3189
  %3223 = vmatprep.subr.bf16.mxu0 0
  %3224 = vmatpush1.bf16.msra.mxu0 0
  %3225 = vmatprep.subr.bf16.mxu0 0
  %3226 = vmatpush1.bf16.msra.mxu0 0
  %3227 = vmatprep.subr.bf16.mxu0 0
  %3228 = vmatpush1.bf16.msra.mxu0 0
  %3229 = vmatprep.subr.bf16.mxu0 0
  %3230 = vmatpush1.bf16.msra.mxu0 0
  %3231 = vmatprep.subr.bf16.mxu0 0
  %3232 = vmatpush1.bf16.msra.mxu0 0
  %3233 = vmatprep.subr.bf16.mxu0 0
  %3234 = vmatpush1.bf16.msra.mxu0 0
  %3235 = vmatprep.subr.bf16.mxu0 0
  %3236 = vmatpush1.bf16.msra.mxu0 0
  %3237 = vmatprep.subr.bf16.mxu0 0
  %3238 = vmatpush1.bf16.msra.mxu0 0
  %3239 = vmatprep.mubr.bf16.mxu0 0
  %3240 = vmatmul.mubr.bf16.gmra.mrb[0].mxu0 %v3103
  %v3241 = vpop.f32.mrb[0].mxu0
  %v3242 = vadd.f32 0.0, %v3241
  %v3243 = vpop.f32.mrb[0].mxu0
  %v3244 = vadd.f32 0.0, %v3243
  %v3245 = vpop.f32.mrb[0].mxu0
  %v3246 = vadd.f32 0.0, %v3245
  %v3247 = vpop.f32.mrb[0].mxu0
  %v3248 = vadd.f32 0.0, %v3247
  %3249 = vmatprep.mubr.bf16.mxu0 0
  %3250 = vmatmul.mubr.bf16.gmra.mrb[0].mxu0 %v3111
  %v3251 = vpop.f32.mrb[0].mxu0
  %v3252 = vadd.f32 0.0, %v3251
  %v3253 = vpop.f32.mrb[0].mxu0
  %v3254 = vadd.f32 0.0, %v3253
  %v3255 = vpop.f32.mrb[0].mxu0
  %v3256 = vadd.f32 0.0, %v3255
  %v3257 = vpop.f32.mrb[0].mxu0
  %v3258 = vadd.f32 0.0, %v3257
  %3259 = vmatprep.mubr.bf16.mxu0 0
  %3260 = vmatmul.mubr.bf16.gmra.mrb[0].mxu0 %v3119
  %v3261 = vpop.f32.mrb[0].mxu0
  %v3262 = vadd.f32 0.0, %v3261
  %v3263 = vpop.f32.mrb[0].mxu0
  %v3264 = vadd.f32 0.0, %v3263
  %v3265 = vpop.f32.mrb[0].mxu0
  %v3266 = vadd.f32 0.0, %v3265
  %v3267 = vpop.f32.mrb[0].mxu0
  %v3268 = vadd.f32 0.0, %v3267
  %3269 = vmatprep.mubr.bf16.mxu0 0
  %3270 = vmatmul.mubr.bf16.gmra.mrb[0].mxu0 %v3122
  %v3271 = vpop.f32.mrb[0].mxu0
  %v3272 = vadd.f32 0.0, %v3271
  %v3273 = vpop.f32.mrb[0].mxu0
  %v3274 = vadd.f32 0.0, %v3273
  %v3275 = vpop.f32.mrb[0].mxu0
  %v3276 = vadd.f32 0.0, %v3275
  %v3277 = vpop.f32.mrb[0].mxu0
  %v3278 = vadd.f32 0.0, %v3277
  %3279 = vdwg.mxu0
  %v3280 = vadd.f32 %v3037, %v3242
  %v3281 = vadd.f32 %v3039, %v3244
  %v3282 = vadd.f32 %v3041, %v3246
  %v3283 = vadd.f32 %v3043, %v3248
  %v3284 = vadd.f32 %v3047, %v3252
  %v3285 = vadd.f32 %v3049, %v3254
  %v3286 = vadd.f32 %v3051, %v3256
  %v3287 = vadd.f32 %v3053, %v3258
  %v3288 = vadd.f32 %v3057, %v3262
  %v3289 = vadd.f32 %v3059, %v3264
  %v3290 = vadd.f32 %v3061, %v3266
  %v3291 = vadd.f32 %v3063, %v3268
  %v3292 = vadd.f32 %v3067, %v3272
  %v3293 = vadd.f32 %v3069, %v3274
  %v3294 = vadd.f32 %v3071, %v3276
  %v3295 = vadd.f32 %v3073, %v3278
  %s3296 = scalar_lea.vmem %s3, 384
  %v3297 = vld [vmem:[%s3296] sm:$0xff]
  %v3298 = vld [vmem:[%s3296 + $0x8] sm:$0xff]
  %v3299 = vld [vmem:[%s3296 + $0x10] sm:$0xff]
  %v3300 = vld [vmem:[%s3296 + $0x18] sm:$0xff]
  %v3301 = vld [vmem:[%s3296 + $0x20] sm:$0xff]
  %v3302 = vld [vmem:[%s3296 + $0x28] sm:$0xff]
  %v3303 = vld [vmem:[%s3296 + $0x30] sm:$0xff]
  %v3304 = vld [vmem:[%s3296 + $0x38] sm:$0xff]
  %v3305 = vld [vmem:[%s3296 + $0x40] sm:$0xff]
  %v3306 = vld [vmem:[%s3296 + $0x48] sm:$0xff]
  %v3307 = vld [vmem:[%s3296 + $0x50] sm:$0xff]
  %v3308 = vld [vmem:[%s3296 + $0x58] sm:$0xff]
  %v3309 = vld [vmem:[%s3296 + $0x60] sm:$0xff]
  %v3310 = vld [vmem:[%s3296 + $0x68] sm:$0xff]
  %v3311 = vld [vmem:[%s3296 + $0x70] sm:$0xff]
  %v3312 = vld [vmem:[%s3296 + $0x78] sm:$0xff]
  %v3314 = vshrl.u32 %v2732, 16
  %v3316 = vshll.u32 %v2732, 16
  %v3318 = vrot.slane %v3316, 1
  %v3319 = vor.u32 %v3314, %v3318
  %v3321 = vshll.u32 %v2733, 16
  %v3323 = vrot.slane %v3321, 1
  %v3324 = vsel %vm863, %v3319, %v3323
  %v3325 = vshrl.u32 %v2733, 16
  %v3327 = vor.u32 %v3325, %v3323
  %v3329 = vshll.u32 %v2734, 16
  %v3331 = vrot.slane %v3329, 1
  %v3332 = vsel %vm863, %v3327, %v3331
  %v3333 = vshrl.u32 %v2734, 16
  %v3335 = vor.u32 %v3333, %v3331
  %v3337 = vshll.u32 %v2735, 16
  %v3339 = vrot.slane %v3337, 1
  %v3340 = vsel %vm863, %v3335, %v3339
  %v3341 = vshrl.u32 %v2735, 16
  %v3343 = vor.u32 %v3341, %v3339
  %v3364 = vunpack.c.l.b16 %v3297
  %v3365 = vunpack.c.h.b16 %v3297
  %v3366 = vunpack.c.l.b16 %v3298
  %v3367 = vunpack.c.h.b16 %v3298
  %v3368 = vunpack.c.l.b16 %v3299
  %v3369 = vunpack.c.h.b16 %v3299
  %v3370 = vunpack.c.l.b16 %v3300
  %v3371 = vunpack.c.h.b16 %v3300
  %v3372 = vunpack.c.l.b16 %v3301
  %v3373 = vunpack.c.h.b16 %v3301
  %v3374 = vunpack.c.l.b16 %v3302
  %v3375 = vunpack.c.h.b16 %v3302
  %v3376 = vunpack.c.l.b16 %v3303
  %v3377 = vunpack.c.h.b16 %v3303
  %v3378 = vunpack.c.l.b16 %v3304
  %v3379 = vunpack.c.h.b16 %v3304
  %v3380 = vunpack.c.l.b16 %v3305
  %v3381 = vunpack.c.h.b16 %v3305
  %v3382 = vunpack.c.l.b16 %v3306
  %v3383 = vunpack.c.h.b16 %v3306
  %v3384 = vunpack.c.l.b16 %v3307
  %v3385 = vunpack.c.h.b16 %v3307
  %v3386 = vunpack.c.l.b16 %v3308
  %v3387 = vunpack.c.h.b16 %v3308
  %v3388 = vunpack.c.l.b16 %v3309
  %v3389 = vunpack.c.h.b16 %v3309
  %v3390 = vunpack.c.l.b16 %v3310
  %v3391 = vunpack.c.h.b16 %v3310
  %v3392 = vunpack.c.l.b16 %v3311
  %v3393 = vunpack.c.h.b16 %v3311
  %v3394 = vunpack.c.l.b16 %v3312
  %v3395 = vunpack.c.h.b16 %v3312
  %v3396 = vpack.c.b16 %v3366, %v3364
  %v3397 = vpack.c.b16 %v3367, %v3365
  %v3398 = vpack.c.b16 %v3370, %v3368
  %v3399 = vpack.c.b16 %v3371, %v3369
  %v3400 = vpack.c.b16 %v3374, %v3372
  %v3401 = vpack.c.b16 %v3375, %v3373
  %v3402 = vpack.c.b16 %v3378, %v3376
  %v3403 = vpack.c.b16 %v3379, %v3377
  %v3404 = vpack.c.b16 %v3382, %v3380
  %v3405 = vpack.c.b16 %v3383, %v3381
  %v3406 = vpack.c.b16 %v3386, %v3384
  %v3407 = vpack.c.b16 %v3387, %v3385
  %v3408 = vpack.c.b16 %v3390, %v3388
  %v3409 = vpack.c.b16 %v3391, %v3389
  %v3410 = vpack.c.b16 %v3394, %v3392
  %v3411 = vpack.c.b16 %v3395, %v3393
  %3428 = vmatprep.subr.bf16.mxu0 %v3397
  %3429 = vmatpush1.bf16.msra.mxu0 %v3396
  %3430 = vmatprep.subr.bf16.mxu0 %v3399
  %3431 = vmatpush1.bf16.msra.mxu0 %v3398
  %3432 = vmatprep.subr.bf16.mxu0 %v3401
  %3433 = vmatpush1.bf16.msra.mxu0 %v3400
  %3434 = vmatprep.subr.bf16.mxu0 %v3403
  %3435 = vmatpush1.bf16.msra.mxu0 %v3402
  %3436 = vmatprep.subr.bf16.mxu0 %v3405
  %3437 = vmatpush1.bf16.msra.mxu0 %v3404
  %3438 = vmatprep.subr.bf16.mxu0 %v3407
  %3439 = vmatpush1.bf16.msra.mxu0 %v3406
  %3440 = vmatprep.subr.bf16.mxu0 %v3409
  %3441 = vmatpush1.bf16.msra.mxu0 %v3408
  %3442 = vmatprep.subr.bf16.mxu0 %v3411
  %3443 = vmatpush1.bf16.msra.mxu0 %v3410
  %3444 = vmatprep.subr.bf16.mxu0 0
  %3445 = vmatpush1.bf16.msra.mxu0 0
  %3446 = vmatprep.subr.bf16.mxu0 0
  %3447 = vmatpush1.bf16.msra.mxu0 0
  %3448 = vmatprep.subr.bf16.mxu0 0
  %3449 = vmatpush1.bf16.msra.mxu0 0
  %3450 = vmatprep.subr.bf16.mxu0 0
  %3451 = vmatpush1.bf16.msra.mxu0 0
  %3452 = vmatprep.subr.bf16.mxu0 0
  %3453 = vmatpush1.bf16.msra.mxu0 0
  %3454 = vmatprep.subr.bf16.mxu0 0
  %3455 = vmatpush1.bf16.msra.mxu0 0
  %3456 = vmatprep.subr.bf16.mxu0 0
  %3457 = vmatpush1.bf16.msra.mxu0 0
  %3458 = vmatprep.subr.bf16.mxu0 0
  %3459 = vmatpush1.bf16.msra.mxu0 0
  %3460 = vmatprep.mubr.bf16.mxu0 0
  %3461 = vmatmul.mubr.bf16.gmra.mrb[0].mxu0 %v3324
  %v3462 = vpop.f32.mrb[0].mxu0
  %v3463 = vadd.f32 0.0, %v3462
  %v3464 = vpop.f32.mrb[0].mxu0
  %v3465 = vadd.f32 0.0, %v3464
  %v3466 = vpop.f32.mrb[0].mxu0
  %v3467 = vadd.f32 0.0, %v3466
  %v3468 = vpop.f32.mrb[0].mxu0
  %v3469 = vadd.f32 0.0, %v3468
  %3470 = vmatprep.mubr.bf16.mxu0 0
  %3471 = vmatmul.mubr.bf16.gmra.mrb[0].mxu0 %v3332
  %v3472 = vpop.f32.mrb[0].mxu0
  %v3473 = vadd.f32 0.0, %v3472
  %v3474 = vpop.f32.mrb[0].mxu0
  %v3475 = vadd.f32 0.0, %v3474
  %v3476 = vpop.f32.mrb[0].mxu0
  %v3477 = vadd.f32 0.0, %v3476
  %v3478 = vpop.f32.mrb[0].mxu0
  %v3479 = vadd.f32 0.0, %v3478
  %3480 = vmatprep.mubr.bf16.mxu0 0
  %3481 = vmatmul.mubr.bf16.gmra.mrb[0].mxu0 %v3340
  %v3482 = vpop.f32.mrb[0].mxu0
  %v3483 = vadd.f32 0.0, %v3482
  %v3484 = vpop.f32.mrb[0].mxu0
  %v3485 = vadd.f32 0.0, %v3484
  %v3486 = vpop.f32.mrb[0].mxu0
  %v3487 = vadd.f32 0.0, %v3486
  %v3488 = vpop.f32.mrb[0].mxu0
  %v3489 = vadd.f32 0.0, %v3488
  %3490 = vmatprep.mubr.bf16.mxu0 0
  %3491 = vmatmul.mubr.bf16.gmra.mrb[0].mxu0 %v3343
  %v3492 = vpop.f32.mrb[0].mxu0
  %v3493 = vadd.f32 0.0, %v3492
  %v3494 = vpop.f32.mrb[0].mxu0
  %v3495 = vadd.f32 0.0, %v3494
  %v3496 = vpop.f32.mrb[0].mxu0
  %v3497 = vadd.f32 0.0, %v3496
  %v3498 = vpop.f32.mrb[0].mxu0
  %v3499 = vadd.f32 0.0, %v3498
  %3500 = vdwg.mxu0
  %v3501 = vadd.f32 %v3280, %v3463
  %v3502 = vadd.f32 %v3281, %v3465
  %v3503 = vadd.f32 %v3282, %v3467
  %v3504 = vadd.f32 %v3283, %v3469
  %v3505 = vadd.f32 %v3284, %v3473
  %v3506 = vadd.f32 %v3285, %v3475
  %v3507 = vadd.f32 %v3286, %v3477
  %v3508 = vadd.f32 %v3287, %v3479
  %v3509 = vadd.f32 %v3288, %v3483
  %v3510 = vadd.f32 %v3289, %v3485
  %v3511 = vadd.f32 %v3290, %v3487
  %v3512 = vadd.f32 %v3291, %v3489
  %v3513 = vadd.f32 %v3292, %v3493
  %v3514 = vadd.f32 %v3293, %v3495
  %v3515 = vadd.f32 %v3294, %v3497
  %v3516 = vadd.f32 %v3295, %v3499
  %s3517 = scalar_lea.vmem %s3, 512
  %v3518 = vld [vmem:[%s3517] sm:$0xff]
  %v3519 = vld [vmem:[%s3517 + $0x8] sm:$0xff]
  %v3520 = vld [vmem:[%s3517 + $0x10] sm:$0xff]
  %v3521 = vld [vmem:[%s3517 + $0x18] sm:$0xff]
  %v3522 = vld [vmem:[%s3517 + $0x20] sm:$0xff]
  %v3523 = vld [vmem:[%s3517 + $0x28] sm:$0xff]
  %v3524 = vld [vmem:[%s3517 + $0x30] sm:$0xff]
  %v3525 = vld [vmem:[%s3517 + $0x38] sm:$0xff]
  %v3526 = vld [vmem:[%s3517 + $0x40] sm:$0xff]
  %v3527 = vld [vmem:[%s3517 + $0x48] sm:$0xff]
  %v3528 = vld [vmem:[%s3517 + $0x50] sm:$0xff]
  %v3529 = vld [vmem:[%s3517 + $0x58] sm:$0xff]
  %v3530 = vld [vmem:[%s3517 + $0x60] sm:$0xff]
  %v3531 = vld [vmem:[%s3517 + $0x68] sm:$0xff]
  %v3532 = vld [vmem:[%s3517 + $0x70] sm:$0xff]
  %v3533 = vld [vmem:[%s3517 + $0x78] sm:$0xff]
  %vm3538 = vcmask 1046528
  %v3539 = vrot.slane %v1654, 1
  %v3540 = vrot.slane %v1655, 1
  %v3541 = vsel %vm3538, %v3539, %v3540
  %v3542 = vrot.slane %v1656, 1
  %v3543 = vsel %vm3538, %v3540, %v3542
  %v3544 = vrot.slane %v1657, 1
  %v3545 = vsel %vm3538, %v3542, %v3544
  %v3566 = vunpack.c.l.b16 %v3518
  %v3567 = vunpack.c.h.b16 %v3518
  %v3568 = vunpack.c.l.b16 %v3519
  %v3569 = vunpack.c.h.b16 %v3519
  %v3570 = vunpack.c.l.b16 %v3520
  %v3571 = vunpack.c.h.b16 %v3520
  %v3572 = vunpack.c.l.b16 %v3521
  %v3573 = vunpack.c.h.b16 %v3521
  %v3574 = vunpack.c.l.b16 %v3522
  %v3575 = vunpack.c.h.b16 %v3522
  %v3576 = vunpack.c.l.b16 %v3523
  %v3577 = vunpack.c.h.b16 %v3523
  %v3578 = vunpack.c.l.b16 %v3524
  %v3579 = vunpack.c.h.b16 %v3524
  %v3580 = vunpack.c.l.b16 %v3525
  %v3581 = vunpack.c.h.b16 %v3525
  %v3582 = vunpack.c.l.b16 %v3526
  %v3583 = vunpack.c.h.b16 %v3526
  %v3584 = vunpack.c.l.b16 %v3527
  %v3585 = vunpack.c.h.b16 %v3527
  %v3586 = vunpack.c.l.b16 %v3528
  %v3587 = vunpack.c.h.b16 %v3528
  %v3588 = vunpack.c.l.b16 %v3529
  %v3589 = vunpack.c.h.b16 %v3529
  %v3590 = vunpack.c.l.b16 %v3530
  %v3591 = vunpack.c.h.b16 %v3530
  %v3592 = vunpack.c.l.b16 %v3531
  %v3593 = vunpack.c.h.b16 %v3531
  %v3594 = vunpack.c.l.b16 %v3532
  %v3595 = vunpack.c.h.b16 %v3532
  %v3596 = vunpack.c.l.b16 %v3533
  %v3597 = vunpack.c.h.b16 %v3533
  %v3598 = vpack.c.b16 %v3568, %v3566
  %v3599 = vpack.c.b16 %v3569, %v3567
  %v3600 = vpack.c.b16 %v3572, %v3570
  %v3601 = vpack.c.b16 %v3573, %v3571
  %v3602 = vpack.c.b16 %v3576, %v3574
  %v3603 = vpack.c.b16 %v3577, %v3575
  %v3604 = vpack.c.b16 %v3580, %v3578
  %v3605 = vpack.c.b16 %v3581, %v3579
  %v3606 = vpack.c.b16 %v3584, %v3582
  %v3607 = vpack.c.b16 %v3585, %v3583
  %v3608 = vpack.c.b16 %v3588, %v3586
  %v3609 = vpack.c.b16 %v3589, %v3587
  %v3610 = vpack.c.b16 %v3592, %v3590
  %v3611 = vpack.c.b16 %v3593, %v3591
  %v3612 = vpack.c.b16 %v3596, %v3594
  %v3613 = vpack.c.b16 %v3597, %v3595
  %3630 = vmatprep.subr.bf16.mxu0 %v3599
  %3631 = vmatpush1.bf16.msra.mxu0 %v3598
  %3632 = vmatprep.subr.bf16.mxu0 %v3601
  %3633 = vmatpush1.bf16.msra.mxu0 %v3600
  %3634 = vmatprep.subr.bf16.mxu0 %v3603
  %3635 = vmatpush1.bf16.msra.mxu0 %v3602
  %3636 = vmatprep.subr.bf16.mxu0 %v3605
  %3637 = vmatpush1.bf16.msra.mxu0 %v3604
  %3638 = vmatprep.subr.bf16.mxu0 %v3607
  %3639 = vmatpush1.bf16.msra.mxu0 %v3606
  %3640 = vmatprep.subr.bf16.mxu0 %v3609
  %3641 = vmatpush1.bf16.msra.mxu0 %v3608
  %3642 = vmatprep.subr.bf16.mxu0 %v3611
  %3643 = vmatpush1.bf16.msra.mxu0 %v3610
  %3644 = vmatprep.subr.bf16.mxu0 %v3613
  %3645 = vmatpush1.bf16.msra.mxu0 %v3612
  %3646 = vmatprep.subr.bf16.mxu0 0
  %3647 = vmatpush1.bf16.msra.mxu0 0
  %3648 = vmatprep.subr.bf16.mxu0 0
  %3649 = vmatpush1.bf16.msra.mxu0 0
  %3650 = vmatprep.subr.bf16.mxu0 0
  %3651 = vmatpush1.bf16.msra.mxu0 0
  %3652 = vmatprep.subr.bf16.mxu0 0
  %3653 = vmatpush1.bf16.msra.mxu0 0
  %3654 = vmatprep.subr.bf16.mxu0 0
  %3655 = vmatpush1.bf16.msra.mxu0 0
  %3656 = vmatprep.subr.bf16.mxu0 0
  %3657 = vmatpush1.bf16.msra.mxu0 0
  %3658 = vmatprep.subr.bf16.mxu0 0
  %3659 = vmatpush1.bf16.msra.mxu0 0
  %3660 = vmatprep.subr.bf16.mxu0 0
  %3661 = vmatpush1.bf16.msra.mxu0 0
  %3662 = vmatprep.mubr.bf16.mxu0 0
  %3663 = vmatmul.mubr.bf16.gmra.mrb[0].mxu0 %v3541
  %v3664 = vpop.f32.mrb[0].mxu0
  %v3665 = vadd.f32 0.0, %v3664
  %v3666 = vpop.f32.mrb[0].mxu0
  %v3667 = vadd.f32 0.0, %v3666
  %v3668 = vpop.f32.mrb[0].mxu0
  %v3669 = vadd.f32 0.0, %v3668
  %v3670 = vpop.f32.mrb[0].mxu0
  %v3671 = vadd.f32 0.0, %v3670
  %3672 = vmatprep.mubr.bf16.mxu0 0
  %3673 = vmatmul.mubr.bf16.gmra.mrb[0].mxu0 %v3543
  %v3674 = vpop.f32.mrb[0].mxu0
  %v3675 = vadd.f32 0.0, %v3674
  %v3676 = vpop.f32.mrb[0].mxu0
  %v3677 = vadd.f32 0.0, %v3676
  %v3678 = vpop.f32.mrb[0].mxu0
  %v3679 = vadd.f32 0.0, %v3678
  %v3680 = vpop.f32.mrb[0].mxu0
  %v3681 = vadd.f32 0.0, %v3680
  %3682 = vmatprep.mubr.bf16.mxu0 0
  %3683 = vmatmul.mubr.bf16.gmra.mrb[0].mxu0 %v3545
  %v3684 = vpop.f32.mrb[0].mxu0
  %v3685 = vadd.f32 0.0, %v3684
  %v3686 = vpop.f32.mrb[0].mxu0
  %v3687 = vadd.f32 0.0, %v3686
  %v3688 = vpop.f32.mrb[0].mxu0
  %v3689 = vadd.f32 0.0, %v3688
  %v3690 = vpop.f32.mrb[0].mxu0
  %v3691 = vadd.f32 0.0, %v3690
  %3692 = vmatprep.mubr.bf16.mxu0 0
  %3693 = vmatmul.mubr.bf16.gmra.mrb[0].mxu0 %v3544
  %v3694 = vpop.f32.mrb[0].mxu0
  %v3695 = vadd.f32 0.0, %v3694
  %v3696 = vpop.f32.mrb[0].mxu0
  %v3697 = vadd.f32 0.0, %v3696
  %v3698 = vpop.f32.mrb[0].mxu0
  %v3699 = vadd.f32 0.0, %v3698
  %v3700 = vpop.f32.mrb[0].mxu0
  %v3701 = vadd.f32 0.0, %v3700
  %3702 = vdwg.mxu0
  %v3703 = vadd.f32 %v3501, %v3665
  %v3704 = vadd.f32 %v3502, %v3667
  %v3705 = vadd.f32 %v3503, %v3669
  %v3706 = vadd.f32 %v3504, %v3671
  %v3707 = vadd.f32 %v3505, %v3675
  %v3708 = vadd.f32 %v3506, %v3677
  %v3709 = vadd.f32 %v3507, %v3679
  %v3710 = vadd.f32 %v3508, %v3681
  %v3711 = vadd.f32 %v3509, %v3685
  %v3712 = vadd.f32 %v3510, %v3687
  %v3713 = vadd.f32 %v3511, %v3689
  %v3714 = vadd.f32 %v3512, %v3691
  %v3715 = vadd.f32 %v3513, %v3695
  %v3716 = vadd.f32 %v3514, %v3697
  %v3717 = vadd.f32 %v3515, %v3699
  %v3718 = vadd.f32 %v3516, %v3701
  %v3719 = vld [vmem:[%s4] sm:$0x3]
  %v3721 = vlaneseq
  %v3722 = vshrl.u32 %v3721, 7
  %v3723 = vsub.s32 0, %v3722
  %v3724 = vrot.slane %v3719, %v3723
  %v3725 = vlaneseq
  %v3726 = vshrl.u32 %v3725, 7
  %v3727 = vsub.s32 1, %v3726
  %v3728 = vrot.slane %v3719, %v3727
  %v3731 = vadd.f32 %v3703, %v3724
  %v3732 = vadd.f32 %v3704, %v3728
  %v3733 = vadd.f32 %v3705, %v3724
  %v3734 = vadd.f32 %v3706, %v3728
  %v3735 = vadd.f32 %v3707, %v3724
  %v3736 = vadd.f32 %v3708, %v3728
  %v3737 = vadd.f32 %v3709, %v3724
  %v3738 = vadd.f32 %v3710, %v3728
  %v3739 = vadd.f32 %v3711, %v3724
  %v3740 = vadd.f32 %v3712, %v3728
  %v3741 = vadd.f32 %v3713, %v3724
  %v3742 = vadd.f32 %v3714, %v3728
  %v3743 = vadd.f32 %v3715, %v3724
  %v3744 = vadd.f32 %v3716, %v3728
  %v3745 = vadd.f32 %v3717, %v3724
  %v3746 = vadd.f32 %v3718, %v3728
  %v3747 = vmax.f32 %v3731, 0.0
  %v3748 = vmax.f32 %v3732, 0.0
  %v3749 = vmax.f32 %v3733, 0.0
  %v3750 = vmax.f32 %v3734, 0.0
  %v3751 = vmax.f32 %v3735, 0.0
  %v3752 = vmax.f32 %v3736, 0.0
  %v3753 = vmax.f32 %v3737, 0.0
  %v3754 = vmax.f32 %v3738, 0.0
  %v3755 = vmax.f32 %v3739, 0.0
  %v3756 = vmax.f32 %v3740, 0.0
  %v3757 = vmax.f32 %v3741, 0.0
  %v3758 = vmax.f32 %v3742, 0.0
  %v3759 = vmax.f32 %v3743, 0.0
  %v3760 = vmax.f32 %v3744, 0.0
  %v3761 = vmax.f32 %v3745, 0.0
  %v3762 = vmax.f32 %v3746, 0.0
  %3763 = vmatprep.subr.bf16.mxu0 %v2818
  %3764 = vmatpush1.bf16.msra.mxu0 %v2817
  %3765 = vmatprep.subr.bf16.mxu0 %v2820
  %3766 = vmatpush1.bf16.msra.mxu0 %v2819
  %3767 = vmatprep.subr.bf16.mxu0 %v2822
  %3768 = vmatpush1.bf16.msra.mxu0 %v2821
  %3769 = vmatprep.subr.bf16.mxu0 %v2824
  %3770 = vmatpush1.bf16.msra.mxu0 %v2823
  %3771 = vmatprep.subr.bf16.mxu0 %v2826
  %3772 = vmatpush1.bf16.msra.mxu0 %v2825
  %3773 = vmatprep.subr.bf16.mxu0 %v2828
  %3774 = vmatpush1.bf16.msra.mxu0 %v2827
  %3775 = vmatprep.subr.bf16.mxu0 %v2830
  %3776 = vmatpush1.bf16.msra.mxu0 %v2829
  %3777 = vmatprep.subr.bf16.mxu0 %v2832
  %3778 = vmatpush1.bf16.msra.mxu0 %v2831
  %3779 = vmatprep.subr.bf16.mxu0 0
  %3780 = vmatpush1.bf16.msra.mxu0 0
  %3781 = vmatprep.subr.bf16.mxu0 0
  %3782 = vmatpush1.bf16.msra.mxu0 0
  %3783 = vmatprep.subr.bf16.mxu0 0
  %3784 = vmatpush1.bf16.msra.mxu0 0
  %3785 = vmatprep.subr.bf16.mxu0 0
  %3786 = vmatpush1.bf16.msra.mxu0 0
  %3787 = vmatprep.subr.bf16.mxu0 0
  %3788 = vmatpush1.bf16.msra.mxu0 0
  %3789 = vmatprep.subr.bf16.mxu0 0
  %3790 = vmatpush1.bf16.msra.mxu0 0
  %3791 = vmatprep.subr.bf16.mxu0 0
  %3792 = vmatpush1.bf16.msra.mxu0 0
  %3793 = vmatprep.subr.bf16.mxu0 0
  %3794 = vmatpush1.bf16.msra.mxu0 0
  %3795 = vmatprep.mubr.bf16.mxu0 0
  %3796 = vmatmul.mubr.bf16.gmra.mrb[0].mxu0 %v3103
  %v3797 = vpop.f32.mrb[0].mxu0
  %v3798 = vadd.f32 0.0, %v3797
  %v3799 = vpop.f32.mrb[0].mxu0
  %v3800 = vadd.f32 0.0, %v3799
  %v3801 = vpop.f32.mrb[0].mxu0
  %v3802 = vadd.f32 0.0, %v3801
  %v3803 = vpop.f32.mrb[0].mxu0
  %v3804 = vadd.f32 0.0, %v3803
  %3805 = vmatprep.mubr.bf16.mxu0 0
  %3806 = vmatmul.mubr.bf16.gmra.mrb[0].mxu0 %v3111
  %v3807 = vpop.f32.mrb[0].mxu0
  %v3808 = vadd.f32 0.0, %v3807
  %v3809 = vpop.f32.mrb[0].mxu0
  %v3810 = vadd.f32 0.0, %v3809
  %v3811 = vpop.f32.mrb[0].mxu0
  %v3812 = vadd.f32 0.0, %v3811
  %v3813 = vpop.f32.mrb[0].mxu0
  %v3814 = vadd.f32 0.0, %v3813
  %3815 = vmatprep.mubr.bf16.mxu0 0
  %3816 = vmatmul.mubr.bf16.gmra.mrb[0].mxu0 %v3119
  %v3817 = vpop.f32.mrb[0].mxu0
  %v3818 = vadd.f32 0.0, %v3817
  %v3819 = vpop.f32.mrb[0].mxu0
  %v3820 = vadd.f32 0.0, %v3819
  %v3821 = vpop.f32.mrb[0].mxu0
  %v3822 = vadd.f32 0.0, %v3821
  %v3823 = vpop.f32.mrb[0].mxu0
  %v3824 = vadd.f32 0.0, %v3823
  %3825 = vmatprep.mubr.bf16.mxu0 0
  %3826 = vmatmul.mubr.bf16.gmra.mrb[0].mxu0 %v3122
  %v3827 = vpop.f32.mrb[0].mxu0
  %v3828 = vadd.f32 0.0, %v3827
  %v3829 = vpop.f32.mrb[0].mxu0
  %v3830 = vadd.f32 0.0, %v3829
  %v3831 = vpop.f32.mrb[0].mxu0
  %v3832 = vadd.f32 0.0, %v3831
  %v3833 = vpop.f32.mrb[0].mxu0
  %v3834 = vadd.f32 0.0, %v3833
  %3835 = vdwg.mxu0
  %3836 = vmatprep.subr.bf16.mxu0 %v2971
  %3837 = vmatpush1.bf16.msra.mxu0 %v2970
  %3838 = vmatprep.subr.bf16.mxu0 %v2973
  %3839 = vmatpush1.bf16.msra.mxu0 %v2972
  %3840 = vmatprep.subr.bf16.mxu0 %v2975
  %3841 = vmatpush1.bf16.msra.mxu0 %v2974
  %3842 = vmatprep.subr.bf16.mxu0 %v2977
  %3843 = vmatpush1.bf16.msra.mxu0 %v2976
  %3844 = vmatprep.subr.bf16.mxu0 %v2979
  %3845 = vmatpush1.bf16.msra.mxu0 %v2978
  %3846 = vmatprep.subr.bf16.mxu0 %v2981
  %3847 = vmatpush1.bf16.msra.mxu0 %v2980
  %3848 = vmatprep.subr.bf16.mxu0 %v2983
  %3849 = vmatpush1.bf16.msra.mxu0 %v2982
  %3850 = vmatprep.subr.bf16.mxu0 %v2985
  %3851 = vmatpush1.bf16.msra.mxu0 %v2984
  %3852 = vmatprep.subr.bf16.mxu0 0
  %3853 = vmatpush1.bf16.msra.mxu0 0
  %3854 = vmatprep.subr.bf16.mxu0 0
  %3855 = vmatpush1.bf16.msra.mxu0 0
  %3856 = vmatprep.subr.bf16.mxu0 0
  %3857 = vmatpush1.bf16.msra.mxu0 0
  %3858 = vmatprep.subr.bf16.mxu0 0
  %3859 = vmatpush1.bf16.msra.mxu0 0
  %3860 = vmatprep.subr.bf16.mxu0 0
  %3861 = vmatpush1.bf16.msra.mxu0 0
  %3862 = vmatprep.subr.bf16.mxu0 0
  %3863 = vmatpush1.bf16.msra.mxu0 0
  %3864 = vmatprep.subr.bf16.mxu0 0
  %3865 = vmatpush1.bf16.msra.mxu0 0
  %3866 = vmatprep.subr.bf16.mxu0 0
  %3867 = vmatpush1.bf16.msra.mxu0 0
  %3868 = vmatprep.mubr.bf16.mxu0 0
  %3869 = vmatmul.mubr.bf16.gmra.mrb[0].mxu0 %v2732
  %v3870 = vpop.f32.mrb[0].mxu0
  %v3871 = vadd.f32 %v3798, %v3870
  %v3872 = vpop.f32.mrb[0].mxu0
  %v3873 = vadd.f32 %v3800, %v3872
  %v3874 = vpop.f32.mrb[0].mxu0
  %v3875 = vadd.f32 %v3802, %v3874
  %v3876 = vpop.f32.mrb[0].mxu0
  %v3877 = vadd.f32 %v3804, %v3876
  %3878 = vmatprep.mubr.bf16.mxu0 0
  %3879 = vmatmul.mubr.bf16.gmra.mrb[0].mxu0 %v2733
  %v3880 = vpop.f32.mrb[0].mxu0
  %v3881 = vadd.f32 %v3808, %v3880
  %v3882 = vpop.f32.mrb[0].mxu0
  %v3883 = vadd.f32 %v3810, %v3882
  %v3884 = vpop.f32.mrb[0].mxu0
  %v3885 = vadd.f32 %v3812, %v3884
  %v3886 = vpop.f32.mrb[0].mxu0
  %v3887 = vadd.f32 %v3814, %v3886
  %3888 = vmatprep.mubr.bf16.mxu0 0
  %3889 = vmatmul.mubr.bf16.gmra.mrb[0].mxu0 %v2734
  %v3890 = vpop.f32.mrb[0].mxu0
  %v3891 = vadd.f32 %v3818, %v3890
  %v3892 = vpop.f32.mrb[0].mxu0
  %v3893 = vadd.f32 %v3820, %v3892
  %v3894 = vpop.f32.mrb[0].mxu0
  %v3895 = vadd.f32 %v3822, %v3894
  %v3896 = vpop.f32.mrb[0].mxu0
  %v3897 = vadd.f32 %v3824, %v3896
  %3898 = vmatprep.mubr.bf16.mxu0 0
  %3899 = vmatmul.mubr.bf16.gmra.mrb[0].mxu0 %v2735
  %v3900 = vpop.f32.mrb[0].mxu0
  %v3901 = vadd.f32 %v3828, %v3900
  %v3902 = vpop.f32.mrb[0].mxu0
  %v3903 = vadd.f32 %v3830, %v3902
  %v3904 = vpop.f32.mrb[0].mxu0
  %v3905 = vadd.f32 %v3832, %v3904
  %v3906 = vpop.f32.mrb[0].mxu0
  %v3907 = vadd.f32 %v3834, %v3906
  %3908 = vdwg.mxu0
  %3909 = vmatprep.subr.bf16.mxu0 %v3176
  %3910 = vmatpush1.bf16.msra.mxu0 %v3175
  %3911 = vmatprep.subr.bf16.mxu0 %v3178
  %3912 = vmatpush1.bf16.msra.mxu0 %v3177
  %3913 = vmatprep.subr.bf16.mxu0 %v3180
  %3914 = vmatpush1.bf16.msra.mxu0 %v3179
  %3915 = vmatprep.subr.bf16.mxu0 %v3182
  %3916 = vmatpush1.bf16.msra.mxu0 %v3181
  %3917 = vmatprep.subr.bf16.mxu0 %v3184
  %3918 = vmatpush1.bf16.msra.mxu0 %v3183
  %3919 = vmatprep.subr.bf16.mxu0 %v3186
  %3920 = vmatpush1.bf16.msra.mxu0 %v3185
  %3921 = vmatprep.subr.bf16.mxu0 %v3188
  %3922 = vmatpush1.bf16.msra.mxu0 %v3187
  %3923 = vmatprep.subr.bf16.mxu0 %v3190
  %3924 = vmatpush1.bf16.msra.mxu0 %v3189
  %3925 = vmatprep.subr.bf16.mxu0 0
  %3926 = vmatpush1.bf16.msra.mxu0 0
  %3927 = vmatprep.subr.bf16.mxu0 0
  %3928 = vmatpush1.bf16.msra.mxu0 0
  %3929 = vmatprep.subr.bf16.mxu0 0
  %3930 = vmatpush1.bf16.msra.mxu0 0
  %3931 = vmatprep.subr.bf16.mxu0 0
  %3932 = vmatpush1.bf16.msra.mxu0 0
  %3933 = vmatprep.subr.bf16.mxu0 0
  %3934 = vmatpush1.bf16.msra.mxu0 0
  %3935 = vmatprep.subr.bf16.mxu0 0
  %3936 = vmatpush1.bf16.msra.mxu0 0
  %3937 = vmatprep.subr.bf16.mxu0 0
  %3938 = vmatpush1.bf16.msra.mxu0 0
  %3939 = vmatprep.subr.bf16.mxu0 0
  %3940 = vmatpush1.bf16.msra.mxu0 0
  %3941 = vmatprep.mubr.bf16.mxu0 0
  %3942 = vmatmul.mubr.bf16.gmra.mrb[0].mxu0 %v3324
  %v3943 = vpop.f32.mrb[0].mxu0
  %v3944 = vadd.f32 0.0, %v3943
  %v3945 = vpop.f32.mrb[0].mxu0
  %v3946 = vadd.f32 0.0, %v3945
  %v3947 = vpop.f32.mrb[0].mxu0
  %v3948 = vadd.f32 0.0, %v3947
  %v3949 = vpop.f32.mrb[0].mxu0
  %v3950 = vadd.f32 0.0, %v3949
  %3951 = vmatprep.mubr.bf16.mxu0 0
  %3952 = vmatmul.mubr.bf16.gmra.mrb[0].mxu0 %v3332
  %v3953 = vpop.f32.mrb[0].mxu0
  %v3954 = vadd.f32 0.0, %v3953
  %v3955 = vpop.f32.mrb[0].mxu0
  %v3956 = vadd.f32 0.0, %v3955
  %v3957 = vpop.f32.mrb[0].mxu0
  %v3958 = vadd.f32 0.0, %v3957
  %v3959 = vpop.f32.mrb[0].mxu0
  %v3960 = vadd.f32 0.0, %v3959
  %3961 = vmatprep.mubr.bf16.mxu0 0
  %3962 = vmatmul.mubr.bf16.gmra.mrb[0].mxu0 %v3340
  %v3963 = vpop.f32.mrb[0].mxu0
  %v3964 = vadd.f32 0.0, %v3963
  %v3965 = vpop.f32.mrb[0].mxu0
  %v3966 = vadd.f32 0.0, %v3965
  %v3967 = vpop.f32.mrb[0].mxu0
  %v3968 = vadd.f32 0.0, %v3967
  %v3969 = vpop.f32.mrb[0].mxu0
  %v3970 = vadd.f32 0.0, %v3969
  %3971 = vmatprep.mubr.bf16.mxu0 0
  %3972 = vmatmul.mubr.bf16.gmra.mrb[0].mxu0 %v3343
  %v3973 = vpop.f32.mrb[0].mxu0
  %v3974 = vadd.f32 0.0, %v3973
  %v3975 = vpop.f32.mrb[0].mxu0
  %v3976 = vadd.f32 0.0, %v3975
  %v3977 = vpop.f32.mrb[0].mxu0
  %v3978 = vadd.f32 0.0, %v3977
  %v3979 = vpop.f32.mrb[0].mxu0
  %v3980 = vadd.f32 0.0, %v3979
  %3981 = vdwg.mxu0
  %v3982 = vadd.f32 %v3871, %v3944
  %v3983 = vadd.f32 %v3873, %v3946
  %v3984 = vadd.f32 %v3875, %v3948
  %v3985 = vadd.f32 %v3877, %v3950
  %v3986 = vadd.f32 %v3881, %v3954
  %v3987 = vadd.f32 %v3883, %v3956
  %v3988 = vadd.f32 %v3885, %v3958
  %v3989 = vadd.f32 %v3887, %v3960
  %v3990 = vadd.f32 %v3891, %v3964
  %v3991 = vadd.f32 %v3893, %v3966
  %v3992 = vadd.f32 %v3895, %v3968
  %v3993 = vadd.f32 %v3897, %v3970
  %v3994 = vadd.f32 %v3901, %v3974
  %v3995 = vadd.f32 %v3903, %v3976
  %v3996 = vadd.f32 %v3905, %v3978
  %v3997 = vadd.f32 %v3907, %v3980
  %3998 = vmatprep.subr.bf16.mxu0 %v3397
  %3999 = vmatpush1.bf16.msra.mxu0 %v3396
  %4000 = vmatprep.subr.bf16.mxu0 %v3399
  %4001 = vmatpush1.bf16.msra.mxu0 %v3398
  %4002 = vmatprep.subr.bf16.mxu0 %v3401
  %4003 = vmatpush1.bf16.msra.mxu0 %v3400
  %4004 = vmatprep.subr.bf16.mxu0 %v3403
  %4005 = vmatpush1.bf16.msra.mxu0 %v3402
  %4006 = vmatprep.subr.bf16.mxu0 %v3405
  %4007 = vmatpush1.bf16.msra.mxu0 %v3404
  %4008 = vmatprep.subr.bf16.mxu0 %v3407
  %4009 = vmatpush1.bf16.msra.mxu0 %v3406
  %4010 = vmatprep.subr.bf16.mxu0 %v3409
  %4011 = vmatpush1.bf16.msra.mxu0 %v3408
  %4012 = vmatprep.subr.bf16.mxu0 %v3411
  %4013 = vmatpush1.bf16.msra.mxu0 %v3410
  %4014 = vmatprep.subr.bf16.mxu0 0
  %4015 = vmatpush1.bf16.msra.mxu0 0
  %4016 = vmatprep.subr.bf16.mxu0 0
  %4017 = vmatpush1.bf16.msra.mxu0 0
  %4018 = vmatprep.subr.bf16.mxu0 0
  %4019 = vmatpush1.bf16.msra.mxu0 0
  %4020 = vmatprep.subr.bf16.mxu0 0
  %4021 = vmatpush1.bf16.msra.mxu0 0
  %4022 = vmatprep.subr.bf16.mxu0 0
  %4023 = vmatpush1.bf16.msra.mxu0 0
  %4024 = vmatprep.subr.bf16.mxu0 0
  %4025 = vmatpush1.bf16.msra.mxu0 0
  %4026 = vmatprep.subr.bf16.mxu0 0
  %4027 = vmatpush1.bf16.msra.mxu0 0
  %4028 = vmatprep.subr.bf16.mxu0 0
  %4029 = vmatpush1.bf16.msra.mxu0 0
  %4030 = vmatprep.mubr.bf16.mxu0 0
  %4031 = vmatmul.mubr.bf16.gmra.mrb[0].mxu0 %v3541
  %v4032 = vpop.f32.mrb[0].mxu0
  %v4033 = vadd.f32 0.0, %v4032
  %v4034 = vpop.f32.mrb[0].mxu0
  %v4035 = vadd.f32 0.0, %v4034
  %v4036 = vpop.f32.mrb[0].mxu0
  %v4037 = vadd.f32 0.0, %v4036
  %v4038 = vpop.f32.mrb[0].mxu0
  %v4039 = vadd.f32 0.0, %v4038
  %4040 = vmatprep.mubr.bf16.mxu0 0
  %4041 = vmatmul.mubr.bf16.gmra.mrb[0].mxu0 %v3543
  %v4042 = vpop.f32.mrb[0].mxu0
  %v4043 = vadd.f32 0.0, %v4042
  %v4044 = vpop.f32.mrb[0].mxu0
  %v4045 = vadd.f32 0.0, %v4044
  %v4046 = vpop.f32.mrb[0].mxu0
  %v4047 = vadd.f32 0.0, %v4046
  %v4048 = vpop.f32.mrb[0].mxu0
  %v4049 = vadd.f32 0.0, %v4048
  %4050 = vmatprep.mubr.bf16.mxu0 0
  %4051 = vmatmul.mubr.bf16.gmra.mrb[0].mxu0 %v3545
  %v4052 = vpop.f32.mrb[0].mxu0
  %v4053 = vadd.f32 0.0, %v4052
  %v4054 = vpop.f32.mrb[0].mxu0
  %v4055 = vadd.f32 0.0, %v4054
  %v4056 = vpop.f32.mrb[0].mxu0
  %v4057 = vadd.f32 0.0, %v4056
  %v4058 = vpop.f32.mrb[0].mxu0
  %v4059 = vadd.f32 0.0, %v4058
  %4060 = vmatprep.mubr.bf16.mxu0 0
  %4061 = vmatmul.mubr.bf16.gmra.mrb[0].mxu0 %v3544
  %v4062 = vpop.f32.mrb[0].mxu0
  %v4063 = vadd.f32 0.0, %v4062
  %v4064 = vpop.f32.mrb[0].mxu0
  %v4065 = vadd.f32 0.0, %v4064
  %v4066 = vpop.f32.mrb[0].mxu0
  %v4067 = vadd.f32 0.0, %v4066
  %v4068 = vpop.f32.mrb[0].mxu0
  %v4069 = vadd.f32 0.0, %v4068
  %4070 = vdwg.mxu0
  %v4071 = vadd.f32 %v3982, %v4033
  %v4072 = vadd.f32 %v3983, %v4035
  %v4073 = vadd.f32 %v3984, %v4037
  %v4074 = vadd.f32 %v3985, %v4039
  %v4075 = vadd.f32 %v3986, %v4043
  %v4076 = vadd.f32 %v3987, %v4045
  %v4077 = vadd.f32 %v3988, %v4047
  %v4078 = vadd.f32 %v3989, %v4049
  %v4079 = vadd.f32 %v3990, %v4053
  %v4080 = vadd.f32 %v3991, %v4055
  %v4081 = vadd.f32 %v3992, %v4057
  %v4082 = vadd.f32 %v3993, %v4059
  %v4083 = vadd.f32 %v3994, %v4063
  %v4084 = vadd.f32 %v3995, %v4065
  %v4085 = vadd.f32 %v3996, %v4067
  %v4086 = vadd.f32 %v3997, %v4069
  %v4091 = vrot.slane %v2732, 1
  %v4092 = vrot.slane %v2733, 1
  %v4093 = vsel %vm3538, %v4091, %v4092
  %v4094 = vrot.slane %v2734, 1
  %v4095 = vsel %vm3538, %v4092, %v4094
  %v4096 = vrot.slane %v2735, 1
  %v4097 = vsel %vm3538, %v4094, %v4096
  %4102 = vmatprep.subr.bf16.mxu0 %v3599
  %4103 = vmatpush1.bf16.msra.mxu0 %v3598
  %4104 = vmatprep.subr.bf16.mxu0 %v3601
  %4105 = vmatpush1.bf16.msra.mxu0 %v3600
  %4106 = vmatprep.subr.bf16.mxu0 %v3603
  %4107 = vmatpush1.bf16.msra.mxu0 %v3602
  %4108 = vmatprep.subr.bf16.mxu0 %v3605
  %4109 = vmatpush1.bf16.msra.mxu0 %v3604
  %4110 = vmatprep.subr.bf16.mxu0 %v3607
  %4111 = vmatpush1.bf16.msra.mxu0 %v3606
  %4112 = vmatprep.subr.bf16.mxu0 %v3609
  %4113 = vmatpush1.bf16.msra.mxu0 %v3608
  %4114 = vmatprep.subr.bf16.mxu0 %v3611
  %4115 = vmatpush1.bf16.msra.mxu0 %v3610
  %4116 = vmatprep.subr.bf16.mxu0 %v3613
  %4117 = vmatpush1.bf16.msra.mxu0 %v3612
  %4118 = vmatprep.subr.bf16.mxu0 0
  %4119 = vmatpush1.bf16.msra.mxu0 0
  %4120 = vmatprep.subr.bf16.mxu0 0
  %4121 = vmatpush1.bf16.msra.mxu0 0
  %4122 = vmatprep.subr.bf16.mxu0 0
  %4123 = vmatpush1.bf16.msra.mxu0 0
  %4124 = vmatprep.subr.bf16.mxu0 0
  %4125 = vmatpush1.bf16.msra.mxu0 0
  %4126 = vmatprep.subr.bf16.mxu0 0
  %4127 = vmatpush1.bf16.msra.mxu0 0
  %4128 = vmatprep.subr.bf16.mxu0 0
  %4129 = vmatpush1.bf16.msra.mxu0 0
  %4130 = vmatprep.subr.bf16.mxu0 0
  %4131 = vmatpush1.bf16.msra.mxu0 0
  %4132 = vmatprep.subr.bf16.mxu0 0
  %4133 = vmatpush1.bf16.msra.mxu0 0
  %4134 = vmatprep.mubr.bf16.mxu0 0
  %4135 = vmatmul.mubr.bf16.gmra.mrb[0].mxu0 %v4093
  %v4136 = vpop.f32.mrb[0].mxu0
  %v4137 = vadd.f32 0.0, %v4136
  %v4138 = vpop.f32.mrb[0].mxu0
  %v4139 = vadd.f32 0.0, %v4138
  %v4140 = vpop.f32.mrb[0].mxu0
  %v4141 = vadd.f32 0.0, %v4140
  %v4142 = vpop.f32.mrb[0].mxu0
  %v4143 = vadd.f32 0.0, %v4142
  %4144 = vmatprep.mubr.bf16.mxu0 0
  %4145 = vmatmul.mubr.bf16.gmra.mrb[0].mxu0 %v4095
  %v4146 = vpop.f32.mrb[0].mxu0
  %v4147 = vadd.f32 0.0, %v4146
  %v4148 = vpop.f32.mrb[0].mxu0
  %v4149 = vadd.f32 0.0, %v4148
  %v4150 = vpop.f32.mrb[0].mxu0
  %v4151 = vadd.f32 0.0, %v4150
  %v4152 = vpop.f32.mrb[0].mxu0
  %v4153 = vadd.f32 0.0, %v4152
  %4154 = vmatprep.mubr.bf16.mxu0 0
  %4155 = vmatmul.mubr.bf16.gmra.mrb[0].mxu0 %v4097
  %v4156 = vpop.f32.mrb[0].mxu0
  %v4157 = vadd.f32 0.0, %v4156
  %v4158 = vpop.f32.mrb[0].mxu0
  %v4159 = vadd.f32 0.0, %v4158
  %v4160 = vpop.f32.mrb[0].mxu0
  %v4161 = vadd.f32 0.0, %v4160
  %v4162 = vpop.f32.mrb[0].mxu0
  %v4163 = vadd.f32 0.0, %v4162
  %4164 = vmatprep.mubr.bf16.mxu0 0
  %4165 = vmatmul.mubr.bf16.gmra.mrb[0].mxu0 %v4096
  %v4166 = vpop.f32.mrb[0].mxu0
  %v4167 = vadd.f32 0.0, %v4166
  %v4168 = vpop.f32.mrb[0].mxu0
  %v4169 = vadd.f32 0.0, %v4168
  %v4170 = vpop.f32.mrb[0].mxu0
  %v4171 = vadd.f32 0.0, %v4170
  %v4172 = vpop.f32.mrb[0].mxu0
  %v4173 = vadd.f32 0.0, %v4172
  %4174 = vdwg.mxu0
  %v4175 = vadd.f32 %v4071, %v4137
  %v4176 = vadd.f32 %v4072, %v4139
  %v4177 = vadd.f32 %v4073, %v4141
  %v4178 = vadd.f32 %v4074, %v4143
  %v4179 = vadd.f32 %v4075, %v4147
  %v4180 = vadd.f32 %v4076, %v4149
  %v4181 = vadd.f32 %v4077, %v4151
  %v4182 = vadd.f32 %v4078, %v4153
  %v4183 = vadd.f32 %v4079, %v4157
  %v4184 = vadd.f32 %v4080, %v4159
  %v4185 = vadd.f32 %v4081, %v4161
  %v4186 = vadd.f32 %v4082, %v4163
  %v4187 = vadd.f32 %v4083, %v4167
  %v4188 = vadd.f32 %v4084, %v4169
  %v4189 = vadd.f32 %v4085, %v4171
  %v4190 = vadd.f32 %v4086, %v4173
  %v4191 = vadd.f32 %v4175, %v3724
  %v4192 = vadd.f32 %v4176, %v3728
  %v4193 = vadd.f32 %v4177, %v3724
  %v4194 = vadd.f32 %v4178, %v3728
  %v4195 = vadd.f32 %v4179, %v3724
  %v4196 = vadd.f32 %v4180, %v3728
  %v4197 = vadd.f32 %v4181, %v3724
  %v4198 = vadd.f32 %v4182, %v3728
  %v4199 = vadd.f32 %v4183, %v3724
  %v4200 = vadd.f32 %v4184, %v3728
  %v4201 = vadd.f32 %v4185, %v3724
  %v4202 = vadd.f32 %v4186, %v3728
  %v4203 = vadd.f32 %v4187, %v3724
  %v4204 = vadd.f32 %v4188, %v3728
  %v4205 = vadd.f32 %v4189, %v3724
  %v4206 = vadd.f32 %v4190, %v3728
  %v4207 = vmax.f32 %v4191, 0.0
  %v4208 = vmax.f32 %v4192, 0.0
  %v4209 = vmax.f32 %v4193, 0.0
  %v4210 = vmax.f32 %v4194, 0.0
  %v4211 = vmax.f32 %v4195, 0.0
  %v4212 = vmax.f32 %v4196, 0.0
  %v4213 = vmax.f32 %v4197, 0.0
  %v4214 = vmax.f32 %v4198, 0.0
  %v4215 = vmax.f32 %v4199, 0.0
  %v4216 = vmax.f32 %v4200, 0.0
  %v4217 = vmax.f32 %v4201, 0.0
  %v4218 = vmax.f32 %v4202, 0.0
  %v4219 = vmax.f32 %v4203, 0.0
  %v4220 = vmax.f32 %v4204, 0.0
  %v4221 = vmax.f32 %v4205, 0.0
  %v4222 = vmax.f32 %v4206, 0.0
  %v4223 = vmax.f32 %v3747, %v4207
  %v4224 = vmax.f32 %v3748, %v4208
  %v4225 = vmax.f32 %v3749, %v4209
  %v4226 = vmax.f32 %v3750, %v4210
  %v4227 = vmax.f32 %v3751, %v4211
  %v4228 = vmax.f32 %v3752, %v4212
  %v4229 = vmax.f32 %v3753, %v4213
  %v4230 = vmax.f32 %v3754, %v4214
  %v4231 = vmax.f32 %v3755, %v4215
  %v4232 = vmax.f32 %v3756, %v4216
  %v4233 = vmax.f32 %v3757, %v4217
  %v4234 = vmax.f32 %v3758, %v4218
  %v4235 = vmax.f32 %v3759, %v4219
  %v4236 = vmax.f32 %v3760, %v4220
  %v4237 = vmax.f32 %v3761, %v4221
  %v4238 = vmax.f32 %v3762, %v4222
  %v4239 = vmax.f32 %v4223, %v4224
  %v4240 = vmax.f32 %v4225, %v4226
  %v4241 = vmax.f32 %v4227, %v4228
  %v4242 = vmax.f32 %v4229, %v4230
  %v4243 = vmax.f32 %v4231, %v4232
  %v4244 = vmax.f32 %v4233, %v4234
  %v4245 = vmax.f32 %v4235, %v4236
  %v4246 = vmax.f32 %v4237, %v4238
  %v4247 = vpack.c.bf16 %v4240, %v4239
  %v4248 = vpack.c.bf16 %v4242, %v4241
  %v4249 = vpack.c.bf16 %v4244, %v4243
  %v4250 = vpack.c.bf16 %v4246, %v4245
  %v4251 = vld [vmem:[%s5] sm:$0xf]
  %v4252 = vld [vmem:[%s5 + $0x4] sm:$0xf]
  %v4253 = vld [vmem:[%s5 + $0x8] sm:$0xf]
  %v4254 = vld [vmem:[%s5 + $0xc] sm:$0xf]
  %v4255 = vld [vmem:[%s5 + $0x10] sm:$0xf]
  %v4256 = vld [vmem:[%s5 + $0x14] sm:$0xf]
  %v4257 = vld [vmem:[%s5 + $0x18] sm:$0xf]
  %v4258 = vld [vmem:[%s5 + $0x1c] sm:$0xf]
  %v4259 = vld [vmem:[%s5 + $0x20] sm:$0xf]
  %v4260 = vld [vmem:[%s5 + $0x24] sm:$0xf]
  %v4261 = vld [vmem:[%s5 + $0x28] sm:$0xf]
  %v4262 = vld [vmem:[%s5 + $0x2c] sm:$0xf]
  %v4263 = vld [vmem:[%s5 + $0x30] sm:$0xf]
  %v4264 = vld [vmem:[%s5 + $0x34] sm:$0xf]
  %v4265 = vld [vmem:[%s5 + $0x38] sm:$0xf]
  %v4266 = vld [vmem:[%s5 + $0x3c] sm:$0xf]
  %v4267 = vld [vmem:[%s5 + $0x40] sm:$0xf]
  %v4268 = vld [vmem:[%s5 + $0x44] sm:$0xf]
  %v4269 = vld [vmem:[%s5 + $0x48] sm:$0xf]
  %v4270 = vld [vmem:[%s5 + $0x4c] sm:$0xf]
  %v4271 = vld [vmem:[%s5 + $0x50] sm:$0xf]
  %v4272 = vld [vmem:[%s5 + $0x54] sm:$0xf]
  %v4273 = vld [vmem:[%s5 + $0x58] sm:$0xf]
  %v4274 = vld [vmem:[%s5 + $0x5c] sm:$0xf]
  %v4275 = vld [vmem:[%s5 + $0x60] sm:$0xf]
  %v4276 = vld [vmem:[%s5 + $0x64] sm:$0xf]
  %v4277 = vld [vmem:[%s5 + $0x68] sm:$0xf]
  %v4278 = vld [vmem:[%s5 + $0x6c] sm:$0xf]
  %v4279 = vld [vmem:[%s5 + $0x70] sm:$0xf]
  %v4280 = vld [vmem:[%s5 + $0x74] sm:$0xf]
  %v4281 = vld [vmem:[%s5 + $0x78] sm:$0xf]
  %v4282 = vld [vmem:[%s5 + $0x7c] sm:$0xf]
  %v4284 = vshrl.u32 %v4247, 16
  %v4286 = vshll.u32 %v4247, 16
  %v4288 = vrot.slane %v4286, 1
  %v4289 = vor.u32 %v4284, %v4288
  %v4291 = vshll.u32 %v4248, 16
  %v4293 = vrot.slane %v4291, 1
  %v4294 = vsel %vm863, %v4289, %v4293
  %v4295 = vshrl.u32 %v4248, 16
  %v4297 = vor.u32 %v4295, %v4293
  %v4299 = vshll.u32 %v4249, 16
  %v4301 = vrot.slane %v4299, 1
  %v4302 = vsel %vm863, %v4297, %v4301
  %v4303 = vshrl.u32 %v4249, 16
  %v4305 = vor.u32 %v4303, %v4301
  %v4307 = vshll.u32 %v4250, 16
  %v4309 = vrot.slane %v4307, 1
  %v4310 = vsel %vm863, %v4305, %v4309
  %v4311 = vshrl.u32 %v4250, 16
  %v4313 = vor.u32 %v4311, %v4309
  %v4334 = vunpack.c.l.b16 %v4267
  %v4335 = vunpack.c.l.b16 %v4268
  %v4336 = vunpack.c.l.b16 %v4269
  %v4337 = vunpack.c.l.b16 %v4270
  %v4338 = vunpack.c.l.b16 %v4271
  %v4339 = vunpack.c.l.b16 %v4272
  %v4340 = vunpack.c.l.b16 %v4273
  %v4341 = vunpack.c.l.b16 %v4274
  %v4342 = vunpack.c.l.b16 %v4275
  %v4343 = vunpack.c.l.b16 %v4276
  %v4344 = vunpack.c.l.b16 %v4277
  %v4345 = vunpack.c.l.b16 %v4278
  %v4346 = vunpack.c.l.b16 %v4279
  %v4347 = vunpack.c.l.b16 %v4280
  %v4348 = vunpack.c.l.b16 %v4281
  %v4349 = vunpack.c.l.b16 %v4282
  %v4350 = vpack.c.b16 %v4335, %v4334
  %v4351 = vpack.c.b16 %v4337, %v4336
  %v4352 = vpack.c.b16 %v4339, %v4338
  %v4353 = vpack.c.b16 %v4341, %v4340
  %v4354 = vpack.c.b16 %v4343, %v4342
  %v4355 = vpack.c.b16 %v4345, %v4344
  %v4356 = vpack.c.b16 %v4347, %v4346
  %v4357 = vpack.c.b16 %v4349, %v4348
  %4366 = vmatprep.subr.bf16.mxu0 0
  %4367 = vmatpush1.bf16.msra.mxu0 %v4350
  %4368 = vmatprep.subr.bf16.mxu0 0
  %4369 = vmatpush1.bf16.msra.mxu0 %v4351
  %4370 = vmatprep.subr.bf16.mxu0 0
  %4371 = vmatpush1.bf16.msra.mxu0 %v4352
  %4372 = vmatprep.subr.bf16.mxu0 0
  %4373 = vmatpush1.bf16.msra.mxu0 %v4353
  %4374 = vmatprep.subr.bf16.mxu0 0
  %4375 = vmatpush1.bf16.msra.mxu0 %v4354
  %4376 = vmatprep.subr.bf16.mxu0 0
  %4377 = vmatpush1.bf16.msra.mxu0 %v4355
  %4378 = vmatprep.subr.bf16.mxu0 0
  %4379 = vmatpush1.bf16.msra.mxu0 %v4356
  %4380 = vmatprep.subr.bf16.mxu0 0
  %4381 = vmatpush1.bf16.msra.mxu0 %v4357
  %4382 = vmatprep.subr.bf16.mxu0 0
  %4383 = vmatpush1.bf16.msra.mxu0 0
  %4384 = vmatprep.subr.bf16.mxu0 0
  %4385 = vmatpush1.bf16.msra.mxu0 0
  %4386 = vmatprep.subr.bf16.mxu0 0
  %4387 = vmatpush1.bf16.msra.mxu0 0
  %4388 = vmatprep.subr.bf16.mxu0 0
  %4389 = vmatpush1.bf16.msra.mxu0 0
  %4390 = vmatprep.subr.bf16.mxu0 0
  %4391 = vmatpush1.bf16.msra.mxu0 0
  %4392 = vmatprep.subr.bf16.mxu0 0
  %4393 = vmatpush1.bf16.msra.mxu0 0
  %4394 = vmatprep.subr.bf16.mxu0 0
  %4395 = vmatpush1.bf16.msra.mxu0 0
  %4396 = vmatprep.subr.bf16.mxu0 0
  %4397 = vmatpush1.bf16.msra.mxu0 0
  %4398 = vmatprep.mubr.bf16.mxu0 0
  %4399 = vmatmul.mubr.bf16.gmra.mrb[0].mxu0 %v4294
  %v4400 = vpop.f32.mrb[0].mxu0
  %v4401 = vadd.f32 0.0, %v4400
  %v4402 = vpop.f32.mrb[0].mxu0
  %v4403 = vpop.f32.mrb[0].mxu0
  %v4404 = vadd.f32 0.0, %v4403
  %v4405 = vpop.f32.mrb[0].mxu0
  %4406 = vmatprep.mubr.bf16.mxu0 0
  %4407 = vmatmul.mubr.bf16.gmra.mrb[0].mxu0 %v4302
  %v4408 = vpop.f32.mrb[0].mxu0
  %v4409 = vadd.f32 0.0, %v4408
  %v4410 = vpop.f32.mrb[0].mxu0
  %v4411 = vpop.f32.mrb[0].mxu0
  %v4412 = vadd.f32 0.0, %v4411
  %v4413 = vpop.f32.mrb[0].mxu0
  %4414 = vmatprep.mubr.bf16.mxu0 0
  %4415 = vmatmul.mubr.bf16.gmra.mrb[0].mxu0 %v4310
  %v4416 = vpop.f32.mrb[0].mxu0
  %v4417 = vadd.f32 0.0, %v4416
  %v4418 = vpop.f32.mrb[0].mxu0
  %v4419 = vpop.f32.mrb[0].mxu0
  %v4420 = vadd.f32 0.0, %v4419
  %v4421 = vpop.f32.mrb[0].mxu0
  %4422 = vmatprep.mubr.bf16.mxu0 0
  %4423 = vmatmul.mubr.bf16.gmra.mrb[0].mxu0 %v4313
  %v4424 = vpop.f32.mrb[0].mxu0
  %v4425 = vadd.f32 0.0, %v4424
  %v4426 = vpop.f32.mrb[0].mxu0
  %v4427 = vpop.f32.mrb[0].mxu0
  %v4428 = vadd.f32 0.0, %v4427
  %v4429 = vpop.f32.mrb[0].mxu0
  %4430 = vdwg.mxu0
  %v4447 = vunpack.c.l.b16 %v4251
  %v4448 = vunpack.c.l.b16 %v4252
  %v4449 = vunpack.c.l.b16 %v4253
  %v4450 = vunpack.c.l.b16 %v4254
  %v4451 = vunpack.c.l.b16 %v4255
  %v4452 = vunpack.c.l.b16 %v4256
  %v4453 = vunpack.c.l.b16 %v4257
  %v4454 = vunpack.c.l.b16 %v4258
  %v4455 = vunpack.c.l.b16 %v4259
  %v4456 = vunpack.c.l.b16 %v4260
  %v4457 = vunpack.c.l.b16 %v4261
  %v4458 = vunpack.c.l.b16 %v4262
  %v4459 = vunpack.c.l.b16 %v4263
  %v4460 = vunpack.c.l.b16 %v4264
  %v4461 = vunpack.c.l.b16 %v4265
  %v4462 = vunpack.c.l.b16 %v4266
  %v4463 = vpack.c.b16 %v4448, %v4447
  %v4464 = vpack.c.b16 %v4450, %v4449
  %v4465 = vpack.c.b16 %v4452, %v4451
  %v4466 = vpack.c.b16 %v4454, %v4453
  %v4467 = vpack.c.b16 %v4456, %v4455
  %v4468 = vpack.c.b16 %v4458, %v4457
  %v4469 = vpack.c.b16 %v4460, %v4459
  %v4470 = vpack.c.b16 %v4462, %v4461
  %4479 = vmatprep.subr.bf16.mxu0 0
  %4480 = vmatpush1.bf16.msra.mxu0 %v4463
  %4481 = vmatprep.subr.bf16.mxu0 0
  %4482 = vmatpush1.bf16.msra.mxu0 %v4464
  %4483 = vmatprep.subr.bf16.mxu0 0
  %4484 = vmatpush1.bf16.msra.mxu0 %v4465
  %4485 = vmatprep.subr.bf16.mxu0 0
  %4486 = vmatpush1.bf16.msra.mxu0 %v4466
  %4487 = vmatprep.subr.bf16.mxu0 0
  %4488 = vmatpush1.bf16.msra.mxu0 %v4467
  %4489 = vmatprep.subr.bf16.mxu0 0
  %4490 = vmatpush1.bf16.msra.mxu0 %v4468
  %4491 = vmatprep.subr.bf16.mxu0 0
  %4492 = vmatpush1.bf16.msra.mxu0 %v4469
  %4493 = vmatprep.subr.bf16.mxu0 0
  %4494 = vmatpush1.bf16.msra.mxu0 %v4470
  %4495 = vmatprep.subr.bf16.mxu0 0
  %4496 = vmatpush1.bf16.msra.mxu0 0
  %4497 = vmatprep.subr.bf16.mxu0 0
  %4498 = vmatpush1.bf16.msra.mxu0 0
  %4499 = vmatprep.subr.bf16.mxu0 0
  %4500 = vmatpush1.bf16.msra.mxu0 0
  %4501 = vmatprep.subr.bf16.mxu0 0
  %4502 = vmatpush1.bf16.msra.mxu0 0
  %4503 = vmatprep.subr.bf16.mxu0 0
  %4504 = vmatpush1.bf16.msra.mxu0 0
  %4505 = vmatprep.subr.bf16.mxu0 0
  %4506 = vmatpush1.bf16.msra.mxu0 0
  %4507 = vmatprep.subr.bf16.mxu0 0
  %4508 = vmatpush1.bf16.msra.mxu0 0
  %4509 = vmatprep.subr.bf16.mxu0 0
  %4510 = vmatpush1.bf16.msra.mxu0 0
  %4511 = vmatprep.mubr.bf16.mxu0 0
  %4512 = vmatmul.mubr.bf16.gmra.mrb[0].mxu0 %v4247
  %v4513 = vpop.f32.mrb[0].mxu0
  %v4514 = vadd.f32 %v4401, %v4513
  %v4515 = vpop.f32.mrb[0].mxu0
  %v4516 = vpop.f32.mrb[0].mxu0
  %v4517 = vadd.f32 %v4404, %v4516
  %v4518 = vpop.f32.mrb[0].mxu0
  %4519 = vmatprep.mubr.bf16.mxu0 0
  %4520 = vmatmul.mubr.bf16.gmra.mrb[0].mxu0 %v4248
  %v4521 = vpop.f32.mrb[0].mxu0
  %v4522 = vadd.f32 %v4409, %v4521
  %v4523 = vpop.f32.mrb[0].mxu0
  %v4524 = vpop.f32.mrb[0].mxu0
  %v4525 = vadd.f32 %v4412, %v4524
  %v4526 = vpop.f32.mrb[0].mxu0
  %4527 = vmatprep.mubr.bf16.mxu0 0
  %4528 = vmatmul.mubr.bf16.gmra.mrb[0].mxu0 %v4249
  %v4529 = vpop.f32.mrb[0].mxu0
  %v4530 = vadd.f32 %v4417, %v4529
  %v4531 = vpop.f32.mrb[0].mxu0
  %v4532 = vpop.f32.mrb[0].mxu0
  %v4533 = vadd.f32 %v4420, %v4532
  %v4534 = vpop.f32.mrb[0].mxu0
  %4535 = vmatprep.mubr.bf16.mxu0 0
  %4536 = vmatmul.mubr.bf16.gmra.mrb[0].mxu0 %v4250
  %v4537 = vpop.f32.mrb[0].mxu0
  %v4538 = vadd.f32 %v4425, %v4537
  %v4539 = vpop.f32.mrb[0].mxu0
  %v4540 = vpop.f32.mrb[0].mxu0
  %v4541 = vadd.f32 %v4428, %v4540
  %v4542 = vpop.f32.mrb[0].mxu0
  %4543 = vdwg.mxu0
  %v4544 = vld [vmem:[%s5 + $0x80] sm:$0xf]
  %v4545 = vld [vmem:[%s5 + $0x84] sm:$0xf]
  %v4546 = vld [vmem:[%s5 + $0x88] sm:$0xf]
  %v4547 = vld [vmem:[%s5 + $0x8c] sm:$0xf]
  %v4548 = vld [vmem:[%s5 + $0x90] sm:$0xf]
  %v4549 = vld [vmem:[%s5 + $0x94] sm:$0xf]
  %v4550 = vld [vmem:[%s5 + $0x98] sm:$0xf]
  %v4551 = vld [vmem:[%s5 + $0x9c] sm:$0xf]
  %v4552 = vld [vmem:[%s5 + $0xa0] sm:$0xf]
  %v4553 = vld [vmem:[%s5 + $0xa4] sm:$0xf]
  %v4554 = vld [vmem:[%s5 + $0xa8] sm:$0xf]
  %v4555 = vld [vmem:[%s5 + $0xac] sm:$0xf]
  %v4556 = vld [vmem:[%s5 + $0xb0] sm:$0xf]
  %v4557 = vld [vmem:[%s5 + $0xb4] sm:$0xf]
  %v4558 = vld [vmem:[%s5 + $0xb8] sm:$0xf]
  %v4559 = vld [vmem:[%s5 + $0xbc] sm:$0xf]
  %v4564 = vrot.slane %v4247, 1
  %v4565 = vrot.slane %v4248, 1
  %v4566 = vsel %vm3538, %v4564, %v4565
  %v4567 = vrot.slane %v4249, 1
  %v4568 = vsel %vm3538, %v4565, %v4567
  %v4569 = vrot.slane %v4250, 1
  %v4570 = vsel %vm3538, %v4567, %v4569
  %v4591 = vunpack.c.l.b16 %v4544
  %v4592 = vunpack.c.l.b16 %v4545
  %v4593 = vunpack.c.l.b16 %v4546
  %v4594 = vunpack.c.l.b16 %v4547
  %v4595 = vunpack.c.l.b16 %v4548
  %v4596 = vunpack.c.l.b16 %v4549
  %v4597 = vunpack.c.l.b16 %v4550
  %v4598 = vunpack.c.l.b16 %v4551
  %v4599 = vunpack.c.l.b16 %v4552
  %v4600 = vunpack.c.l.b16 %v4553
  %v4601 = vunpack.c.l.b16 %v4554
  %v4602 = vunpack.c.l.b16 %v4555
  %v4603 = vunpack.c.l.b16 %v4556
  %v4604 = vunpack.c.l.b16 %v4557
  %v4605 = vunpack.c.l.b16 %v4558
  %v4606 = vunpack.c.l.b16 %v4559
  %v4607 = vpack.c.b16 %v4592, %v4591
  %v4608 = vpack.c.b16 %v4594, %v4593
  %v4609 = vpack.c.b16 %v4596, %v4595
  %v4610 = vpack.c.b16 %v4598, %v4597
  %v4611 = vpack.c.b16 %v4600, %v4599
  %v4612 = vpack.c.b16 %v4602, %v4601
  %v4613 = vpack.c.b16 %v4604, %v4603
  %v4614 = vpack.c.b16 %v4606, %v4605
  %4623 = vmatprep.subr.bf16.mxu0 0
  %4624 = vmatpush1.bf16.msra.mxu0 %v4607
  %4625 = vmatprep.subr.bf16.mxu0 0
  %4626 = vmatpush1.bf16.msra.mxu0 %v4608
  %4627 = vmatprep.subr.bf16.mxu0 0
  %4628 = vmatpush1.bf16.msra.mxu0 %v4609
  %4629 = vmatprep.subr.bf16.mxu0 0
  %4630 = vmatpush1.bf16.msra.mxu0 %v4610
  %4631 = vmatprep.subr.bf16.mxu0 0
  %4632 = vmatpush1.bf16.msra.mxu0 %v4611
  %4633 = vmatprep.subr.bf16.mxu0 0
  %4634 = vmatpush1.bf16.msra.mxu0 %v4612
  %4635 = vmatprep.subr.bf16.mxu0 0
  %4636 = vmatpush1.bf16.msra.mxu0 %v4613
  %4637 = vmatprep.subr.bf16.mxu0 0
  %4638 = vmatpush1.bf16.msra.mxu0 %v4614
  %4639 = vmatprep.subr.bf16.mxu0 0
  %4640 = vmatpush1.bf16.msra.mxu0 0
  %4641 = vmatprep.subr.bf16.mxu0 0
  %4642 = vmatpush1.bf16.msra.mxu0 0
  %4643 = vmatprep.subr.bf16.mxu0 0
  %4644 = vmatpush1.bf16.msra.mxu0 0
  %4645 = vmatprep.subr.bf16.mxu0 0
  %4646 = vmatpush1.bf16.msra.mxu0 0
  %4647 = vmatprep.subr.bf16.mxu0 0
  %4648 = vmatpush1.bf16.msra.mxu0 0
  %4649 = vmatprep.subr.bf16.mxu0 0
  %4650 = vmatpush1.bf16.msra.mxu0 0
  %4651 = vmatprep.subr.bf16.mxu0 0
  %4652 = vmatpush1.bf16.msra.mxu0 0
  %4653 = vmatprep.subr.bf16.mxu0 0
  %4654 = vmatpush1.bf16.msra.mxu0 0
  %4655 = vmatprep.mubr.bf16.mxu0 0
  %4656 = vmatmul.mubr.bf16.gmra.mrb[0].mxu0 %v4566
  %v4657 = vpop.f32.mrb[0].mxu0
  %v4658 = vadd.f32 0.0, %v4657
  %v4659 = vpop.f32.mrb[0].mxu0
  %v4660 = vpop.f32.mrb[0].mxu0
  %v4661 = vadd.f32 0.0, %v4660
  %v4662 = vpop.f32.mrb[0].mxu0
  %4663 = vmatprep.mubr.bf16.mxu0 0
  %4664 = vmatmul.mubr.bf16.gmra.mrb[0].mxu0 %v4568
  %v4665 = vpop.f32.mrb[0].mxu0
  %v4666 = vadd.f32 0.0, %v4665
  %v4667 = vpop.f32.mrb[0].mxu0
  %v4668 = vpop.f32.mrb[0].mxu0
  %v4669 = vadd.f32 0.0, %v4668
  %v4670 = vpop.f32.mrb[0].mxu0
  %4671 = vmatprep.mubr.bf16.mxu0 0
  %4672 = vmatmul.mubr.bf16.gmra.mrb[0].mxu0 %v4570
  %v4673 = vpop.f32.mrb[0].mxu0
  %v4674 = vadd.f32 0.0, %v4673
  %v4675 = vpop.f32.mrb[0].mxu0
  %v4676 = vpop.f32.mrb[0].mxu0
  %v4677 = vadd.f32 0.0, %v4676
  %v4678 = vpop.f32.mrb[0].mxu0
  %4679 = vmatprep.mubr.bf16.mxu0 0
  %4680 = vmatmul.mubr.bf16.gmra.mrb[0].mxu0 %v4569
  %v4681 = vpop.f32.mrb[0].mxu0
  %v4682 = vadd.f32 0.0, %v4681
  %v4683 = vpop.f32.mrb[0].mxu0
  %v4684 = vpop.f32.mrb[0].mxu0
  %v4685 = vadd.f32 0.0, %v4684
  %v4686 = vpop.f32.mrb[0].mxu0
  %4687 = vdwg.mxu0
  %v4688 = vadd.f32 %v4514, %v4658
  %v4689 = vadd.f32 %v4517, %v4661
  %v4690 = vadd.f32 %v4522, %v4666
  %v4691 = vadd.f32 %v4525, %v4669
  %v4692 = vadd.f32 %v4530, %v4674
  %v4693 = vadd.f32 %v4533, %v4677
  %v4694 = vadd.f32 %v4538, %v4682
  %v4695 = vadd.f32 %v4541, %v4685
  %v4696 = vld [vmem:[%s5 + $0xc0] sm:$0xf]
  %v4697 = vld [vmem:[%s5 + $0xc4] sm:$0xf]
  %v4698 = vld [vmem:[%s5 + $0xc8] sm:$0xf]
  %v4699 = vld [vmem:[%s5 + $0xcc] sm:$0xf]
  %v4700 = vld [vmem:[%s5 + $0xd0] sm:$0xf]
  %v4701 = vld [vmem:[%s5 + $0xd4] sm:$0xf]
  %v4702 = vld [vmem:[%s5 + $0xd8] sm:$0xf]
  %v4703 = vld [vmem:[%s5 + $0xdc] sm:$0xf]
  %v4704 = vld [vmem:[%s5 + $0xe0] sm:$0xf]
  %v4705 = vld [vmem:[%s5 + $0xe4] sm:$0xf]
  %v4706 = vld [vmem:[%s5 + $0xe8] sm:$0xf]
  %v4707 = vld [vmem:[%s5 + $0xec] sm:$0xf]
  %v4708 = vld [vmem:[%s5 + $0xf0] sm:$0xf]
  %v4709 = vld [vmem:[%s5 + $0xf4] sm:$0xf]
  %v4710 = vld [vmem:[%s5 + $0xf8] sm:$0xf]
  %v4711 = vld [vmem:[%s5 + $0xfc] sm:$0xf]
  %vm4712 = vsmask.f32 6400
  %v4713 = vrot.slane %v4284, 1
  %v4714 = vrot.slane %v4286, 2
  %v4715 = vor.u32 %v4713, %v4714
  %v4716 = vrot.slane %v4295, 1
  %v4717 = vrot.slane %v4291, 2
  %v4718 = vor.u32 %v4716, %v4717
  %v4719 = vsel %vm4712, %v4715, %v4718
  %v4720 = vrot.slane %v4303, 1
  %v4721 = vrot.slane %v4299, 2
  %v4722 = vor.u32 %v4720, %v4721
  %v4723 = vsel %vm4712, %v4718, %v4722
  %v4724 = vrot.slane %v4311, 1
  %v4725 = vrot.slane %v4307, 2
  %v4726 = vor.u32 %v4724, %v4725
  %v4727 = vsel %vm4712, %v4722, %v4726
  %v4748 = vunpack.c.l.b16 %v4696
  %v4749 = vunpack.c.l.b16 %v4697
  %v4750 = vunpack.c.l.b16 %v4698
  %v4751 = vunpack.c.l.b16 %v4699
  %v4752 = vunpack.c.l.b16 %v4700
  %v4753 = vunpack.c.l.b16 %v4701
  %v4754 = vunpack.c.l.b16 %v4702
  %v4755 = vunpack.c.l.b16 %v4703
  %v4756 = vunpack.c.l.b16 %v4704
  %v4757 = vunpack.c.l.b16 %v4705
  %v4758 = vunpack.c.l.b16 %v4706
  %v4759 = vunpack.c.l.b16 %v4707
  %v4760 = vunpack.c.l.b16 %v4708
  %v4761 = vunpack.c.l.b16 %v4709
  %v4762 = vunpack.c.l.b16 %v4710
  %v4763 = vunpack.c.l.b16 %v4711
  %v4764 = vpack.c.b16 %v4749, %v4748
  %v4765 = vpack.c.b16 %v4751, %v4750
  %v4766 = vpack.c.b16 %v4753, %v4752
  %v4767 = vpack.c.b16 %v4755, %v4754
  %v4768 = vpack.c.b16 %v4757, %v4756
  %v4769 = vpack.c.b16 %v4759, %v4758
  %v4770 = vpack.c.b16 %v4761, %v4760
  %v4771 = vpack.c.b16 %v4763, %v4762
  %4780 = vmatprep.subr.bf16.mxu0 0
  %4781 = vmatpush1.bf16.msra.mxu0 %v4764
  %4782 = vmatprep.subr.bf16.mxu0 0
  %4783 = vmatpush1.bf16.msra.mxu0 %v4765
  %4784 = vmatprep.subr.bf16.mxu0 0
  %4785 = vmatpush1.bf16.msra.mxu0 %v4766
  %4786 = vmatprep.subr.bf16.mxu0 0
  %4787 = vmatpush1.bf16.msra.mxu0 %v4767
  %4788 = vmatprep.subr.bf16.mxu0 0
  %4789 = vmatpush1.bf16.msra.mxu0 %v4768
  %4790 = vmatprep.subr.bf16.mxu0 0
  %4791 = vmatpush1.bf16.msra.mxu0 %v4769
  %4792 = vmatprep.subr.bf16.mxu0 0
  %4793 = vmatpush1.bf16.msra.mxu0 %v4770
  %4794 = vmatprep.subr.bf16.mxu0 0
  %4795 = vmatpush1.bf16.msra.mxu0 %v4771
  %4796 = vmatprep.subr.bf16.mxu0 0
  %4797 = vmatpush1.bf16.msra.mxu0 0
  %4798 = vmatprep.subr.bf16.mxu0 0
  %4799 = vmatpush1.bf16.msra.mxu0 0
  %4800 = vmatprep.subr.bf16.mxu0 0
  %4801 = vmatpush1.bf16.msra.mxu0 0
  %4802 = vmatprep.subr.bf16.mxu0 0
  %4803 = vmatpush1.bf16.msra.mxu0 0
  %4804 = vmatprep.subr.bf16.mxu0 0
  %4805 = vmatpush1.bf16.msra.mxu0 0
  %4806 = vmatprep.subr.bf16.mxu0 0
  %4807 = vmatpush1.bf16.msra.mxu0 0
  %4808 = vmatprep.subr.bf16.mxu0 0
  %4809 = vmatpush1.bf16.msra.mxu0 0
  %4810 = vmatprep.subr.bf16.mxu0 0
  %4811 = vmatpush1.bf16.msra.mxu0 0
  %4812 = vmatprep.mubr.bf16.mxu0 0
  %4813 = vmatmul.mubr.bf16.gmra.mrb[0].mxu0 %v4719
  %v4814 = vpop.f32.mrb[0].mxu0
  %v4815 = vadd.f32 0.0, %v4814
  %v4816 = vpop.f32.mrb[0].mxu0
  %v4817 = vpop.f32.mrb[0].mxu0
  %v4818 = vadd.f32 0.0, %v4817
  %v4819 = vpop.f32.mrb[0].mxu0
  %4820 = vmatprep.mubr.bf16.mxu0 0
  %4821 = vmatmul.mubr.bf16.gmra.mrb[0].mxu0 %v4723
  %v4822 = vpop.f32.mrb[0].mxu0
  %v4823 = vadd.f32 0.0, %v4822
  %v4824 = vpop.f32.mrb[0].mxu0
  %v4825 = vpop.f32.mrb[0].mxu0
  %v4826 = vadd.f32 0.0, %v4825
  %v4827 = vpop.f32.mrb[0].mxu0
  %4828 = vmatprep.mubr.bf16.mxu0 0
  %4829 = vmatmul.mubr.bf16.gmra.mrb[0].mxu0 %v4727
  %v4830 = vpop.f32.mrb[0].mxu0
  %v4831 = vadd.f32 0.0, %v4830
  %v4832 = vpop.f32.mrb[0].mxu0
  %v4833 = vpop.f32.mrb[0].mxu0
  %v4834 = vadd.f32 0.0, %v4833
  %v4835 = vpop.f32.mrb[0].mxu0
  %4836 = vmatprep.mubr.bf16.mxu0 0
  %4837 = vmatmul.mubr.bf16.gmra.mrb[0].mxu0 %v4726
  %v4838 = vpop.f32.mrb[0].mxu0
  %v4839 = vadd.f32 0.0, %v4838
  %v4840 = vpop.f32.mrb[0].mxu0
  %v4841 = vpop.f32.mrb[0].mxu0
  %v4842 = vadd.f32 0.0, %v4841
  %v4843 = vpop.f32.mrb[0].mxu0
  %4844 = vdwg.mxu0
  %v4845 = vadd.f32 %v4688, %v4815
  %v4846 = vadd.f32 %v4689, %v4818
  %v4847 = vadd.f32 %v4690, %v4823
  %v4848 = vadd.f32 %v4691, %v4826
  %v4849 = vadd.f32 %v4692, %v4831
  %v4850 = vadd.f32 %v4693, %v4834
  %v4851 = vadd.f32 %v4694, %v4839
  %v4852 = vadd.f32 %v4695, %v4842
  %v4853 = vld [vmem:[%s5 + $0x100] sm:$0xf]
  %v4854 = vld [vmem:[%s5 + $0x104] sm:$0xf]
  %v4855 = vld [vmem:[%s5 + $0x108] sm:$0xf]
  %v4856 = vld [vmem:[%s5 + $0x10c] sm:$0xf]
  %v4857 = vld [vmem:[%s5 + $0x110] sm:$0xf]
  %v4858 = vld [vmem:[%s5 + $0x114] sm:$0xf]
  %v4859 = vld [vmem:[%s5 + $0x118] sm:$0xf]
  %v4860 = vld [vmem:[%s5 + $0x11c] sm:$0xf]
  %v4861 = vld [vmem:[%s5 + $0x120] sm:$0xf]
  %v4862 = vld [vmem:[%s5 + $0x124] sm:$0xf]
  %v4863 = vld [vmem:[%s5 + $0x128] sm:$0xf]
  %v4864 = vld [vmem:[%s5 + $0x12c] sm:$0xf]
  %v4865 = vld [vmem:[%s5 + $0x130] sm:$0xf]
  %v4866 = vld [vmem:[%s5 + $0x134] sm:$0xf]
  %v4867 = vld [vmem:[%s5 + $0x138] sm:$0xf]
  %v4868 = vld [vmem:[%s5 + $0x13c] sm:$0xf]
  %vm4869 = vcmask 1045504
  %v4870 = vrot.slane %v4247, 2
  %v4871 = vrot.slane %v4248, 2
  %v4872 = vsel %vm4869, %v4870, %v4871
  %v4873 = vrot.slane %v4249, 2
  %v4874 = vsel %vm4869, %v4871, %v4873
  %v4875 = vrot.slane %v4250, 2
  %v4876 = vsel %vm4869, %v4873, %v4875
  %v4897 = vunpack.c.l.b16 %v4853
  %v4898 = vunpack.c.l.b16 %v4854
  %v4899 = vunpack.c.l.b16 %v4855
  %v4900 = vunpack.c.l.b16 %v4856
  %v4901 = vunpack.c.l.b16 %v4857
  %v4902 = vunpack.c.l.b16 %v4858
  %v4903 = vunpack.c.l.b16 %v4859
  %v4904 = vunpack.c.l.b16 %v4860
  %v4905 = vunpack.c.l.b16 %v4861
  %v4906 = vunpack.c.l.b16 %v4862
  %v4907 = vunpack.c.l.b16 %v4863
  %v4908 = vunpack.c.l.b16 %v4864
  %v4909 = vunpack.c.l.b16 %v4865
  %v4910 = vunpack.c.l.b16 %v4866
  %v4911 = vunpack.c.l.b16 %v4867
  %v4912 = vunpack.c.l.b16 %v4868
  %v4913 = vpack.c.b16 %v4898, %v4897
  %v4914 = vpack.c.b16 %v4900, %v4899
  %v4915 = vpack.c.b16 %v4902, %v4901
  %v4916 = vpack.c.b16 %v4904, %v4903
  %v4917 = vpack.c.b16 %v4906, %v4905
  %v4918 = vpack.c.b16 %v4908, %v4907
  %v4919 = vpack.c.b16 %v4910, %v4909
  %v4920 = vpack.c.b16 %v4912, %v4911
  %4929 = vmatprep.subr.bf16.mxu0 0
  %4930 = vmatpush1.bf16.msra.mxu0 %v4913
  %4931 = vmatprep.subr.bf16.mxu0 0
  %4932 = vmatpush1.bf16.msra.mxu0 %v4914
  %4933 = vmatprep.subr.bf16.mxu0 0
  %4934 = vmatpush1.bf16.msra.mxu0 %v4915
  %4935 = vmatprep.subr.bf16.mxu0 0
  %4936 = vmatpush1.bf16.msra.mxu0 %v4916
  %4937 = vmatprep.subr.bf16.mxu0 0
  %4938 = vmatpush1.bf16.msra.mxu0 %v4917
  %4939 = vmatprep.subr.bf16.mxu0 0
  %4940 = vmatpush1.bf16.msra.mxu0 %v4918
  %4941 = vmatprep.subr.bf16.mxu0 0
  %4942 = vmatpush1.bf16.msra.mxu0 %v4919
  %4943 = vmatprep.subr.bf16.mxu0 0
  %4944 = vmatpush1.bf16.msra.mxu0 %v4920
  %4945 = vmatprep.subr.bf16.mxu0 0
  %4946 = vmatpush1.bf16.msra.mxu0 0
  %4947 = vmatprep.subr.bf16.mxu0 0
  %4948 = vmatpush1.bf16.msra.mxu0 0
  %4949 = vmatprep.subr.bf16.mxu0 0
  %4950 = vmatpush1.bf16.msra.mxu0 0
  %4951 = vmatprep.subr.bf16.mxu0 0
  %4952 = vmatpush1.bf16.msra.mxu0 0
  %4953 = vmatprep.subr.bf16.mxu0 0
  %4954 = vmatpush1.bf16.msra.mxu0 0
  %4955 = vmatprep.subr.bf16.mxu0 0
  %4956 = vmatpush1.bf16.msra.mxu0 0
  %4957 = vmatprep.subr.bf16.mxu0 0
  %4958 = vmatpush1.bf16.msra.mxu0 0
  %4959 = vmatprep.subr.bf16.mxu0 0
  %4960 = vmatpush1.bf16.msra.mxu0 0
  %4961 = vmatprep.mubr.bf16.mxu0 0
  %4962 = vmatmul.mubr.bf16.gmra.mrb[0].mxu0 %v4872
  %v4963 = vpop.f32.mrb[0].mxu0
  %v4964 = vadd.f32 0.0, %v4963
  %v4965 = vpop.f32.mrb[0].mxu0
  %v4966 = vpop.f32.mrb[0].mxu0
  %v4967 = vadd.f32 0.0, %v4966
  %v4968 = vpop.f32.mrb[0].mxu0
  %4969 = vmatprep.mubr.bf16.mxu0 0
  %4970 = vmatmul.mubr.bf16.gmra.mrb[0].mxu0 %v4874
  %v4971 = vpop.f32.mrb[0].mxu0
  %v4972 = vadd.f32 0.0, %v4971
  %v4973 = vpop.f32.mrb[0].mxu0
  %v4974 = vpop.f32.mrb[0].mxu0
  %v4975 = vadd.f32 0.0, %v4974
  %v4976 = vpop.f32.mrb[0].mxu0
  %4977 = vmatprep.mubr.bf16.mxu0 0
  %4978 = vmatmul.mubr.bf16.gmra.mrb[0].mxu0 %v4876
  %v4979 = vpop.f32.mrb[0].mxu0
  %v4980 = vadd.f32 0.0, %v4979
  %v4981 = vpop.f32.mrb[0].mxu0
  %v4982 = vpop.f32.mrb[0].mxu0
  %v4983 = vadd.f32 0.0, %v4982
  %v4984 = vpop.f32.mrb[0].mxu0
  %4985 = vmatprep.mubr.bf16.mxu0 0
  %4986 = vmatmul.mubr.bf16.gmra.mrb[0].mxu0 %v4875
  %v4987 = vpop.f32.mrb[0].mxu0
  %v4988 = vadd.f32 0.0, %v4987
  %v4989 = vpop.f32.mrb[0].mxu0
  %v4990 = vpop.f32.mrb[0].mxu0
  %v4991 = vadd.f32 0.0, %v4990
  %v4992 = vpop.f32.mrb[0].mxu0
  %4993 = vdwg.mxu0
  %v4994 = vadd.f32 %v4845, %v4964
  %v4995 = vadd.f32 %v4846, %v4967
  %v4996 = vadd.f32 %v4847, %v4972
  %v4997 = vadd.f32 %v4848, %v4975
  %v4998 = vadd.f32 %v4849, %v4980
  %v4999 = vadd.f32 %v4850, %v4983
  %v5000 = vadd.f32 %v4851, %v4988
  %v5001 = vadd.f32 %v4852, %v4991
  %v5002 = vld [vmem:[%s6] sm:$0x1]
  %v5004 = vlaneseq
  %v5005 = vshrl.u32 %v5004, 7
  %v5006 = vsub.s32 0, %v5005
  %v5007 = vrot.slane %v5002, %v5006
  %v5009 = vadd.f32 %v4994, %v5007
  %v5010 = vadd.f32 %v4995, %v5007
  %v5011 = vadd.f32 %v4996, %v5007
  %v5012 = vadd.f32 %v4997, %v5007
  %v5013 = vadd.f32 %v4998, %v5007
  %v5014 = vadd.f32 %v4999, %v5007
  %v5015 = vadd.f32 %v5000, %v5007
  %v5016 = vadd.f32 %v5001, %v5007
  %v5017 = vmax.f32 %v5009, 0.0
  %v5018 = vmax.f32 %v5010, 0.0
  %v5019 = vmax.f32 %v5011, 0.0
  %v5020 = vmax.f32 %v5012, 0.0
  %v5021 = vmax.f32 %v5013, 0.0
  %v5022 = vmax.f32 %v5014, 0.0
  %v5023 = vmax.f32 %v5015, 0.0
  %v5024 = vmax.f32 %v5016, 0.0
  %5025 = vst [vmem:[#allocation2] sm:$0xff] %v5017
  %5026 = vst [vmem:[#allocation2 + $0x8] sm:$0xff] %v5018
  %5027 = vst [vmem:[#allocation2 + $0x10] sm:$0xff] %v5019
  %5028 = vst [vmem:[#allocation2 + $0x18] sm:$0xff] %v5020
  %5029 = vst [vmem:[#allocation2 + $0x20] sm:$0xff] %v5021
  %5030 = vst [vmem:[#allocation2 + $0x28] sm:$0xff] %v5022
  %5031 = vst [vmem:[#allocation2 + $0x30] sm:$0xff] %v5023
  %5032 = vst [vmem:[#allocation2 + $0x38] sm:$0x3] %v5024
  %v5033 = vld [vmem:[#allocation2] ss:$8 sm:$0xf]
  %v5034 = vld [vmem:[#allocation2] ss:$8 sm:$0xf0]
  %v5035 = vor.u32 %v5033, %v5034
  %v5036 = vpack.c.bf16 %v5035, %v5035
  %v5037 = vld [vmem:[%s7] sm:$0xf]
  %v5038 = vld [vmem:[%s7 + $0x4] sm:$0xf]
  %v5039 = vld [vmem:[%s7 + $0x8] sm:$0xf]
  %v5040 = vld [vmem:[%s7 + $0xc] sm:$0xf]
  %v5041 = vld [vmem:[%s7 + $0x10] sm:$0xf]
  %v5042 = vld [vmem:[%s7 + $0x14] sm:$0xf]
  %v5043 = vld [vmem:[%s7 + $0x18] sm:$0xf]
  %v5044 = vld [vmem:[%s7 + $0x1c] sm:$0xf]
  %v5045 = vld [vmem:[%s7 + $0x20] sm:$0xf]
  %v5046 = vld [vmem:[%s7 + $0x24] sm:$0xf]
  %v5047 = vld [vmem:[%s7 + $0x28] sm:$0xf]
  %v5048 = vld [vmem:[%s7 + $0x2c] sm:$0xf]
  %v5049 = vld [vmem:[%s7 + $0x30] sm:$0xf]
  %v5050 = vld [vmem:[%s7 + $0x34] sm:$0xf]
  %v5051 = vld [vmem:[%s7 + $0x38] sm:$0xf]
  %v5052 = vld [vmem:[%s7 + $0x3c] sm:$0xf]
  %v5053 = vld [vmem:[%s8] sm:$0x1]
  %v5055 = vlaneseq
  %v5056 = vshrl.u32 %v5055, 7
  %v5057 = vsub.s32 0, %v5056
  %v5058 = vrot.slane %v5053, %v5057
  %v5076 = vunpack.c.l.b16 %v5037
  %v5077 = vunpack.c.l.b16 %v5038
  %v5078 = vunpack.c.l.b16 %v5039
  %v5079 = vunpack.c.l.b16 %v5040
  %v5080 = vunpack.c.l.b16 %v5041
  %v5081 = vunpack.c.l.b16 %v5042
  %v5082 = vunpack.c.l.b16 %v5043
  %v5083 = vunpack.c.l.b16 %v5044
  %v5084 = vunpack.c.l.b16 %v5045
  %v5085 = vunpack.c.l.b16 %v5046
  %v5086 = vunpack.c.l.b16 %v5047
  %v5087 = vunpack.c.l.b16 %v5048
  %v5088 = vunpack.c.l.b16 %v5049
  %v5089 = vunpack.c.l.b16 %v5050
  %v5090 = vunpack.c.l.b16 %v5051
  %v5091 = vunpack.c.l.b16 %v5052
  %v5092 = vpack.c.b16 %v5077, %v5076
  %v5093 = vpack.c.b16 %v5079, %v5078
  %v5094 = vpack.c.b16 %v5081, %v5080
  %v5095 = vpack.c.b16 %v5083, %v5082
  %v5096 = vpack.c.b16 %v5085, %v5084
  %v5097 = vpack.c.b16 %v5087, %v5086
  %v5098 = vpack.c.b16 %v5089, %v5088
  %v5099 = vpack.c.b16 %v5091, %v5090
  %5108 = vmatprep.subr.bf16.mxu0 0
  %5109 = vmatpush1.bf16.msra.mxu0 %v5092
  %5110 = vmatprep.subr.bf16.mxu0 0
  %5111 = vmatpush1.bf16.msra.mxu0 %v5093
  %5112 = vmatprep.subr.bf16.mxu0 0
  %5113 = vmatpush1.bf16.msra.mxu0 %v5094
  %5114 = vmatprep.subr.bf16.mxu0 0
  %5115 = vmatpush1.bf16.msra.mxu0 %v5095
  %5116 = vmatprep.subr.bf16.mxu0 0
  %5117 = vmatpush1.bf16.msra.mxu0 %v5096
  %5118 = vmatprep.subr.bf16.mxu0 0
  %5119 = vmatpush1.bf16.msra.mxu0 %v5097
  %5120 = vmatprep.subr.bf16.mxu0 0
  %5121 = vmatpush1.bf16.msra.mxu0 %v5098
  %5122 = vmatprep.subr.bf16.mxu0 0
  %5123 = vmatpush1.bf16.msra.mxu0 %v5099
  %5124 = vmatprep.subr.bf16.mxu0 0
  %5125 = vmatpush1.bf16.msra.mxu0 0
  %5126 = vmatprep.subr.bf16.mxu0 0
  %5127 = vmatpush1.bf16.msra.mxu0 0
  %5128 = vmatprep.subr.bf16.mxu0 0
  %5129 = vmatpush1.bf16.msra.mxu0 0
  %5130 = vmatprep.subr.bf16.mxu0 0
  %5131 = vmatpush1.bf16.msra.mxu0 0
  %5132 = vmatprep.subr.bf16.mxu0 0
  %5133 = vmatpush1.bf16.msra.mxu0 0
  %5134 = vmatprep.subr.bf16.mxu0 0
  %5135 = vmatpush1.bf16.msra.mxu0 0
  %5136 = vmatprep.subr.bf16.mxu0 0
  %5137 = vmatpush1.bf16.msra.mxu0 0
  %5138 = vmatprep.subr.bf16.mxu0 0
  %5139 = vmatpush1.bf16.msra.mxu0 0
  %5140 = vmatprep.mubr.bf16.mxu0 0
  %5141 = vmatmul.mubr.bf16.gmra.mrb[0].mxu0 %v5036
  %v5142 = vpop.f32.mrb[0].mxu0
  %v5143 = vadd.f32 %v5058, %v5142
  %v5144 = vpop.f32.mrb[0].mxu0
  %v5145 = vpop.f32.mrb[0].mxu0
  %v5146 = vpop.f32.mrb[0].mxu0
  %5147 = vdwg.mxu0
  %v5148 = vmax.f32 %v5143, 0.0
  %v5149 = vpack.c.bf16 %v5148, %v5148
  %v5150 = vld [vmem:[%s9] sm:$0xf]
  %v5151 = vld [vmem:[%s9 + $0x4] sm:$0xf]
  %v5152 = vld [vmem:[%s9 + $0x8] sm:$0xf]
  %v5153 = vld [vmem:[%s9 + $0xc] sm:$0xf]
  %v5154 = vld [vmem:[%s9 + $0x10] sm:$0xf]
  %v5155 = vld [vmem:[%s9 + $0x14] sm:$0xf]
  %v5156 = vld [vmem:[%s9 + $0x18] sm:$0xf]
  %v5157 = vld [vmem:[%s9 + $0x1c] sm:$0xf]
  %v5158 = vld [vmem:[%s9 + $0x20] sm:$0xf]
  %v5159 = vld [vmem:[%s9 + $0x24] sm:$0xf]
  %v5160 = vld [vmem:[%s9 + $0x28] sm:$0xf]
  %v5161 = vld [vmem:[%s9 + $0x2c] sm:$0xf]
  %v5162 = vld [vmem:[%s9 + $0x30] sm:$0xf]
  %v5163 = vld [vmem:[%s9 + $0x34] sm:$0xf]
  %v5164 = vld [vmem:[%s9 + $0x38] sm:$0xf]
  %v5165 = vld [vmem:[%s9 + $0x3c] sm:$0xf]
  %v5166 = vld [vmem:[%s10] sm:$0x1]
  %v5168 = vlaneseq
  %v5169 = vshrl.u32 %v5168, 7
  %v5170 = vsub.s32 0, %v5169
  %v5171 = vrot.slane %v5166, %v5170
  %v5189 = vunpack.c.l.b16 %v5150
  %v5190 = vunpack.c.l.b16 %v5151
  %v5191 = vunpack.c.l.b16 %v5152
  %v5192 = vunpack.c.l.b16 %v5153
  %v5193 = vunpack.c.l.b16 %v5154
  %v5194 = vunpack.c.l.b16 %v5155
  %v5195 = vunpack.c.l.b16 %v5156
  %v5196 = vunpack.c.l.b16 %v5157
  %v5197 = vunpack.c.l.b16 %v5158
  %v5198 = vunpack.c.l.b16 %v5159
  %v5199 = vunpack.c.l.b16 %v5160
  %v5200 = vunpack.c.l.b16 %v5161
  %v5201 = vunpack.c.l.b16 %v5162
  %v5202 = vunpack.c.l.b16 %v5163
  %v5203 = vunpack.c.l.b16 %v5164
  %v5204 = vunpack.c.l.b16 %v5165
  %v5205 = vpack.c.b16 %v5190, %v5189
  %v5206 = vpack.c.b16 %v5192, %v5191
  %v5207 = vpack.c.b16 %v5194, %v5193
  %v5208 = vpack.c.b16 %v5196, %v5195
  %v5209 = vpack.c.b16 %v5198, %v5197
  %v5210 = vpack.c.b16 %v5200, %v5199
  %v5211 = vpack.c.b16 %v5202, %v5201
  %v5212 = vpack.c.b16 %v5204, %v5203
  %5221 = vmatprep.subr.bf16.mxu0 0
  %5222 = vmatpush1.bf16.msra.mxu0 %v5205
  %5223 = vmatprep.subr.bf16.mxu0 0
  %5224 = vmatpush1.bf16.msra.mxu0 %v5206
  %5225 = vmatprep.subr.bf16.mxu0 0
  %5226 = vmatpush1.bf16.msra.mxu0 %v5207
  %5227 = vmatprep.subr.bf16.mxu0 0
  %5228 = vmatpush1.bf16.msra.mxu0 %v5208
  %5229 = vmatprep.subr.bf16.mxu0 0
  %5230 = vmatpush1.bf16.msra.mxu0 %v5209
  %5231 = vmatprep.subr.bf16.mxu0 0
  %5232 = vmatpush1.bf16.msra.mxu0 %v5210
  %5233 = vmatprep.subr.bf16.mxu0 0
  %5234 = vmatpush1.bf16.msra.mxu0 %v5211
  %5235 = vmatprep.subr.bf16.mxu0 0
  %5236 = vmatpush1.bf16.msra.mxu0 %v5212
  %5237 = vmatprep.subr.bf16.mxu0 0
  %5238 = vmatpush1.bf16.msra.mxu0 0
  %5239 = vmatprep.subr.bf16.mxu0 0
  %5240 = vmatpush1.bf16.msra.mxu0 0
  %5241 = vmatprep.subr.bf16.mxu0 0
  %5242 = vmatpush1.bf16.msra.mxu0 0
  %5243 = vmatprep.subr.bf16.mxu0 0
  %5244 = vmatpush1.bf16.msra.mxu0 0
  %5245 = vmatprep.subr.bf16.mxu0 0
  %5246 = vmatpush1.bf16.msra.mxu0 0
  %5247 = vmatprep.subr.bf16.mxu0 0
  %5248 = vmatpush1.bf16.msra.mxu0 0
  %5249 = vmatprep.subr.bf16.mxu0 0
  %5250 = vmatpush1.bf16.msra.mxu0 0
  %5251 = vmatprep.subr.bf16.mxu0 0
  %5252 = vmatpush1.bf16.msra.mxu0 0
  %5253 = vmatprep.mubr.bf16.mxu0 0
  %5254 = vmatmul.mubr.bf16.gmra.mrb[0].mxu0 %v5149
  %v5255 = vpop.f32.mrb[0].mxu0
  %v5256 = vadd.f32 %v5171, %v5255
  %v5257 = vpop.f32.mrb[0].mxu0
  %v5258 = vpop.f32.mrb[0].mxu0
  %v5259 = vpop.f32.mrb[0].mxu0
  %5260 = vdwg.mxu0
  %vm5261 = vcmask 80896
  %5262 = vst.msk [vmem:[%s11] sm:$0xff] %vm5261, %v5256
  // Predicated region
  $region46: #{lenet32_forward.1} parent=0 // pred_check
    _
  $region47: #{lenet32_forward.1} parent=0 // pred_check_branch
    %5264 = sbr.rel (0) target = $region49
  $region48: #{lenet32_forward.1} parent=0 // pred_region
    _
  $region49: #{lenet32_forward.1} parent=0 // pred_fallthru
    _
  // Predicated region
  $region50: #{lenet32_forward.1} parent=0 // pred_check
    _
  $region51: #{lenet32_forward.1} parent=0 // pred_check_branch
    %5266 = sbr.rel (0) target = $region53
  $region52: #{lenet32_forward.1} parent=0 // pred_region
    _
  $region53: #{lenet32_forward.1} parent=0 // pred_fallthru
    _

</llo_original>
